<compile_context>
chip_gen: v7x
topology: tpu7x:2x2x1
jax: 0.10.0
libtpu: 0.0.40
codegen_flags: <defaults>
</compile_context>

<pallas_src>
import math

import jax
import jax.numpy as jnp
from jax import lax
from jax.experimental import pallas as pl
from jax.experimental.pallas import tpu as pltpu

# ----------------------- small synthetic model config -----------------------
BATCH = 2
SEQ = 8
HIDDEN = 32
HEADS = 4
HEAD_DIM = HIDDEN // HEADS
FFN = 64
LAYERS = 2
VOCAB = 50
MAX_POS = 16
TYPE_VOCAB = 2
NUM_LABELS = 9          # stand-in for len(NerVocab()) (BIO-style NER tag set)
HEAD_PAD = 128          # lane-dense logits slab width (NUM_LABELS padded to 128)
LN_EPS = 1e-12          # BERT LayerNorm eps
MASK_NEG = -1e9
PAD_NEG = -1e30         # bias for padded (fake) label columns
BS = BATCH * SEQ
# TODO(synk): AutoModel.from_pretrained checkpoint weights cannot be loaded;
# synthetic deterministic weights with the same structure are used instead.


# ------------------------------ kernel helpers -------------------------------
def _layernorm(x, gamma, beta):
    mean = jnp.mean(x, axis=-1, keepdims=True)
    cx = x - mean
    var = jnp.mean(cx * cx, axis=-1, keepdims=True)
    return cx * lax.rsqrt(var + LN_EPS) * gamma + beta


def _mm(a, b):
    # bf16 operands on the MXU, f32 accumulation
    return jnp.dot(a.astype(jnp.bfloat16), b, preferred_element_type=jnp.float32)


# --------------------------------- kernel ------------------------------------
def fused_forward_kernel(x_ref, allow_ref, embg_ref, embb_ref,
                         wqkv_ref, bqkv_ref, wo_ref, bo_ref,
                         ln1g_ref, ln1b_ref, w1_ref, b1_ref, w2_ref, b2_ref,
                         ln2g_ref, ln2b_ref, hw_ref, hb_ref, o_ref):
    # layer-invariant additive attention bias (key padding + block-diagonal),
    # built ONCE at kernel entry (hoisted out of the layer loop).
    bias = (1.0 - allow_ref[...]) * MASK_NEG                       # (BS, BS) f32

    # embeddings LayerNorm
    x = _layernorm(x_ref[...], embg_ref[...], embb_ref[...])       # (BS, H) f32

    for l in range(LAYERS):                       # static unroll over layers
        x16 = x.astype(jnp.bfloat16)              # single cast per layer
        # fused QKV projection: ONE (BS,H)x(H,3H) MXU matmul, f32 accumulation.
        # The 1/sqrt(HEAD_DIM) score scale is already folded into the Q columns.
        qkv = jnp.dot(x16, wqkv_ref[l],
                      preferred_element_type=jnp.float32) + bqkv_ref[l]  # (BS, 3H)
        qkv16 = qkv.astype(jnp.bfloat16)          # single cast of the whole slab

        # attention over the full BS key axis (block-diagonal bias keeps
        # sequences separate); per-head 2-D matmuls with 16-lane score tiles.
        ctx_parts = []
        for h in range(HEADS):
            c0 = h * HEAD_DIM
            qh = qkv16[:, c0:c0 + HEAD_DIM]                                   # (BS, D)
            kh = qkv16[:, HIDDEN + c0:HIDDEN + c0 + HEAD_DIM]                 # (BS, D)
            vh = qkv16[:, 2 * HIDDEN + c0:2 * HIDDEN + c0 + HEAD_DIM]         # (BS, D)
            # q @ k^T without an explicit transpose (NT dot_general)
            s = lax.dot_general(qh, kh, (((1,), (1,)), ((), ())),
                                preferred_element_type=jnp.float32)           # (BS, BS)
            s = s + bias
            s = s - jnp.max(s, axis=-1, keepdims=True)
            p = jnp.exp(s)
            p = p * pl.reciprocal(jnp.sum(p, axis=-1, keepdims=True), approx=True)
            ctx_parts.append(jnp.dot(p.astype(jnp.bfloat16), vh,
                                     preferred_element_type=jnp.float32))     # (BS, D)
        # per-head contexts lane-concatenated in registers (no VMEM scratch)
        ctx = jnp.concatenate(ctx_parts, axis=-1).astype(jnp.bfloat16)        # (BS, H)

        # single output projection contracting the full heads*dim axis
        attn = jnp.dot(ctx, wo_ref[l],
                       preferred_element_type=jnp.float32) + bo_ref[l]        # (BS, H)
        h1 = _layernorm(x + attn, ln1g_ref[l], ln1b_ref[l])

        ff = _mm(h1, w1_ref[l]) + b1_ref[l]
        # TODO(synk): HF BERT/HerBERT 'gelu' is the exact erf form; tanh approx used here.
        ff = jax.nn.gelu(ff, approximate=True)
        ff = _mm(ff, w2_ref[l]) + b2_ref[l]
        x = _layernorm(h1 + ff, ln2g_ref[l], ln2b_ref[l])

    # classification head into a lane-dense (BS, 128) slab + LogSoftmax.
    # Padded label columns carry a -1e30 bias -> contribute exactly 0 after exp,
    # so the log-softmax over the real NUM_LABELS columns is exact.
    logits = _mm(x, hw_ref[...]) + hb_ref[...]                                # (BS, 128)
    z = logits - jnp.max(logits, axis=-1, keepdims=True)
    lse = jnp.log(jnp.sum(jnp.exp(z), axis=-1, keepdims=True))
    o_ref[...] = z - lse


# ------------------------------ pallas wrapper --------------------------------
def _full_spec(arr):
    # whole-array block, constant across the (trivial) grid
    return pl.BlockSpec(arr.shape, lambda i, _n=arr.ndim: (0,) * _n)


def auto_transformer_fused(params, emb2d, allow):
    ordered = [emb2d, allow, params["emb_ln_g"], params["emb_ln_b"],
               params["wqkv"], params["bqkv"], params["wo"], params["bo"],
               params["ln1_g"], params["ln1_b"],
               params["w1"], params["b1"], params["w2"], params["b2"],
               params["ln2_g"], params["ln2_b"],
               params["head_w"], params["head_b"]]
    return pl.pallas_call(
        fused_forward_kernel,
        out_shape=jax.ShapeDtypeStruct((BS, HEAD_PAD), jnp.float32),
        grid=(1,),
        in_specs=[_full_spec(a) for a in ordered],
        out_specs=pl.BlockSpec((BS, HEAD_PAD), lambda i: (0, 0)),
        compiler_params=pltpu.CompilerParams(dimension_semantics=("arbitrary",)),
    )(*ordered)


# ------------------------------ parameters ------------------------------------
def init_params(key):
    keys = iter(jax.random.split(key, 64))

    def dense(fan_in, fan_out):
        return (jax.random.normal(next(keys), (fan_in, fan_out), jnp.float32)
                * 0.02)

    params = {
        "word_emb": jax.random.normal(next(keys), (VOCAB, HIDDEN), jnp.float32) * 0.02,
        "pos_emb": jax.random.normal(next(keys), (MAX_POS, HIDDEN), jnp.float32) * 0.02,
        "type_emb": jax.random.normal(next(keys), (TYPE_VOCAB, HIDDEN), jnp.float32) * 0.02,
        "emb_ln_g": jnp.ones((1, HIDDEN), jnp.float32),
        "emb_ln_b": jnp.zeros((1, HIDDEN), jnp.float32),
    }

    scale = 1.0 / math.sqrt(HEAD_DIM)
    wqkv, wo, w1, w2 = [], [], [], []
    for _ in range(LAYERS):
        wq = dense(HIDDEN, HIDDEN) * scale   # fold 1/sqrt(HEAD_DIM) into Q columns
        wk = dense(HIDDEN, HIDDEN)
        wv = dense(HIDDEN, HIDDEN)
        # packed QKV weight: columns [0:H)=Q, [H:2H)=K, [2H:3H)=V; within each
        # block, column h*HEAD_DIM + d is head h, dim d.
        wqkv.append(jnp.concatenate([wq, wk, wv], axis=1))            # (H, 3H)
        wo.append(dense(HIDDEN, HIDDEN))                              # rows = h*D + d
        w1.append(dense(HIDDEN, FFN))
        w2.append(dense(FFN, HIDDEN))

    params.update({
        "wqkv": jnp.stack(wqkv).astype(jnp.bfloat16),                 # (LAYERS, H, 3H)
        "bqkv": jnp.zeros((LAYERS, 1, 3 * HIDDEN), jnp.float32),
        "wo": jnp.stack(wo).astype(jnp.bfloat16),                     # (LAYERS, H, H)
        "bo": jnp.zeros((LAYERS, 1, HIDDEN), jnp.float32),
        "ln1_g": jnp.ones((LAYERS, 1, HIDDEN), jnp.float32),
        "ln1_b": jnp.zeros((LAYERS, 1, HIDDEN), jnp.float32),
        "w1": jnp.stack(w1).astype(jnp.bfloat16),                     # (LAYERS, H, FFN)
        "b1": jnp.zeros((LAYERS, 1, FFN), jnp.float32),
        "w2": jnp.stack(w2).astype(jnp.bfloat16),                     # (LAYERS, FFN, H)
        "b2": jnp.zeros((LAYERS, 1, HIDDEN), jnp.float32),
        "ln2_g": jnp.ones((LAYERS, 1, HIDDEN), jnp.float32),
        "ln2_b": jnp.zeros((LAYERS, 1, HIDDEN), jnp.float32),
    })

    # classification head, padded lane-dense to 128 labels
    head_w = dense(HIDDEN, NUM_LABELS)
    head_w_pad = jnp.zeros((HIDDEN, HEAD_PAD), jnp.float32).at[:, :NUM_LABELS].set(head_w)
    head_b_pad = jnp.full((1, HEAD_PAD), PAD_NEG, jnp.float32).at[:, :NUM_LABELS].set(0.0)
    params["head_w"] = head_w_pad.astype(jnp.bfloat16)
    params["head_b"] = head_b_pad
    return params


# ------------------------------ forward pass ----------------------------------
def auto_transformer_forward(params, input_ids, attention_mask):
    B, S = input_ids.shape
    positions = jnp.arange(S, dtype=jnp.int32)[None, :]
    # embedding-table gathers are glue (plain JAX); everything after is one Pallas kernel
    emb = (params["word_emb"][input_ids]
           + params["pos_emb"][positions]
           + params["type_emb"][jnp.zeros_like(input_ids)])
    emb2d = emb.reshape(B * S, HIDDEN).astype(jnp.float32)
    # combined attention mask over the flattened batch: a key is allowed only if
    # it is valid AND belongs to the same sequence as the query (block-diagonal),
    # so flattening the batch never mixes sequences.
    seg = jnp.repeat(jnp.arange(B, dtype=jnp.int32), S)                 # (B*S,)
    key_ok = attention_mask.reshape(-1) > 0                             # (B*S,)
    allow = ((seg[:, None] == seg[None, :]) & key_ok[None, :]).astype(jnp.float32)
    out = auto_transformer_fused(params, emb2d, allow)                  # (B*S, 128)
    return out.reshape(B, S, HEAD_PAD)[:, :, :NUM_LABELS]


# ---------------------------------- main ---------------------------------------
if __name__ == "__main__":
    key = jax.random.PRNGKey(0)
    pkey, ikey = jax.random.split(key)
    params = init_params(pkey)

    input_ids = jax.random.randint(ikey, (BATCH, SEQ), 0, VOCAB, dtype=jnp.int32)
    lengths = jnp.array([SEQ - 2, SEQ], dtype=jnp.int32)              # one padded sequence
    attention_mask = (jnp.arange(SEQ)[None, :] < lengths[:, None]).astype(jnp.int32)

    out = auto_transformer_forward(params, input_ids, attention_mask)
    out = jax.block_until_ready(out)

    assert out.shape == (BATCH, SEQ, NUM_LABELS), out.shape
    # LogSoftmax(dim=2): exponentiated rows must sum to 1
    probs_sum = jnp.exp(out).sum(axis=2)
    assert bool(jnp.allclose(probs_sum, 1.0, atol=1e-4)), probs_sum
    print("KERNEL_OK")
</pallas_src>

<mosaic_0001>
module attributes {stable_mosaic.version = 11 : i64} {
  func.func @fused_forward_kernel(%arg0: i32, %arg1: memref<16x32xf32, #tpu.memory_space<vmem>>, %arg2: memref<16x16xf32, #tpu.memory_space<vmem>>, %arg3: memref<1x32xf32, #tpu.memory_space<vmem>>, %arg4: memref<1x32xf32, #tpu.memory_space<vmem>>, %arg5: memref<2x32x96xbf16, #tpu.memory_space<vmem>>, %arg6: memref<2x1x96xf32, #tpu.memory_space<vmem>>, %arg7: memref<2x32x32xbf16, #tpu.memory_space<vmem>>, %arg8: memref<2x1x32xf32, #tpu.memory_space<vmem>>, %arg9: memref<2x1x32xf32, #tpu.memory_space<vmem>>, %arg10: memref<2x1x32xf32, #tpu.memory_space<vmem>>, %arg11: memref<2x32x64xbf16, #tpu.memory_space<vmem>>, %arg12: memref<2x1x64xf32, #tpu.memory_space<vmem>>, %arg13: memref<2x64x32xbf16, #tpu.memory_space<vmem>>, %arg14: memref<2x1x32xf32, #tpu.memory_space<vmem>>, %arg15: memref<2x1x32xf32, #tpu.memory_space<vmem>>, %arg16: memref<2x1x32xf32, #tpu.memory_space<vmem>>, %arg17: memref<32x128xbf16, #tpu.memory_space<vmem>>, %arg18: memref<1x128xf32, #tpu.memory_space<vmem>>, %arg19: memref<16x128xf32, #tpu.memory_space<vmem>>) attributes {dimension_semantics = [#tpu.dimension_semantics<arbitrary>], iteration_bounds = array<i64: 1>, scalar_prefetch = 0 : i64, scratch_operands = 0 : i64, tpu.core_type = #tpu.core_type<tc>, window_params = [{pipeline_mode = #tpu.pipeline_mode<synchronous>, transform_indices = @transform_0, window_bounds = array<i64: 16, 32>}, {pipeline_mode = #tpu.pipeline_mode<synchronous>, transform_indices = @transform_1, window_bounds = array<i64: 16, 16>}, {pipeline_mode = #tpu.pipeline_mode<synchronous>, transform_indices = @transform_2, window_bounds = array<i64: 1, 32>}, {pipeline_mode = #tpu.pipeline_mode<synchronous>, transform_indices = @transform_3, window_bounds = array<i64: 1, 32>}, {pipeline_mode = #tpu.pipeline_mode<synchronous>, transform_indices = @transform_4, window_bounds = array<i64: 2, 32, 96>}, {pipeline_mode = #tpu.pipeline_mode<synchronous>, transform_indices = @transform_5, window_bounds = array<i64: 2, 1, 96>}, {pipeline_mode = #tpu.pipeline_mode<synchronous>, transform_indices = @transform_6, window_bounds = array<i64: 2, 32, 32>}, {pipeline_mode = #tpu.pipeline_mode<synchronous>, transform_indices = @transform_7, window_bounds = array<i64: 2, 1, 32>}, {pipeline_mode = #tpu.pipeline_mode<synchronous>, transform_indices = @transform_8, window_bounds = array<i64: 2, 1, 32>}, {pipeline_mode = #tpu.pipeline_mode<synchronous>, transform_indices = @transform_9, window_bounds = array<i64: 2, 1, 32>}, {pipeline_mode = #tpu.pipeline_mode<synchronous>, transform_indices = @transform_10, window_bounds = array<i64: 2, 32, 64>}, {pipeline_mode = #tpu.pipeline_mode<synchronous>, transform_indices = @transform_11, window_bounds = array<i64: 2, 1, 64>}, {pipeline_mode = #tpu.pipeline_mode<synchronous>, transform_indices = @transform_12, window_bounds = array<i64: 2, 64, 32>}, {pipeline_mode = #tpu.pipeline_mode<synchronous>, transform_indices = @transform_13, window_bounds = array<i64: 2, 1, 32>}, {pipeline_mode = #tpu.pipeline_mode<synchronous>, transform_indices = @transform_14, window_bounds = array<i64: 2, 1, 32>}, {pipeline_mode = #tpu.pipeline_mode<synchronous>, transform_indices = @transform_15, window_bounds = array<i64: 2, 1, 32>}, {pipeline_mode = #tpu.pipeline_mode<synchronous>, transform_indices = @transform_16, window_bounds = array<i64: 32, 128>}, {pipeline_mode = #tpu.pipeline_mode<synchronous>, transform_indices = @transform_17, window_bounds = array<i64: 1, 128>}, {pipeline_mode = #tpu.pipeline_mode<synchronous>, transform_indices = @transform_18, window_bounds = array<i64: 16, 128>}]} {
    %c0 = arith.constant 0 : index
    %c0_0 = arith.constant 0 : index
    %0 = vector.load %arg2[%c0, %c0_0] : memref<16x16xf32, #tpu.memory_space<vmem>>, vector<16x16xf32>
    %cst = arith.constant 1.000000e+00 : f32
    %1 = vector.broadcast %cst : f32 to vector<16x16xf32>
    %2 = arith.subf %1, %0 : vector<16x16xf32>
    %cst_1 = arith.constant -1.000000e+09 : f32
    %3 = vector.broadcast %cst_1 : f32 to vector<16x16xf32>
    %4 = arith.mulf %2, %3 : vector<16x16xf32>
    %c0_2 = arith.constant 0 : index
    %c0_3 = arith.constant 0 : index
    %5 = vector.load %arg1[%c0_2, %c0_3] : memref<16x32xf32, #tpu.memory_space<vmem>>, vector<16x32xf32>
    %c0_4 = arith.constant 0 : index
    %c0_5 = arith.constant 0 : index
    %6 = vector.load %arg3[%c0_4, %c0_5] : memref<1x32xf32, #tpu.memory_space<vmem>>, vector<1x32xf32>
    %c0_6 = arith.constant 0 : index
    %c0_7 = arith.constant 0 : index
    %7 = vector.load %arg4[%c0_6, %c0_7] : memref<1x32xf32, #tpu.memory_space<vmem>>, vector<1x32xf32>
    %cst_8 = arith.constant dense<0.000000e+00> : vector<16xf32>
    %8 = vector.multi_reduction <add>, %5, %cst_8 [1] : vector<16x32xf32> to vector<16xf32>
    %9 = vector.shape_cast %8 : vector<16xf32> to vector<16x1xf32>
    %cst_9 = arith.constant 3.200000e+01 : f32
    %10 = vector.broadcast %cst_9 : f32 to vector<16x1xf32>
    %11 = arith.divf %9, %10 : vector<16x1xf32>
    %12 = vector.broadcast %11 : vector<16x1xf32> to vector<16x32xf32>
    %13 = arith.subf %5, %12 : vector<16x32xf32>
    %14 = arith.mulf %13, %13 : vector<16x32xf32>
    %cst_10 = arith.constant dense<0.000000e+00> : vector<16xf32>
    %15 = vector.multi_reduction <add>, %14, %cst_10 [1] : vector<16x32xf32> to vector<16xf32>
    %16 = vector.shape_cast %15 : vector<16xf32> to vector<16x1xf32>
    %cst_11 = arith.constant 3.200000e+01 : f32
    %17 = vector.broadcast %cst_11 : f32 to vector<16x1xf32>
    %18 = arith.divf %16, %17 : vector<16x1xf32>
    %cst_12 = arith.constant 9.99999996E-13 : f32
    %19 = vector.broadcast %cst_12 : f32 to vector<16x1xf32>
    %20 = arith.addf %18, %19 : vector<16x1xf32>
    %21 = math.rsqrt %20 : vector<16x1xf32>
    %22 = vector.broadcast %21 : vector<16x1xf32> to vector<16x32xf32>
    %23 = arith.mulf %13, %22 : vector<16x32xf32>
    %24 = vector.broadcast %6 : vector<1x32xf32> to vector<16x32xf32>
    %25 = arith.mulf %23, %24 : vector<16x32xf32>
    %26 = vector.broadcast %7 : vector<1x32xf32> to vector<16x32xf32>
    %27 = arith.addf %25, %26 : vector<16x32xf32>
    %28 = arith.truncf %27 : vector<16x32xf32> to vector<16x32xbf16>
    %c0_13 = arith.constant 0 : index
    %c0_14 = arith.constant 0 : index
    %c0_15 = arith.constant 0 : index
    %29 = vector.load %arg5[%c0_13, %c0_14, %c0_15] : memref<2x32x96xbf16, #tpu.memory_space<vmem>>, vector<1x32x96xbf16>
    %30 = vector.shape_cast %29 : vector<1x32x96xbf16> to vector<32x96xbf16>
    %cst_16 = arith.constant dense<0.000000e+00> : vector<16x96xf32>
    %31 = tpu.matmul %28, %30, %cst_16 {dimension_numbers = #tpu.dot_dimension_numbers<[1], [0], [0], [1], [0, 0, 1, 1], [], []>} : vector<16x32xbf16>, vector<32x96xbf16>, vector<16x96xf32> -> vector<16x96xf32>
    %c0_17 = arith.constant 0 : index
    %c0_18 = arith.constant 0 : index
    %c0_19 = arith.constant 0 : index
    %32 = vector.load %arg6[%c0_17, %c0_18, %c0_19] : memref<2x1x96xf32, #tpu.memory_space<vmem>>, vector<1x1x96xf32>
    %33 = vector.shape_cast %32 : vector<1x1x96xf32> to vector<1x96xf32>
    %34 = vector.broadcast %33 : vector<1x96xf32> to vector<16x96xf32>
    %35 = arith.addf %31, %34 : vector<16x96xf32>
    %36 = arith.truncf %35 : vector<16x96xf32> to vector<16x96xbf16>
    %37 = vector.extract_strided_slice %36 {offsets = [0, 0], sizes = [16, 8], strides = [1, 1]} : vector<16x96xbf16> to vector<16x8xbf16>
    %38 = vector.extract_strided_slice %36 {offsets = [0, 32], sizes = [16, 8], strides = [1, 1]} : vector<16x96xbf16> to vector<16x8xbf16>
    %39 = vector.extract_strided_slice %36 {offsets = [0, 64], sizes = [16, 8], strides = [1, 1]} : vector<16x96xbf16> to vector<16x8xbf16>
    %cst_20 = arith.constant dense<0.000000e+00> : vector<16x16xf32>
    %40 = tpu.matmul %37, %38, %cst_20 {dimension_numbers = #tpu.dot_dimension_numbers<[1], [1], [0], [0], [0, 0, 1, 0], [], []>} : vector<16x8xbf16>, vector<16x8xbf16>, vector<16x16xf32> -> vector<16x16xf32>
    %41 = arith.addf %40, %4 : vector<16x16xf32>
    %cst_21 = arith.constant dense<0xFF800000> : vector<16xf32>
    %42 = vector.multi_reduction <maximumf>, %41, %cst_21 [1] : vector<16x16xf32> to vector<16xf32>
    %43 = vector.shape_cast %42 : vector<16xf32> to vector<16x1xf32>
    %44 = vector.broadcast %43 : vector<16x1xf32> to vector<16x16xf32>
    %45 = arith.subf %41, %44 : vector<16x16xf32>
    %46 = math.exp %45 : vector<16x16xf32>
    %cst_22 = arith.constant dense<0.000000e+00> : vector<16xf32>
    %47 = vector.multi_reduction <add>, %46, %cst_22 [1] : vector<16x16xf32> to vector<16xf32>
    %48 = vector.shape_cast %47 : vector<16xf32> to vector<16x1xf32>
    %49 = tpu.reciprocal %48 {approx = true} : vector<16x1xf32> -> vector<16x1xf32>
    %50 = vector.broadcast %49 : vector<16x1xf32> to vector<16x16xf32>
    %51 = arith.mulf %46, %50 : vector<16x16xf32>
    %52 = arith.truncf %51 : vector<16x16xf32> to vector<16x16xbf16>
    %cst_23 = arith.constant dense<0.000000e+00> : vector<16x8xf32>
    %53 = tpu.matmul %52, %39, %cst_23 {dimension_numbers = #tpu.dot_dimension_numbers<[1], [0], [0], [1], [0, 0, 1, 1], [], []>} : vector<16x16xbf16>, vector<16x8xbf16>, vector<16x8xf32> -> vector<16x8xf32>
    %54 = vector.extract_strided_slice %36 {offsets = [0, 8], sizes = [16, 8], strides = [1, 1]} : vector<16x96xbf16> to vector<16x8xbf16>
    %55 = vector.extract_strided_slice %36 {offsets = [0, 40], sizes = [16, 8], strides = [1, 1]} : vector<16x96xbf16> to vector<16x8xbf16>
    %56 = vector.extract_strided_slice %36 {offsets = [0, 72], sizes = [16, 8], strides = [1, 1]} : vector<16x96xbf16> to vector<16x8xbf16>
    %cst_24 = arith.constant dense<0.000000e+00> : vector<16x16xf32>
    %57 = tpu.matmul %54, %55, %cst_24 {dimension_numbers = #tpu.dot_dimension_numbers<[1], [1], [0], [0], [0, 0, 1, 0], [], []>} : vector<16x8xbf16>, vector<16x8xbf16>, vector<16x16xf32> -> vector<16x16xf32>
    %58 = arith.addf %57, %4 : vector<16x16xf32>
    %cst_25 = arith.constant dense<0xFF800000> : vector<16xf32>
    %59 = vector.multi_reduction <maximumf>, %58, %cst_25 [1] : vector<16x16xf32> to vector<16xf32>
    %60 = vector.shape_cast %59 : vector<16xf32> to vector<16x1xf32>
    %61 = vector.broadcast %60 : vector<16x1xf32> to vector<16x16xf32>
    %62 = arith.subf %58, %61 : vector<16x16xf32>
    %63 = math.exp %62 : vector<16x16xf32>
    %cst_26 = arith.constant dense<0.000000e+00> : vector<16xf32>
    %64 = vector.multi_reduction <add>, %63, %cst_26 [1] : vector<16x16xf32> to vector<16xf32>
    %65 = vector.shape_cast %64 : vector<16xf32> to vector<16x1xf32>
    %66 = tpu.reciprocal %65 {approx = true} : vector<16x1xf32> -> vector<16x1xf32>
    %67 = vector.broadcast %66 : vector<16x1xf32> to vector<16x16xf32>
    %68 = arith.mulf %63, %67 : vector<16x16xf32>
    %69 = arith.truncf %68 : vector<16x16xf32> to vector<16x16xbf16>
    %cst_27 = arith.constant dense<0.000000e+00> : vector<16x8xf32>
    %70 = tpu.matmul %69, %56, %cst_27 {dimension_numbers = #tpu.dot_dimension_numbers<[1], [0], [0], [1], [0, 0, 1, 1], [], []>} : vector<16x16xbf16>, vector<16x8xbf16>, vector<16x8xf32> -> vector<16x8xf32>
    %71 = vector.extract_strided_slice %36 {offsets = [0, 16], sizes = [16, 8], strides = [1, 1]} : vector<16x96xbf16> to vector<16x8xbf16>
    %72 = vector.extract_strided_slice %36 {offsets = [0, 48], sizes = [16, 8], strides = [1, 1]} : vector<16x96xbf16> to vector<16x8xbf16>
    %73 = vector.extract_strided_slice %36 {offsets = [0, 80], sizes = [16, 8], strides = [1, 1]} : vector<16x96xbf16> to vector<16x8xbf16>
    %cst_28 = arith.constant dense<0.000000e+00> : vector<16x16xf32>
    %74 = tpu.matmul %71, %72, %cst_28 {dimension_numbers = #tpu.dot_dimension_numbers<[1], [1], [0], [0], [0, 0, 1, 0], [], []>} : vector<16x8xbf16>, vector<16x8xbf16>, vector<16x16xf32> -> vector<16x16xf32>
    %75 = arith.addf %74, %4 : vector<16x16xf32>
    %cst_29 = arith.constant dense<0xFF800000> : vector<16xf32>
    %76 = vector.multi_reduction <maximumf>, %75, %cst_29 [1] : vector<16x16xf32> to vector<16xf32>
    %77 = vector.shape_cast %76 : vector<16xf32> to vector<16x1xf32>
    %78 = vector.broadcast %77 : vector<16x1xf32> to vector<16x16xf32>
    %79 = arith.subf %75, %78 : vector<16x16xf32>
    %80 = math.exp %79 : vector<16x16xf32>
    %cst_30 = arith.constant dense<0.000000e+00> : vector<16xf32>
    %81 = vector.multi_reduction <add>, %80, %cst_30 [1] : vector<16x16xf32> to vector<16xf32>
    %82 = vector.shape_cast %81 : vector<16xf32> to vector<16x1xf32>
    %83 = tpu.reciprocal %82 {approx = true} : vector<16x1xf32> -> vector<16x1xf32>
    %84 = vector.broadcast %83 : vector<16x1xf32> to vector<16x16xf32>
    %85 = arith.mulf %80, %84 : vector<16x16xf32>
    %86 = arith.truncf %85 : vector<16x16xf32> to vector<16x16xbf16>
    %cst_31 = arith.constant dense<0.000000e+00> : vector<16x8xf32>
    %87 = tpu.matmul %86, %73, %cst_31 {dimension_numbers = #tpu.dot_dimension_numbers<[1], [0], [0], [1], [0, 0, 1, 1], [], []>} : vector<16x16xbf16>, vector<16x8xbf16>, vector<16x8xf32> -> vector<16x8xf32>
    %88 = vector.extract_strided_slice %36 {offsets = [0, 24], sizes = [16, 8], strides = [1, 1]} : vector<16x96xbf16> to vector<16x8xbf16>
    %89 = vector.extract_strided_slice %36 {offsets = [0, 56], sizes = [16, 8], strides = [1, 1]} : vector<16x96xbf16> to vector<16x8xbf16>
    %90 = vector.extract_strided_slice %36 {offsets = [0, 88], sizes = [16, 8], strides = [1, 1]} : vector<16x96xbf16> to vector<16x8xbf16>
    %cst_32 = arith.constant dense<0.000000e+00> : vector<16x16xf32>
    %91 = tpu.matmul %88, %89, %cst_32 {dimension_numbers = #tpu.dot_dimension_numbers<[1], [1], [0], [0], [0, 0, 1, 0], [], []>} : vector<16x8xbf16>, vector<16x8xbf16>, vector<16x16xf32> -> vector<16x16xf32>
    %92 = arith.addf %91, %4 : vector<16x16xf32>
    %cst_33 = arith.constant dense<0xFF800000> : vector<16xf32>
    %93 = vector.multi_reduction <maximumf>, %92, %cst_33 [1] : vector<16x16xf32> to vector<16xf32>
    %94 = vector.shape_cast %93 : vector<16xf32> to vector<16x1xf32>
    %95 = vector.broadcast %94 : vector<16x1xf32> to vector<16x16xf32>
    %96 = arith.subf %92, %95 : vector<16x16xf32>
    %97 = math.exp %96 : vector<16x16xf32>
    %cst_34 = arith.constant dense<0.000000e+00> : vector<16xf32>
    %98 = vector.multi_reduction <add>, %97, %cst_34 [1] : vector<16x16xf32> to vector<16xf32>
    %99 = vector.shape_cast %98 : vector<16xf32> to vector<16x1xf32>
    %100 = tpu.reciprocal %99 {approx = true} : vector<16x1xf32> -> vector<16x1xf32>
    %101 = vector.broadcast %100 : vector<16x1xf32> to vector<16x16xf32>
    %102 = arith.mulf %97, %101 : vector<16x16xf32>
    %103 = arith.truncf %102 : vector<16x16xf32> to vector<16x16xbf16>
    %cst_35 = arith.constant dense<0.000000e+00> : vector<16x8xf32>
    %104 = tpu.matmul %103, %90, %cst_35 {dimension_numbers = #tpu.dot_dimension_numbers<[1], [0], [0], [1], [0, 0, 1, 1], [], []>} : vector<16x16xbf16>, vector<16x8xbf16>, vector<16x8xf32> -> vector<16x8xf32>
    %105 = tpu.concatenate %53, %70, %87, %104 in 1 : vector<16x8xf32>, vector<16x8xf32>, vector<16x8xf32>, vector<16x8xf32> -> vector<16x32xf32>
    %106 = arith.truncf %105 : vector<16x32xf32> to vector<16x32xbf16>
    %c0_36 = arith.constant 0 : index
    %c0_37 = arith.constant 0 : index
    %c0_38 = arith.constant 0 : index
    %107 = vector.load %arg7[%c0_36, %c0_37, %c0_38] : memref<2x32x32xbf16, #tpu.memory_space<vmem>>, vector<1x32x32xbf16>
    %108 = vector.shape_cast %107 : vector<1x32x32xbf16> to vector<32x32xbf16>
    %cst_39 = arith.constant dense<0.000000e+00> : vector<16x32xf32>
    %109 = tpu.matmul %106, %108, %cst_39 {dimension_numbers = #tpu.dot_dimension_numbers<[1], [0], [0], [1], [0, 0, 1, 1], [], []>} : vector<16x32xbf16>, vector<32x32xbf16>, vector<16x32xf32> -> vector<16x32xf32>
    %c0_40 = arith.constant 0 : index
    %c0_41 = arith.constant 0 : index
    %c0_42 = arith.constant 0 : index
    %110 = vector.load %arg8[%c0_40, %c0_41, %c0_42] : memref<2x1x32xf32, #tpu.memory_space<vmem>>, vector<1x1x32xf32>
    %111 = vector.shape_cast %110 : vector<1x1x32xf32> to vector<1x32xf32>
    %112 = vector.broadcast %111 : vector<1x32xf32> to vector<16x32xf32>
    %113 = arith.addf %109, %112 : vector<16x32xf32>
    %114 = arith.addf %27, %113 : vector<16x32xf32>
    %c0_43 = arith.constant 0 : index
    %c0_44 = arith.constant 0 : index
    %c0_45 = arith.constant 0 : index
    %115 = vector.load %arg9[%c0_43, %c0_44, %c0_45] : memref<2x1x32xf32, #tpu.memory_space<vmem>>, vector<1x1x32xf32>
    %116 = vector.shape_cast %115 : vector<1x1x32xf32> to vector<1x32xf32>
    %c0_46 = arith.constant 0 : index
    %c0_47 = arith.constant 0 : index
    %c0_48 = arith.constant 0 : index
    %117 = vector.load %arg10[%c0_46, %c0_47, %c0_48] : memref<2x1x32xf32, #tpu.memory_space<vmem>>, vector<1x1x32xf32>
    %118 = vector.shape_cast %117 : vector<1x1x32xf32> to vector<1x32xf32>
    %cst_49 = arith.constant dense<0.000000e+00> : vector<16xf32>
    %119 = vector.multi_reduction <add>, %114, %cst_49 [1] : vector<16x32xf32> to vector<16xf32>
    %120 = vector.shape_cast %119 : vector<16xf32> to vector<16x1xf32>
    %cst_50 = arith.constant 3.200000e+01 : f32
    %121 = vector.broadcast %cst_50 : f32 to vector<16x1xf32>
    %122 = arith.divf %120, %121 : vector<16x1xf32>
    %123 = vector.broadcast %122 : vector<16x1xf32> to vector<16x32xf32>
    %124 = arith.subf %114, %123 : vector<16x32xf32>
    %125 = arith.mulf %124, %124 : vector<16x32xf32>
    %cst_51 = arith.constant dense<0.000000e+00> : vector<16xf32>
    %126 = vector.multi_reduction <add>, %125, %cst_51 [1] : vector<16x32xf32> to vector<16xf32>
    %127 = vector.shape_cast %126 : vector<16xf32> to vector<16x1xf32>
    %cst_52 = arith.constant 3.200000e+01 : f32
    %128 = vector.broadcast %cst_52 : f32 to vector<16x1xf32>
    %129 = arith.divf %127, %128 : vector<16x1xf32>
    %cst_53 = arith.constant 9.99999996E-13 : f32
    %130 = vector.broadcast %cst_53 : f32 to vector<16x1xf32>
    %131 = arith.addf %129, %130 : vector<16x1xf32>
    %132 = math.rsqrt %131 : vector<16x1xf32>
    %133 = vector.broadcast %132 : vector<16x1xf32> to vector<16x32xf32>
    %134 = arith.mulf %124, %133 : vector<16x32xf32>
    %135 = vector.broadcast %116 : vector<1x32xf32> to vector<16x32xf32>
    %136 = arith.mulf %134, %135 : vector<16x32xf32>
    %137 = vector.broadcast %118 : vector<1x32xf32> to vector<16x32xf32>
    %138 = arith.addf %136, %137 : vector<16x32xf32>
    %c0_54 = arith.constant 0 : index
    %c0_55 = arith.constant 0 : index
    %c0_56 = arith.constant 0 : index
    %139 = vector.load %arg11[%c0_54, %c0_55, %c0_56] : memref<2x32x64xbf16, #tpu.memory_space<vmem>>, vector<1x32x64xbf16>
    %140 = vector.shape_cast %139 : vector<1x32x64xbf16> to vector<32x64xbf16>
    %141 = arith.truncf %138 : vector<16x32xf32> to vector<16x32xbf16>
    %cst_57 = arith.constant dense<0.000000e+00> : vector<16x64xf32>
    %142 = tpu.matmul %141, %140, %cst_57 {dimension_numbers = #tpu.dot_dimension_numbers<[1], [0], [0], [1], [0, 0, 1, 1], [], []>} : vector<16x32xbf16>, vector<32x64xbf16>, vector<16x64xf32> -> vector<16x64xf32>
    %c0_58 = arith.constant 0 : index
    %c0_59 = arith.constant 0 : index
    %c0_60 = arith.constant 0 : index
    %143 = vector.load %arg12[%c0_58, %c0_59, %c0_60] : memref<2x1x64xf32, #tpu.memory_space<vmem>>, vector<1x1x64xf32>
    %144 = vector.shape_cast %143 : vector<1x1x64xf32> to vector<1x64xf32>
    %145 = vector.broadcast %144 : vector<1x64xf32> to vector<16x64xf32>
    %146 = arith.addf %142, %145 : vector<16x64xf32>
    %147 = arith.mulf %146, %146 : vector<16x64xf32>
    %148 = arith.mulf %146, %147 : vector<16x64xf32>
    %cst_61 = arith.constant 4.471500e-02 : f32
    %149 = vector.broadcast %cst_61 : f32 to vector<16x64xf32>
    %150 = arith.mulf %149, %148 : vector<16x64xf32>
    %151 = arith.addf %146, %150 : vector<16x64xf32>
    %cst_62 = arith.constant 0.797884583 : f32
    %152 = vector.broadcast %cst_62 : f32 to vector<16x64xf32>
    %153 = arith.mulf %152, %151 : vector<16x64xf32>
    %154 = math.tanh %153 : vector<16x64xf32>
    %cst_63 = arith.constant 1.000000e+00 : f32
    %155 = vector.broadcast %cst_63 : f32 to vector<16x64xf32>
    %156 = arith.addf %155, %154 : vector<16x64xf32>
    %cst_64 = arith.constant 5.000000e-01 : f32
    %157 = vector.broadcast %cst_64 : f32 to vector<16x64xf32>
    %158 = arith.mulf %157, %156 : vector<16x64xf32>
    %159 = arith.mulf %146, %158 : vector<16x64xf32>
    %c0_65 = arith.constant 0 : index
    %c0_66 = arith.constant 0 : index
    %c0_67 = arith.constant 0 : index
    %160 = vector.load %arg13[%c0_65, %c0_66, %c0_67] : memref<2x64x32xbf16, #tpu.memory_space<vmem>>, vector<1x64x32xbf16>
    %161 = vector.shape_cast %160 : vector<1x64x32xbf16> to vector<64x32xbf16>
    %162 = arith.truncf %159 : vector<16x64xf32> to vector<16x64xbf16>
    %cst_68 = arith.constant dense<0.000000e+00> : vector<16x32xf32>
    %163 = tpu.matmul %162, %161, %cst_68 {dimension_numbers = #tpu.dot_dimension_numbers<[1], [0], [0], [1], [0, 0, 1, 1], [], []>} : vector<16x64xbf16>, vector<64x32xbf16>, vector<16x32xf32> -> vector<16x32xf32>
    %c0_69 = arith.constant 0 : index
    %c0_70 = arith.constant 0 : index
    %c0_71 = arith.constant 0 : index
    %164 = vector.load %arg14[%c0_69, %c0_70, %c0_71] : memref<2x1x32xf32, #tpu.memory_space<vmem>>, vector<1x1x32xf32>
    %165 = vector.shape_cast %164 : vector<1x1x32xf32> to vector<1x32xf32>
    %166 = vector.broadcast %165 : vector<1x32xf32> to vector<16x32xf32>
    %167 = arith.addf %163, %166 : vector<16x32xf32>
    %168 = arith.addf %138, %167 : vector<16x32xf32>
    %c0_72 = arith.constant 0 : index
    %c0_73 = arith.constant 0 : index
    %c0_74 = arith.constant 0 : index
    %169 = vector.load %arg15[%c0_72, %c0_73, %c0_74] : memref<2x1x32xf32, #tpu.memory_space<vmem>>, vector<1x1x32xf32>
    %170 = vector.shape_cast %169 : vector<1x1x32xf32> to vector<1x32xf32>
    %c0_75 = arith.constant 0 : index
    %c0_76 = arith.constant 0 : index
    %c0_77 = arith.constant 0 : index
    %171 = vector.load %arg16[%c0_75, %c0_76, %c0_77] : memref<2x1x32xf32, #tpu.memory_space<vmem>>, vector<1x1x32xf32>
    %172 = vector.shape_cast %171 : vector<1x1x32xf32> to vector<1x32xf32>
    %cst_78 = arith.constant dense<0.000000e+00> : vector<16xf32>
    %173 = vector.multi_reduction <add>, %168, %cst_78 [1] : vector<16x32xf32> to vector<16xf32>
    %174 = vector.shape_cast %173 : vector<16xf32> to vector<16x1xf32>
    %cst_79 = arith.constant 3.200000e+01 : f32
    %175 = vector.broadcast %cst_79 : f32 to vector<16x1xf32>
    %176 = arith.divf %174, %175 : vector<16x1xf32>
    %177 = vector.broadcast %176 : vector<16x1xf32> to vector<16x32xf32>
    %178 = arith.subf %168, %177 : vector<16x32xf32>
    %179 = arith.mulf %178, %178 : vector<16x32xf32>
    %cst_80 = arith.constant dense<0.000000e+00> : vector<16xf32>
    %180 = vector.multi_reduction <add>, %179, %cst_80 [1] : vector<16x32xf32> to vector<16xf32>
    %181 = vector.shape_cast %180 : vector<16xf32> to vector<16x1xf32>
    %cst_81 = arith.constant 3.200000e+01 : f32
    %182 = vector.broadcast %cst_81 : f32 to vector<16x1xf32>
    %183 = arith.divf %181, %182 : vector<16x1xf32>
    %cst_82 = arith.constant 9.99999996E-13 : f32
    %184 = vector.broadcast %cst_82 : f32 to vector<16x1xf32>
    %185 = arith.addf %183, %184 : vector<16x1xf32>
    %186 = math.rsqrt %185 : vector<16x1xf32>
    %187 = vector.broadcast %186 : vector<16x1xf32> to vector<16x32xf32>
    %188 = arith.mulf %178, %187 : vector<16x32xf32>
    %189 = vector.broadcast %170 : vector<1x32xf32> to vector<16x32xf32>
    %190 = arith.mulf %188, %189 : vector<16x32xf32>
    %191 = vector.broadcast %172 : vector<1x32xf32> to vector<16x32xf32>
    %192 = arith.addf %190, %191 : vector<16x32xf32>
    %193 = arith.truncf %192 : vector<16x32xf32> to vector<16x32xbf16>
    %c1 = arith.constant 1 : index
    %c0_83 = arith.constant 0 : index
    %c0_84 = arith.constant 0 : index
    %194 = vector.load %arg5[%c1, %c0_83, %c0_84] : memref<2x32x96xbf16, #tpu.memory_space<vmem>>, vector<1x32x96xbf16>
    %195 = vector.shape_cast %194 : vector<1x32x96xbf16> to vector<32x96xbf16>
    %cst_85 = arith.constant dense<0.000000e+00> : vector<16x96xf32>
    %196 = tpu.matmul %193, %195, %cst_85 {dimension_numbers = #tpu.dot_dimension_numbers<[1], [0], [0], [1], [0, 0, 1, 1], [], []>} : vector<16x32xbf16>, vector<32x96xbf16>, vector<16x96xf32> -> vector<16x96xf32>
    %c1_86 = arith.constant 1 : index
    %c0_87 = arith.constant 0 : index
    %c0_88 = arith.constant 0 : index
    %197 = vector.load %arg6[%c1_86, %c0_87, %c0_88] : memref<2x1x96xf32, #tpu.memory_space<vmem>>, vector<1x1x96xf32>
    %198 = vector.shape_cast %197 : vector<1x1x96xf32> to vector<1x96xf32>
    %199 = vector.broadcast %198 : vector<1x96xf32> to vector<16x96xf32>
    %200 = arith.addf %196, %199 : vector<16x96xf32>
    %201 = arith.truncf %200 : vector<16x96xf32> to vector<16x96xbf16>
    %202 = vector.extract_strided_slice %201 {offsets = [0, 0], sizes = [16, 8], strides = [1, 1]} : vector<16x96xbf16> to vector<16x8xbf16>
    %203 = vector.extract_strided_slice %201 {offsets = [0, 32], sizes = [16, 8], strides = [1, 1]} : vector<16x96xbf16> to vector<16x8xbf16>
    %204 = vector.extract_strided_slice %201 {offsets = [0, 64], sizes = [16, 8], strides = [1, 1]} : vector<16x96xbf16> to vector<16x8xbf16>
    %cst_89 = arith.constant dense<0.000000e+00> : vector<16x16xf32>
    %205 = tpu.matmul %202, %203, %cst_89 {dimension_numbers = #tpu.dot_dimension_numbers<[1], [1], [0], [0], [0, 0, 1, 0], [], []>} : vector<16x8xbf16>, vector<16x8xbf16>, vector<16x16xf32> -> vector<16x16xf32>
    %206 = arith.addf %205, %4 : vector<16x16xf32>
    %cst_90 = arith.constant dense<0xFF800000> : vector<16xf32>
    %207 = vector.multi_reduction <maximumf>, %206, %cst_90 [1] : vector<16x16xf32> to vector<16xf32>
    %208 = vector.shape_cast %207 : vector<16xf32> to vector<16x1xf32>
    %209 = vector.broadcast %208 : vector<16x1xf32> to vector<16x16xf32>
    %210 = arith.subf %206, %209 : vector<16x16xf32>
    %211 = math.exp %210 : vector<16x16xf32>
    %cst_91 = arith.constant dense<0.000000e+00> : vector<16xf32>
    %212 = vector.multi_reduction <add>, %211, %cst_91 [1] : vector<16x16xf32> to vector<16xf32>
    %213 = vector.shape_cast %212 : vector<16xf32> to vector<16x1xf32>
    %214 = tpu.reciprocal %213 {approx = true} : vector<16x1xf32> -> vector<16x1xf32>
    %215 = vector.broadcast %214 : vector<16x1xf32> to vector<16x16xf32>
    %216 = arith.mulf %211, %215 : vector<16x16xf32>
    %217 = arith.truncf %216 : vector<16x16xf32> to vector<16x16xbf16>
    %cst_92 = arith.constant dense<0.000000e+00> : vector<16x8xf32>
    %218 = tpu.matmul %217, %204, %cst_92 {dimension_numbers = #tpu.dot_dimension_numbers<[1], [0], [0], [1], [0, 0, 1, 1], [], []>} : vector<16x16xbf16>, vector<16x8xbf16>, vector<16x8xf32> -> vector<16x8xf32>
    %219 = vector.extract_strided_slice %201 {offsets = [0, 8], sizes = [16, 8], strides = [1, 1]} : vector<16x96xbf16> to vector<16x8xbf16>
    %220 = vector.extract_strided_slice %201 {offsets = [0, 40], sizes = [16, 8], strides = [1, 1]} : vector<16x96xbf16> to vector<16x8xbf16>
    %221 = vector.extract_strided_slice %201 {offsets = [0, 72], sizes = [16, 8], strides = [1, 1]} : vector<16x96xbf16> to vector<16x8xbf16>
    %cst_93 = arith.constant dense<0.000000e+00> : vector<16x16xf32>
    %222 = tpu.matmul %219, %220, %cst_93 {dimension_numbers = #tpu.dot_dimension_numbers<[1], [1], [0], [0], [0, 0, 1, 0], [], []>} : vector<16x8xbf16>, vector<16x8xbf16>, vector<16x16xf32> -> vector<16x16xf32>
    %223 = arith.addf %222, %4 : vector<16x16xf32>
    %cst_94 = arith.constant dense<0xFF800000> : vector<16xf32>
    %224 = vector.multi_reduction <maximumf>, %223, %cst_94 [1] : vector<16x16xf32> to vector<16xf32>
    %225 = vector.shape_cast %224 : vector<16xf32> to vector<16x1xf32>
    %226 = vector.broadcast %225 : vector<16x1xf32> to vector<16x16xf32>
    %227 = arith.subf %223, %226 : vector<16x16xf32>
    %228 = math.exp %227 : vector<16x16xf32>
    %cst_95 = arith.constant dense<0.000000e+00> : vector<16xf32>
    %229 = vector.multi_reduction <add>, %228, %cst_95 [1] : vector<16x16xf32> to vector<16xf32>
    %230 = vector.shape_cast %229 : vector<16xf32> to vector<16x1xf32>
    %231 = tpu.reciprocal %230 {approx = true} : vector<16x1xf32> -> vector<16x1xf32>
    %232 = vector.broadcast %231 : vector<16x1xf32> to vector<16x16xf32>
    %233 = arith.mulf %228, %232 : vector<16x16xf32>
    %234 = arith.truncf %233 : vector<16x16xf32> to vector<16x16xbf16>
    %cst_96 = arith.constant dense<0.000000e+00> : vector<16x8xf32>
    %235 = tpu.matmul %234, %221, %cst_96 {dimension_numbers = #tpu.dot_dimension_numbers<[1], [0], [0], [1], [0, 0, 1, 1], [], []>} : vector<16x16xbf16>, vector<16x8xbf16>, vector<16x8xf32> -> vector<16x8xf32>
    %236 = vector.extract_strided_slice %201 {offsets = [0, 16], sizes = [16, 8], strides = [1, 1]} : vector<16x96xbf16> to vector<16x8xbf16>
    %237 = vector.extract_strided_slice %201 {offsets = [0, 48], sizes = [16, 8], strides = [1, 1]} : vector<16x96xbf16> to vector<16x8xbf16>
    %238 = vector.extract_strided_slice %201 {offsets = [0, 80], sizes = [16, 8], strides = [1, 1]} : vector<16x96xbf16> to vector<16x8xbf16>
    %cst_97 = arith.constant dense<0.000000e+00> : vector<16x16xf32>
    %239 = tpu.matmul %236, %237, %cst_97 {dimension_numbers = #tpu.dot_dimension_numbers<[1], [1], [0], [0], [0, 0, 1, 0], [], []>} : vector<16x8xbf16>, vector<16x8xbf16>, vector<16x16xf32> -> vector<16x16xf32>
    %240 = arith.addf %239, %4 : vector<16x16xf32>
    %cst_98 = arith.constant dense<0xFF800000> : vector<16xf32>
    %241 = vector.multi_reduction <maximumf>, %240, %cst_98 [1] : vector<16x16xf32> to vector<16xf32>
    %242 = vector.shape_cast %241 : vector<16xf32> to vector<16x1xf32>
    %243 = vector.broadcast %242 : vector<16x1xf32> to vector<16x16xf32>
    %244 = arith.subf %240, %243 : vector<16x16xf32>
    %245 = math.exp %244 : vector<16x16xf32>
    %cst_99 = arith.constant dense<0.000000e+00> : vector<16xf32>
    %246 = vector.multi_reduction <add>, %245, %cst_99 [1] : vector<16x16xf32> to vector<16xf32>
    %247 = vector.shape_cast %246 : vector<16xf32> to vector<16x1xf32>
    %248 = tpu.reciprocal %247 {approx = true} : vector<16x1xf32> -> vector<16x1xf32>
    %249 = vector.broadcast %248 : vector<16x1xf32> to vector<16x16xf32>
    %250 = arith.mulf %245, %249 : vector<16x16xf32>
    %251 = arith.truncf %250 : vector<16x16xf32> to vector<16x16xbf16>
    %cst_100 = arith.constant dense<0.000000e+00> : vector<16x8xf32>
    %252 = tpu.matmul %251, %238, %cst_100 {dimension_numbers = #tpu.dot_dimension_numbers<[1], [0], [0], [1], [0, 0, 1, 1], [], []>} : vector<16x16xbf16>, vector<16x8xbf16>, vector<16x8xf32> -> vector<16x8xf32>
    %253 = vector.extract_strided_slice %201 {offsets = [0, 24], sizes = [16, 8], strides = [1, 1]} : vector<16x96xbf16> to vector<16x8xbf16>
    %254 = vector.extract_strided_slice %201 {offsets = [0, 56], sizes = [16, 8], strides = [1, 1]} : vector<16x96xbf16> to vector<16x8xbf16>
    %255 = vector.extract_strided_slice %201 {offsets = [0, 88], sizes = [16, 8], strides = [1, 1]} : vector<16x96xbf16> to vector<16x8xbf16>
    %cst_101 = arith.constant dense<0.000000e+00> : vector<16x16xf32>
    %256 = tpu.matmul %253, %254, %cst_101 {dimension_numbers = #tpu.dot_dimension_numbers<[1], [1], [0], [0], [0, 0, 1, 0], [], []>} : vector<16x8xbf16>, vector<16x8xbf16>, vector<16x16xf32> -> vector<16x16xf32>
    %257 = arith.addf %256, %4 : vector<16x16xf32>
    %cst_102 = arith.constant dense<0xFF800000> : vector<16xf32>
    %258 = vector.multi_reduction <maximumf>, %257, %cst_102 [1] : vector<16x16xf32> to vector<16xf32>
    %259 = vector.shape_cast %258 : vector<16xf32> to vector<16x1xf32>
    %260 = vector.broadcast %259 : vector<16x1xf32> to vector<16x16xf32>
    %261 = arith.subf %257, %260 : vector<16x16xf32>
    %262 = math.exp %261 : vector<16x16xf32>
    %cst_103 = arith.constant dense<0.000000e+00> : vector<16xf32>
    %263 = vector.multi_reduction <add>, %262, %cst_103 [1] : vector<16x16xf32> to vector<16xf32>
    %264 = vector.shape_cast %263 : vector<16xf32> to vector<16x1xf32>
    %265 = tpu.reciprocal %264 {approx = true} : vector<16x1xf32> -> vector<16x1xf32>
    %266 = vector.broadcast %265 : vector<16x1xf32> to vector<16x16xf32>
    %267 = arith.mulf %262, %266 : vector<16x16xf32>
    %268 = arith.truncf %267 : vector<16x16xf32> to vector<16x16xbf16>
    %cst_104 = arith.constant dense<0.000000e+00> : vector<16x8xf32>
    %269 = tpu.matmul %268, %255, %cst_104 {dimension_numbers = #tpu.dot_dimension_numbers<[1], [0], [0], [1], [0, 0, 1, 1], [], []>} : vector<16x16xbf16>, vector<16x8xbf16>, vector<16x8xf32> -> vector<16x8xf32>
    %270 = tpu.concatenate %218, %235, %252, %269 in 1 : vector<16x8xf32>, vector<16x8xf32>, vector<16x8xf32>, vector<16x8xf32> -> vector<16x32xf32>
    %271 = arith.truncf %270 : vector<16x32xf32> to vector<16x32xbf16>
    %c1_105 = arith.constant 1 : index
    %c0_106 = arith.constant 0 : index
    %c0_107 = arith.constant 0 : index
    %272 = vector.load %arg7[%c1_105, %c0_106, %c0_107] : memref<2x32x32xbf16, #tpu.memory_space<vmem>>, vector<1x32x32xbf16>
    %273 = vector.shape_cast %272 : vector<1x32x32xbf16> to vector<32x32xbf16>
    %cst_108 = arith.constant dense<0.000000e+00> : vector<16x32xf32>
    %274 = tpu.matmul %271, %273, %cst_108 {dimension_numbers = #tpu.dot_dimension_numbers<[1], [0], [0], [1], [0, 0, 1, 1], [], []>} : vector<16x32xbf16>, vector<32x32xbf16>, vector<16x32xf32> -> vector<16x32xf32>
    %c1_109 = arith.constant 1 : index
    %c0_110 = arith.constant 0 : index
    %c0_111 = arith.constant 0 : index
    %275 = vector.load %arg8[%c1_109, %c0_110, %c0_111] : memref<2x1x32xf32, #tpu.memory_space<vmem>>, vector<1x1x32xf32>
    %276 = vector.shape_cast %275 : vector<1x1x32xf32> to vector<1x32xf32>
    %277 = vector.broadcast %276 : vector<1x32xf32> to vector<16x32xf32>
    %278 = arith.addf %274, %277 : vector<16x32xf32>
    %279 = arith.addf %192, %278 : vector<16x32xf32>
    %c1_112 = arith.constant 1 : index
    %c0_113 = arith.constant 0 : index
    %c0_114 = arith.constant 0 : index
    %280 = vector.load %arg9[%c1_112, %c0_113, %c0_114] : memref<2x1x32xf32, #tpu.memory_space<vmem>>, vector<1x1x32xf32>
    %281 = vector.shape_cast %280 : vector<1x1x32xf32> to vector<1x32xf32>
    %c1_115 = arith.constant 1 : index
    %c0_116 = arith.constant 0 : index
    %c0_117 = arith.constant 0 : index
    %282 = vector.load %arg10[%c1_115, %c0_116, %c0_117] : memref<2x1x32xf32, #tpu.memory_space<vmem>>, vector<1x1x32xf32>
    %283 = vector.shape_cast %282 : vector<1x1x32xf32> to vector<1x32xf32>
    %cst_118 = arith.constant dense<0.000000e+00> : vector<16xf32>
    %284 = vector.multi_reduction <add>, %279, %cst_118 [1] : vector<16x32xf32> to vector<16xf32>
    %285 = vector.shape_cast %284 : vector<16xf32> to vector<16x1xf32>
    %cst_119 = arith.constant 3.200000e+01 : f32
    %286 = vector.broadcast %cst_119 : f32 to vector<16x1xf32>
    %287 = arith.divf %285, %286 : vector<16x1xf32>
    %288 = vector.broadcast %287 : vector<16x1xf32> to vector<16x32xf32>
    %289 = arith.subf %279, %288 : vector<16x32xf32>
    %290 = arith.mulf %289, %289 : vector<16x32xf32>
    %cst_120 = arith.constant dense<0.000000e+00> : vector<16xf32>
    %291 = vector.multi_reduction <add>, %290, %cst_120 [1] : vector<16x32xf32> to vector<16xf32>
    %292 = vector.shape_cast %291 : vector<16xf32> to vector<16x1xf32>
    %cst_121 = arith.constant 3.200000e+01 : f32
    %293 = vector.broadcast %cst_121 : f32 to vector<16x1xf32>
    %294 = arith.divf %292, %293 : vector<16x1xf32>
    %cst_122 = arith.constant 9.99999996E-13 : f32
    %295 = vector.broadcast %cst_122 : f32 to vector<16x1xf32>
    %296 = arith.addf %294, %295 : vector<16x1xf32>
    %297 = math.rsqrt %296 : vector<16x1xf32>
    %298 = vector.broadcast %297 : vector<16x1xf32> to vector<16x32xf32>
    %299 = arith.mulf %289, %298 : vector<16x32xf32>
    %300 = vector.broadcast %281 : vector<1x32xf32> to vector<16x32xf32>
    %301 = arith.mulf %299, %300 : vector<16x32xf32>
    %302 = vector.broadcast %283 : vector<1x32xf32> to vector<16x32xf32>
    %303 = arith.addf %301, %302 : vector<16x32xf32>
    %c1_123 = arith.constant 1 : index
    %c0_124 = arith.constant 0 : index
    %c0_125 = arith.constant 0 : index
    %304 = vector.load %arg11[%c1_123, %c0_124, %c0_125] : memref<2x32x64xbf16, #tpu.memory_space<vmem>>, vector<1x32x64xbf16>
    %305 = vector.shape_cast %304 : vector<1x32x64xbf16> to vector<32x64xbf16>
    %306 = arith.truncf %303 : vector<16x32xf32> to vector<16x32xbf16>
    %cst_126 = arith.constant dense<0.000000e+00> : vector<16x64xf32>
    %307 = tpu.matmul %306, %305, %cst_126 {dimension_numbers = #tpu.dot_dimension_numbers<[1], [0], [0], [1], [0, 0, 1, 1], [], []>} : vector<16x32xbf16>, vector<32x64xbf16>, vector<16x64xf32> -> vector<16x64xf32>
    %c1_127 = arith.constant 1 : index
    %c0_128 = arith.constant 0 : index
    %c0_129 = arith.constant 0 : index
    %308 = vector.load %arg12[%c1_127, %c0_128, %c0_129] : memref<2x1x64xf32, #tpu.memory_space<vmem>>, vector<1x1x64xf32>
    %309 = vector.shape_cast %308 : vector<1x1x64xf32> to vector<1x64xf32>
    %310 = vector.broadcast %309 : vector<1x64xf32> to vector<16x64xf32>
    %311 = arith.addf %307, %310 : vector<16x64xf32>
    %312 = arith.mulf %311, %311 : vector<16x64xf32>
    %313 = arith.mulf %311, %312 : vector<16x64xf32>
    %cst_130 = arith.constant 4.471500e-02 : f32
    %314 = vector.broadcast %cst_130 : f32 to vector<16x64xf32>
    %315 = arith.mulf %314, %313 : vector<16x64xf32>
    %316 = arith.addf %311, %315 : vector<16x64xf32>
    %cst_131 = arith.constant 0.797884583 : f32
    %317 = vector.broadcast %cst_131 : f32 to vector<16x64xf32>
    %318 = arith.mulf %317, %316 : vector<16x64xf32>
    %319 = math.tanh %318 : vector<16x64xf32>
    %cst_132 = arith.constant 1.000000e+00 : f32
    %320 = vector.broadcast %cst_132 : f32 to vector<16x64xf32>
    %321 = arith.addf %320, %319 : vector<16x64xf32>
    %cst_133 = arith.constant 5.000000e-01 : f32
    %322 = vector.broadcast %cst_133 : f32 to vector<16x64xf32>
    %323 = arith.mulf %322, %321 : vector<16x64xf32>
    %324 = arith.mulf %311, %323 : vector<16x64xf32>
    %c1_134 = arith.constant 1 : index
    %c0_135 = arith.constant 0 : index
    %c0_136 = arith.constant 0 : index
    %325 = vector.load %arg13[%c1_134, %c0_135, %c0_136] : memref<2x64x32xbf16, #tpu.memory_space<vmem>>, vector<1x64x32xbf16>
    %326 = vector.shape_cast %325 : vector<1x64x32xbf16> to vector<64x32xbf16>
    %327 = arith.truncf %324 : vector<16x64xf32> to vector<16x64xbf16>
    %cst_137 = arith.constant dense<0.000000e+00> : vector<16x32xf32>
    %328 = tpu.matmul %327, %326, %cst_137 {dimension_numbers = #tpu.dot_dimension_numbers<[1], [0], [0], [1], [0, 0, 1, 1], [], []>} : vector<16x64xbf16>, vector<64x32xbf16>, vector<16x32xf32> -> vector<16x32xf32>
    %c1_138 = arith.constant 1 : index
    %c0_139 = arith.constant 0 : index
    %c0_140 = arith.constant 0 : index
    %329 = vector.load %arg14[%c1_138, %c0_139, %c0_140] : memref<2x1x32xf32, #tpu.memory_space<vmem>>, vector<1x1x32xf32>
    %330 = vector.shape_cast %329 : vector<1x1x32xf32> to vector<1x32xf32>
    %331 = vector.broadcast %330 : vector<1x32xf32> to vector<16x32xf32>
    %332 = arith.addf %328, %331 : vector<16x32xf32>
    %333 = arith.addf %303, %332 : vector<16x32xf32>
    %c1_141 = arith.constant 1 : index
    %c0_142 = arith.constant 0 : index
    %c0_143 = arith.constant 0 : index
    %334 = vector.load %arg15[%c1_141, %c0_142, %c0_143] : memref<2x1x32xf32, #tpu.memory_space<vmem>>, vector<1x1x32xf32>
    %335 = vector.shape_cast %334 : vector<1x1x32xf32> to vector<1x32xf32>
    %c1_144 = arith.constant 1 : index
    %c0_145 = arith.constant 0 : index
    %c0_146 = arith.constant 0 : index
    %336 = vector.load %arg16[%c1_144, %c0_145, %c0_146] : memref<2x1x32xf32, #tpu.memory_space<vmem>>, vector<1x1x32xf32>
    %337 = vector.shape_cast %336 : vector<1x1x32xf32> to vector<1x32xf32>
    %cst_147 = arith.constant dense<0.000000e+00> : vector<16xf32>
    %338 = vector.multi_reduction <add>, %333, %cst_147 [1] : vector<16x32xf32> to vector<16xf32>
    %339 = vector.shape_cast %338 : vector<16xf32> to vector<16x1xf32>
    %cst_148 = arith.constant 3.200000e+01 : f32
    %340 = vector.broadcast %cst_148 : f32 to vector<16x1xf32>
    %341 = arith.divf %339, %340 : vector<16x1xf32>
    %342 = vector.broadcast %341 : vector<16x1xf32> to vector<16x32xf32>
    %343 = arith.subf %333, %342 : vector<16x32xf32>
    %344 = arith.mulf %343, %343 : vector<16x32xf32>
    %cst_149 = arith.constant dense<0.000000e+00> : vector<16xf32>
    %345 = vector.multi_reduction <add>, %344, %cst_149 [1] : vector<16x32xf32> to vector<16xf32>
    %346 = vector.shape_cast %345 : vector<16xf32> to vector<16x1xf32>
    %cst_150 = arith.constant 3.200000e+01 : f32
    %347 = vector.broadcast %cst_150 : f32 to vector<16x1xf32>
    %348 = arith.divf %346, %347 : vector<16x1xf32>
    %cst_151 = arith.constant 9.99999996E-13 : f32
    %349 = vector.broadcast %cst_151 : f32 to vector<16x1xf32>
    %350 = arith.addf %348, %349 : vector<16x1xf32>
    %351 = math.rsqrt %350 : vector<16x1xf32>
    %352 = vector.broadcast %351 : vector<16x1xf32> to vector<16x32xf32>
    %353 = arith.mulf %343, %352 : vector<16x32xf32>
    %354 = vector.broadcast %335 : vector<1x32xf32> to vector<16x32xf32>
    %355 = arith.mulf %353, %354 : vector<16x32xf32>
    %356 = vector.broadcast %337 : vector<1x32xf32> to vector<16x32xf32>
    %357 = arith.addf %355, %356 : vector<16x32xf32>
    %c0_152 = arith.constant 0 : index
    %c0_153 = arith.constant 0 : index
    %358 = vector.load %arg17[%c0_152, %c0_153] : memref<32x128xbf16, #tpu.memory_space<vmem>>, vector<32x128xbf16>
    %359 = arith.truncf %357 : vector<16x32xf32> to vector<16x32xbf16>
    %cst_154 = arith.constant dense<0.000000e+00> : vector<16x128xf32>
    %360 = tpu.matmul %359, %358, %cst_154 {dimension_numbers = #tpu.dot_dimension_numbers<[1], [0], [0], [1], [0, 0, 1, 1], [], []>} : vector<16x32xbf16>, vector<32x128xbf16>, vector<16x128xf32> -> vector<16x128xf32>
    %c0_155 = arith.constant 0 : index
    %c0_156 = arith.constant 0 : index
    %361 = vector.load %arg18[%c0_155, %c0_156] : memref<1x128xf32, #tpu.memory_space<vmem>>, vector<1x128xf32>
    %362 = vector.broadcast %361 : vector<1x128xf32> to vector<16x128xf32>
    %363 = arith.addf %360, %362 : vector<16x128xf32>
    %cst_157 = arith.constant dense<0xFF800000> : vector<16xf32>
    %364 = vector.multi_reduction <maximumf>, %363, %cst_157 [1] : vector<16x128xf32> to vector<16xf32>
    %365 = vector.shape_cast %364 : vector<16xf32> to vector<16x1xf32>
    %366 = vector.broadcast %365 : vector<16x1xf32> to vector<16x128xf32>
    %367 = arith.subf %363, %366 : vector<16x128xf32>
    %368 = math.exp %367 : vector<16x128xf32>
    %cst_158 = arith.constant dense<0.000000e+00> : vector<16xf32>
    %369 = vector.multi_reduction <add>, %368, %cst_158 [1] : vector<16x128xf32> to vector<16xf32>
    %370 = vector.shape_cast %369 : vector<16xf32> to vector<16x1xf32>
    %371 = math.log %370 : vector<16x1xf32>
    %372 = vector.broadcast %371 : vector<16x1xf32> to vector<16x128xf32>
    %373 = arith.subf %367, %372 : vector<16x128xf32>
    %c0_159 = arith.constant 0 : index
    %c0_160 = arith.constant 0 : index
    %374 = vector.load %arg19[%c0_159, %c0_160] : memref<16x128xf32, #tpu.memory_space<vmem>>, vector<16x128xf32>
    tpu.vector_store %arg19[%c0_159, %c0_160], %373 {strides = array<i32>} : memref<16x128xf32, #tpu.memory_space<vmem>>, vector<16x128xf32>,
    return
  }
  func.func @transform_0(%arg0: i32) -> (i32, i32) {
    %c0_i32 = arith.constant 0 : i32
    %c0_i32_0 = arith.constant 0 : i32
    %c0_i32_1 = arith.constant 0 : i32
    return %c0_i32, %c0_i32_0 : i32, i32
  }
  func.func @transform_1(%arg0: i32) -> (i32, i32) {
    %c0_i32 = arith.constant 0 : i32
    %c0_i32_0 = arith.constant 0 : i32
    %c0_i32_1 = arith.constant 0 : i32
    return %c0_i32, %c0_i32_0 : i32, i32
  }
  func.func @transform_2(%arg0: i32) -> (i32, i32) {
    %c0_i32 = arith.constant 0 : i32
    %c0_i32_0 = arith.constant 0 : i32
    %c0_i32_1 = arith.constant 0 : i32
    return %c0_i32, %c0_i32_0 : i32, i32
  }
  func.func @transform_3(%arg0: i32) -> (i32, i32) {
    %c0_i32 = arith.constant 0 : i32
    %c0_i32_0 = arith.constant 0 : i32
    %c0_i32_1 = arith.constant 0 : i32
    return %c0_i32, %c0_i32_0 : i32, i32
  }
  func.func @transform_4(%arg0: i32) -> (i32, i32, i32) {
    %c0_i32 = arith.constant 0 : i32
    %c0_i32_0 = arith.constant 0 : i32
    %c0_i32_1 = arith.constant 0 : i32
    %c0_i32_2 = arith.constant 0 : i32
    return %c0_i32, %c0_i32_0, %c0_i32_1 : i32, i32, i32
  }
  func.func @transform_5(%arg0: i32) -> (i32, i32, i32) {
    %c0_i32 = arith.constant 0 : i32
    %c0_i32_0 = arith.constant 0 : i32
    %c0_i32_1 = arith.constant 0 : i32
    %c0_i32_2 = arith.constant 0 : i32
    return %c0_i32, %c0_i32_0, %c0_i32_1 : i32, i32, i32
  }
  func.func @transform_6(%arg0: i32) -> (i32, i32, i32) {
    %c0_i32 = arith.constant 0 : i32
    %c0_i32_0 = arith.constant 0 : i32
    %c0_i32_1 = arith.constant 0 : i32
    %c0_i32_2 = arith.constant 0 : i32
    return %c0_i32, %c0_i32_0, %c0_i32_1 : i32, i32, i32
  }
  func.func @transform_7(%arg0: i32) -> (i32, i32, i32) {
    %c0_i32 = arith.constant 0 : i32
    %c0_i32_0 = arith.constant 0 : i32
    %c0_i32_1 = arith.constant 0 : i32
    %c0_i32_2 = arith.constant 0 : i32
    return %c0_i32, %c0_i32_0, %c0_i32_1 : i32, i32, i32
  }
  func.func @transform_8(%arg0: i32) -> (i32, i32, i32) {
    %c0_i32 = arith.constant 0 : i32
    %c0_i32_0 = arith.constant 0 : i32
    %c0_i32_1 = arith.constant 0 : i32
    %c0_i32_2 = arith.constant 0 : i32
    return %c0_i32, %c0_i32_0, %c0_i32_1 : i32, i32, i32
  }
  func.func @transform_9(%arg0: i32) -> (i32, i32, i32) {
    %c0_i32 = arith.constant 0 : i32
    %c0_i32_0 = arith.constant 0 : i32
    %c0_i32_1 = arith.constant 0 : i32
    %c0_i32_2 = arith.constant 0 : i32
    return %c0_i32, %c0_i32_0, %c0_i32_1 : i32, i32, i32
  }
  func.func @transform_10(%arg0: i32) -> (i32, i32, i32) {
    %c0_i32 = arith.constant 0 : i32
    %c0_i32_0 = arith.constant 0 : i32
    %c0_i32_1 = arith.constant 0 : i32
    %c0_i32_2 = arith.constant 0 : i32
    return %c0_i32, %c0_i32_0, %c0_i32_1 : i32, i32, i32
  }
  func.func @transform_11(%arg0: i32) -> (i32, i32, i32) {
    %c0_i32 = arith.constant 0 : i32
    %c0_i32_0 = arith.constant 0 : i32
    %c0_i32_1 = arith.constant 0 : i32
    %c0_i32_2 = arith.constant 0 : i32
    return %c0_i32, %c0_i32_0, %c0_i32_1 : i32, i32, i32
  }
  func.func @transform_12(%arg0: i32) -> (i32, i32, i32) {
    %c0_i32 = arith.constant 0 : i32
    %c0_i32_0 = arith.constant 0 : i32
    %c0_i32_1 = arith.constant 0 : i32
    %c0_i32_2 = arith.constant 0 : i32
    return %c0_i32, %c0_i32_0, %c0_i32_1 : i32, i32, i32
  }
  func.func @transform_13(%arg0: i32) -> (i32, i32, i32) {
    %c0_i32 = arith.constant 0 : i32
    %c0_i32_0 = arith.constant 0 : i32
    %c0_i32_1 = arith.constant 0 : i32
    %c0_i32_2 = arith.constant 0 : i32
    return %c0_i32, %c0_i32_0, %c0_i32_1 : i32, i32, i32
  }
  func.func @transform_14(%arg0: i32) -> (i32, i32, i32) {
    %c0_i32 = arith.constant 0 : i32
    %c0_i32_0 = arith.constant 0 : i32
    %c0_i32_1 = arith.constant 0 : i32
    %c0_i32_2 = arith.constant 0 : i32
    return %c0_i32, %c0_i32_0, %c0_i32_1 : i32, i32, i32
  }
  func.func @transform_15(%arg0: i32) -> (i32, i32, i32) {
    %c0_i32 = arith.constant 0 : i32
    %c0_i32_0 = arith.constant 0 : i32
    %c0_i32_1 = arith.constant 0 : i32
    %c0_i32_2 = arith.constant 0 : i32
    return %c0_i32, %c0_i32_0, %c0_i32_1 : i32, i32, i32
  }
  func.func @transform_16(%arg0: i32) -> (i32, i32) {
    %c0_i32 = arith.constant 0 : i32
    %c0_i32_0 = arith.constant 0 : i32
    %c0_i32_1 = arith.constant 0 : i32
    return %c0_i32, %c0_i32_0 : i32, i32
  }
  func.func @transform_17(%arg0: i32) -> (i32, i32) {
    %c0_i32 = arith.constant 0 : i32
    %c0_i32_0 = arith.constant 0 : i32
    %c0_i32_1 = arith.constant 0 : i32
    return %c0_i32, %c0_i32_0 : i32, i32
  }
  func.func @transform_18(%arg0: i32) -> (i32, i32) {
    %c0_i32 = arith.constant 0 : i32
    %c0_i32_0 = arith.constant 0 : i32
    %c0_i32_1 = arith.constant 0 : i32
    return %c0_i32, %c0_i32_0 : i32, i32
  }
}

</mosaic_0001>

<llo_original>
// kernel: tpu_custom_call.1
$region0: #{tpu_custom_call.1}
  #allocation0 [shape = 'u32[]', space=smem, size = 0x4, offset = 0x4, fixed_abs, tag = 'smem constant byte address 0x4 - core index']
  #allocation1 [shape = 'u32[144,128]{1,0:T(1,128)}', space=vmem, size = 0x12000, scoped, tag = 'internal scratch']
  %s0 = inlined_call_operand.hbm [shape: f32[16,32], index: 0, kind: input, shape index: {}]
  %s1 = inlined_call_operand.hbm [shape: f32[16,16], index: 1, kind: input, shape index: {}]
  %s2 = inlined_call_operand.vmem [shape: f32[1,32], index: 2, kind: input, shape index: {}]
  %s3 = inlined_call_operand.hbm [shape: f32[1,32], index: 3, kind: input, shape index: {}]
  %s4 = inlined_call_operand.vmem [shape: bf16[2,32,96], index: 4, kind: input, shape index: {}]
  %s5 = inlined_call_operand.hbm [shape: f32[2,1,96], index: 5, kind: input, shape index: {}]
  %s6 = inlined_call_operand.vmem [shape: bf16[2,32,32], index: 6, kind: input, shape index: {}]
  %s7 = inlined_call_operand.hbm [shape: f32[2,1,32], index: 7, kind: input, shape index: {}]
  %s8 = inlined_call_operand.hbm [shape: f32[2,1,32], index: 8, kind: input, shape index: {}]
  %s9 = inlined_call_operand.hbm [shape: f32[2,1,32], index: 9, kind: input, shape index: {}]
  %s10 = inlined_call_operand.vmem [shape: bf16[2,32,64], index: 10, kind: input, shape index: {}]
  %s11 = inlined_call_operand.hbm [shape: f32[2,1,64], index: 11, kind: input, shape index: {}]
  %s12 = inlined_call_operand.vmem [shape: bf16[2,64,32], index: 12, kind: input, shape index: {}]
  %s13 = inlined_call_operand.hbm [shape: f32[2,1,32], index: 13, kind: input, shape index: {}]
  %s14 = inlined_call_operand.vmem [shape: f32[2,1,32], index: 14, kind: input, shape index: {}]
  %s15 = inlined_call_operand.vmem [shape: f32[2,1,32], index: 15, kind: input, shape index: {}]
  %s16 = inlined_call_operand.vmem [shape: bf16[32,128], index: 16, kind: input, shape index: {}]
  %s17 = inlined_call_operand.vmem [shape: f32[1,128], index: 17, kind: input, shape index: {}]
  %s18 = inlined_call_operand.hbm [shape: f32[16,128], index: 18, kind: output, shape index: {}]
  %s19 = sld [smem:[#allocation0]]
  $region118: #{tpu_custom_call.1} parent=0
    _
  %s21 = ssub.s32 1, %s19
  %s22 = scalar_select 0, %s21, %s19
  $region1: #{tpu_custom_call.1} parent=0
    #allocation2 [shape = 'u8[8192]{0}', space=vmem, size = 0x2000, scoped, tag = 'input window, operand 0, single buffered']
    #allocation3 [shape = 's32[1]{0}', space=sflag, size = 0x4, scoped, tag = 'scoped memory for tpu_custom_call.1']
    #allocation4 [shape = 's32[1]{0}', space=sflag, size = 0x4, scoped, tag = 'scoped memory for tpu_custom_call.1']
    #allocation5 [shape = 'u8[8192]{0}', space=vmem, size = 0x2000, scoped, tag = 'input window, operand 1, single buffered']
    #allocation6 [shape = 's32[1]{0}', space=sflag, size = 0x4, scoped, tag = 'scoped memory for tpu_custom_call.1']
    #allocation7 [shape = 'u8[512]{0}', space=vmem, size = 0x400, scoped, tag = 'input window, operand 3, single buffered']
    #allocation8 [shape = 'u8[1024]{0}', space=vmem, size = 0x400, scoped, tag = 'input window, operand 5, single buffered']
    #allocation9 [shape = 's32[1]{0}', space=sflag, size = 0x4, scoped, tag = 'scoped memory for tpu_custom_call.1']
    #allocation10 [shape = 'u8[1024]{0}', space=vmem, size = 0x400, scoped, tag = 'input window, operand 7, single buffered']
    #allocation11 [shape = 'u8[1024]{0}', space=vmem, size = 0x400, scoped, tag = 'input window, operand 8, single buffered']
    #allocation12 [shape = 's32[1]{0}', space=sflag, size = 0x4, scoped, tag = 'scoped memory for tpu_custom_call.1']
    #allocation13 [shape = 'u8[1024]{0}', space=vmem, size = 0x400, scoped, tag = 'input window, operand 9, single buffered']
    #allocation14 [shape = 'u8[1024]{0}', space=vmem, size = 0x400, scoped, tag = 'input window, operand 11, single buffered']
    #allocation15 [shape = 's32[1]{0}', space=sflag, size = 0x4, scoped, tag = 'scoped memory for tpu_custom_call.1']
    #allocation16 [shape = 'u8[1024]{0}', space=vmem, size = 0x400, scoped, tag = 'input window, operand 13, single buffered']
    #allocation17 [shape = 'u8[8192]{0}', space=vmem, size = 0x2000, scoped, tag = 'output window, operand 0, single buffered']
    %23 = vsyncpa [#allocation3], 0
    %24 = vsyncpa [#allocation6], 0
    %25 = vsyncpa [#allocation9], 0
    %26 = vsyncpa [#allocation12], 0
    %27 = vsyncpa [#allocation15], 0
    %28 = vsyncpa [#allocation4], 0
    // Predicated region
    $region2: #{tpu_custom_call.1} parent=1 // pred_check
      _
    $region3: #{tpu_custom_call.1} parent=1 // pred_check_branch
      %30 = sbr.rel (0) target = $region5
    $region4: #{tpu_custom_call.1} parent=1 // pred_region
      %s32 = ssub.s32 256, 256
      %33 = vsyncadd [#allocation3], %s32
      %s34 = sshll.u32 [#allocation2], 4
      %s35 = int_to_ptr.vmem [resolvable:$true] %s34
      %40 = dma.hbm_to_vmem [thread:$0]  %s0, 256, %s35, [#allocation3], 128, 128, 8
    $region5: #{tpu_custom_call.1} parent=1 // pred_fallthru
      _
    // Predicated region
    $region6: #{tpu_custom_call.1} parent=1 // pred_check
      _
    $region7: #{tpu_custom_call.1} parent=1 // pred_check_branch
      %42 = sbr.rel (0) target = $region9
    $region8: #{tpu_custom_call.1} parent=1 // pred_region
      %s44 = ssub.s32 256, 256
      %45 = vsyncadd [#allocation6], %s44
      %s46 = sshll.u32 [#allocation5], 4
      %s47 = int_to_ptr.vmem [resolvable:$true] %s46
      %52 = dma.hbm_to_vmem [thread:$0]  %s1, 256, %s47, [#allocation6], 128, 128, 8
    $region9: #{tpu_custom_call.1} parent=1 // pred_fallthru
      _
    // Predicated region
    $region10: #{tpu_custom_call.1} parent=1 // pred_check
      _
    $region11: #{tpu_custom_call.1} parent=1 // pred_check_branch
      %54 = sbr.rel (0) target = $region13
    $region12: #{tpu_custom_call.1} parent=1 // pred_region
      _
    $region13: #{tpu_custom_call.1} parent=1 // pred_fallthru
      _
    // Predicated region
    $region14: #{tpu_custom_call.1} parent=1 // pred_check
      _
    $region15: #{tpu_custom_call.1} parent=1 // pred_check_branch
      %56 = sbr.rel (0) target = $region17
    $region16: #{tpu_custom_call.1} parent=1 // pred_region
      %s58 = ssub.s32 16, 16
      %59 = vsyncadd [#allocation6], %s58
      %s61 = sshll.u32 [#allocation7], 4
      %s62 = int_to_ptr.vmem [resolvable:$true] %s61
      %64 = dma.hbm_to_vmem [thread:$0]  %s3, 16, %s62, [#allocation6]
    $region17: #{tpu_custom_call.1} parent=1 // pred_fallthru
      _
    // Predicated region
    $region18: #{tpu_custom_call.1} parent=1 // pred_check
      _
    $region19: #{tpu_custom_call.1} parent=1 // pred_check_branch
      %66 = sbr.rel (0) target = $region21
    $region20: #{tpu_custom_call.1} parent=1 // pred_region
      _
    $region21: #{tpu_custom_call.1} parent=1 // pred_fallthru
      _
    // Predicated region
    $region22: #{tpu_custom_call.1} parent=1 // pred_check
      _
    $region23: #{tpu_custom_call.1} parent=1 // pred_check_branch
      %68 = sbr.rel (0) target = $region25
    $region24: #{tpu_custom_call.1} parent=1 // pred_region
      %s70 = ssub.s32 32, 32
      %71 = vsyncadd [#allocation9], %s70
      %s72 = sshll.u32 [#allocation8], 4
      %s73 = int_to_ptr.vmem [resolvable:$true] %s72
      %78 = dma.hbm_to_vmem [thread:$0]  %s5, 32, %s73, [#allocation9], 16, 16, 1
    $region25: #{tpu_custom_call.1} parent=1 // pred_fallthru
      _
    // Predicated region
    $region26: #{tpu_custom_call.1} parent=1 // pred_check
      _
    $region27: #{tpu_custom_call.1} parent=1 // pred_check_branch
      %80 = sbr.rel (0) target = $region29
    $region28: #{tpu_custom_call.1} parent=1 // pred_region
      _
    $region29: #{tpu_custom_call.1} parent=1 // pred_fallthru
      _
    // Predicated region
    $region30: #{tpu_custom_call.1} parent=1 // pred_check
      _
    $region31: #{tpu_custom_call.1} parent=1 // pred_check_branch
      %82 = sbr.rel (0) target = $region33
    $region32: #{tpu_custom_call.1} parent=1 // pred_region
      %s84 = ssub.s32 32, 32
      %85 = vsyncadd [#allocation9], %s84
      %s86 = sshll.u32 [#allocation10], 4
      %s87 = int_to_ptr.vmem [resolvable:$true] %s86
      %92 = dma.hbm_to_vmem [thread:$0]  %s7, 32, %s87, [#allocation9], 16, 16, 1
    $region33: #{tpu_custom_call.1} parent=1 // pred_fallthru
      _
    // Predicated region
    $region34: #{tpu_custom_call.1} parent=1 // pred_check
      _
    $region35: #{tpu_custom_call.1} parent=1 // pred_check_branch
      %94 = sbr.rel (0) target = $region37
    $region36: #{tpu_custom_call.1} parent=1 // pred_region
      %s96 = ssub.s32 32, 32
      %97 = vsyncadd [#allocation12], %s96
      %s98 = sshll.u32 [#allocation11], 4
      %s99 = int_to_ptr.vmem [resolvable:$true] %s98
      %104 = dma.hbm_to_vmem [thread:$0]  %s8, 32, %s99, [#allocation12], 16, 16, 1
    $region37: #{tpu_custom_call.1} parent=1 // pred_fallthru
      _
    // Predicated region
    $region38: #{tpu_custom_call.1} parent=1 // pred_check
      _
    $region39: #{tpu_custom_call.1} parent=1 // pred_check_branch
      %106 = sbr.rel (0) target = $region41
    $region40: #{tpu_custom_call.1} parent=1 // pred_region
      %s108 = ssub.s32 32, 32
      %109 = vsyncadd [#allocation12], %s108
      %s110 = sshll.u32 [#allocation13], 4
      %s111 = int_to_ptr.vmem [resolvable:$true] %s110
      %116 = dma.hbm_to_vmem [thread:$0]  %s9, 32, %s111, [#allocation12], 16, 16, 1
    $region41: #{tpu_custom_call.1} parent=1 // pred_fallthru
      _
    // Predicated region
    $region42: #{tpu_custom_call.1} parent=1 // pred_check
      _
    $region43: #{tpu_custom_call.1} parent=1 // pred_check_branch
      %118 = sbr.rel (0) target = $region45
    $region44: #{tpu_custom_call.1} parent=1 // pred_region
      _
    $region45: #{tpu_custom_call.1} parent=1 // pred_fallthru
      _
    // Predicated region
    $region46: #{tpu_custom_call.1} parent=1 // pred_check
      _
    $region47: #{tpu_custom_call.1} parent=1 // pred_check_branch
      %120 = sbr.rel (0) target = $region49
    $region48: #{tpu_custom_call.1} parent=1 // pred_region
      %s122 = ssub.s32 32, 32
      %123 = vsyncadd [#allocation15], %s122
      %s124 = sshll.u32 [#allocation14], 4
      %s125 = int_to_ptr.vmem [resolvable:$true] %s124
      %130 = dma.hbm_to_vmem [thread:$0]  %s11, 32, %s125, [#allocation15], 16, 16, 1
    $region49: #{tpu_custom_call.1} parent=1 // pred_fallthru
      _
    // Predicated region
    $region50: #{tpu_custom_call.1} parent=1 // pred_check
      _
    $region51: #{tpu_custom_call.1} parent=1 // pred_check_branch
      %132 = sbr.rel (0) target = $region53
    $region52: #{tpu_custom_call.1} parent=1 // pred_region
      _
    $region53: #{tpu_custom_call.1} parent=1 // pred_fallthru
      _
    // Predicated region
    $region54: #{tpu_custom_call.1} parent=1 // pred_check
      _
    $region55: #{tpu_custom_call.1} parent=1 // pred_check_branch
      %134 = sbr.rel (0) target = $region57
    $region56: #{tpu_custom_call.1} parent=1 // pred_region
      %s136 = ssub.s32 32, 32
      %137 = vsyncadd [#allocation15], %s136
      %s138 = sshll.u32 [#allocation16], 4
      %s139 = int_to_ptr.vmem [resolvable:$true] %s138
      %144 = dma.hbm_to_vmem [thread:$0]  %s13, 32, %s139, [#allocation15], 16, 16, 1
    $region57: #{tpu_custom_call.1} parent=1 // pred_fallthru
      _
    // Predicated region
    $region58: #{tpu_custom_call.1} parent=1 // pred_check
      _
    $region59: #{tpu_custom_call.1} parent=1 // pred_check_branch
      %146 = sbr.rel (0) target = $region61
    $region60: #{tpu_custom_call.1} parent=1 // pred_region
      _
    $region61: #{tpu_custom_call.1} parent=1 // pred_fallthru
      _
    // Predicated region
    $region62: #{tpu_custom_call.1} parent=1 // pred_check
      _
    $region63: #{tpu_custom_call.1} parent=1 // pred_check_branch
      %148 = sbr.rel (0) target = $region65
    $region64: #{tpu_custom_call.1} parent=1 // pred_region
      _
    $region65: #{tpu_custom_call.1} parent=1 // pred_fallthru
      _
    // Predicated region
    $region66: #{tpu_custom_call.1} parent=1 // pred_check
      _
    $region67: #{tpu_custom_call.1} parent=1 // pred_check_branch
      %150 = sbr.rel (0) target = $region69
    $region68: #{tpu_custom_call.1} parent=1 // pred_region
      _
    $region69: #{tpu_custom_call.1} parent=1 // pred_fallthru
      _
    // Predicated region
    $region70: #{tpu_custom_call.1} parent=1 // pred_check
      _
    $region71: #{tpu_custom_call.1} parent=1 // pred_check_branch
      %152 = sbr.rel (0) target = $region73
    $region72: #{tpu_custom_call.1} parent=1 // pred_region
      _
    $region73: #{tpu_custom_call.1} parent=1 // pred_fallthru
      _
    // Predicated region
    $region74: #{tpu_custom_call.1} parent=1 // pred_check
      _
    $region75: #{tpu_custom_call.1} parent=1 // pred_check_branch
      %154 = sbr.rel (0) target = $region77
    $region76: #{tpu_custom_call.1} parent=1 // pred_region
      %155 = dma.done [#allocation3], 256
    $region77: #{tpu_custom_call.1} parent=1 // pred_fallthru
      _
    // Predicated region
    $region78: #{tpu_custom_call.1} parent=1 // pred_check
      _
    $region79: #{tpu_custom_call.1} parent=1 // pred_check_branch
      %157 = sbr.rel (0) target = $region81
    $region80: #{tpu_custom_call.1} parent=1 // pred_region
      %158 = dma.done [#allocation6], 256
    $region81: #{tpu_custom_call.1} parent=1 // pred_fallthru
      _
    // Predicated region
    $region82: #{tpu_custom_call.1} parent=1 // pred_check
      _
    $region83: #{tpu_custom_call.1} parent=1 // pred_check_branch
      %160 = sbr.rel (0) target = $region85
    $region84: #{tpu_custom_call.1} parent=1 // pred_region
      %161 = dma.done [#allocation6], 16
    $region85: #{tpu_custom_call.1} parent=1 // pred_fallthru
      _
    // Predicated region
    $region86: #{tpu_custom_call.1} parent=1 // pred_check
      _
    $region87: #{tpu_custom_call.1} parent=1 // pred_check_branch
      %163 = sbr.rel (0) target = $region89
    $region88: #{tpu_custom_call.1} parent=1 // pred_region
      %164 = dma.done [#allocation9], 32
    $region89: #{tpu_custom_call.1} parent=1 // pred_fallthru
      _
    // Predicated region
    $region90: #{tpu_custom_call.1} parent=1 // pred_check
      _
    $region91: #{tpu_custom_call.1} parent=1 // pred_check_branch
      %166 = sbr.rel (0) target = $region93
    $region92: #{tpu_custom_call.1} parent=1 // pred_region
      %167 = dma.done [#allocation9], 32
    $region93: #{tpu_custom_call.1} parent=1 // pred_fallthru
      _
    // Predicated region
    $region94: #{tpu_custom_call.1} parent=1 // pred_check
      _
    $region95: #{tpu_custom_call.1} parent=1 // pred_check_branch
      %169 = sbr.rel (0) target = $region97
    $region96: #{tpu_custom_call.1} parent=1 // pred_region
      %170 = dma.done [#allocation12], 32
    $region97: #{tpu_custom_call.1} parent=1 // pred_fallthru
      _
    // Predicated region
    $region98: #{tpu_custom_call.1} parent=1 // pred_check
      _
    $region99: #{tpu_custom_call.1} parent=1 // pred_check_branch
      %172 = sbr.rel (0) target = $region101
    $region100: #{tpu_custom_call.1} parent=1 // pred_region
      %173 = dma.done [#allocation12], 32
    $region101: #{tpu_custom_call.1} parent=1 // pred_fallthru
      _
    // Predicated region
    $region102: #{tpu_custom_call.1} parent=1 // pred_check
      _
    $region103: #{tpu_custom_call.1} parent=1 // pred_check_branch
      %175 = sbr.rel (0) target = $region105
    $region104: #{tpu_custom_call.1} parent=1 // pred_region
      %176 = dma.done [#allocation15], 32
    $region105: #{tpu_custom_call.1} parent=1 // pred_fallthru
      _
    // Predicated region
    $region106: #{tpu_custom_call.1} parent=1 // pred_check
      _
    $region107: #{tpu_custom_call.1} parent=1 // pred_check_branch
      %178 = sbr.rel (0) target = $region109
    $region108: #{tpu_custom_call.1} parent=1 // pred_region
      %179 = dma.done [#allocation15], 32
    $region109: #{tpu_custom_call.1} parent=1 // pred_fallthru
      _
    %v181 = vld [vmem:[#allocation5] sm:$0xff]
    %v182 = vld [vmem:[#allocation5 + $0x8] sm:$0xff]
    %v183 = vsub.f32 1.0, %v181
    %v184 = vsub.f32 1.0, %v182
    %v185 = vmul.f32 %v183, -1e+09
    %v186 = vmul.f32 %v184, -1e+09
    %v187 = vld [vmem:[#allocation2] sm:$0xff]
    %v188 = vld [vmem:[#allocation2 + $0x8] sm:$0xff]
    %v189 = vld [vmem:[%s2] sm:$0x1]
    %v190 = vld [vmem:[#allocation7] sm:$0x1]
    %vm191 = vcmask 261120
    %v192 = vsel %vm191, %v187, 0.0
    %193 = vadd.xlane.f32.xlu0 %v192
    %v194 = vpop.xlane.xlu0 %193
    %v195 = vsel %vm191, %v188, 0.0
    %196 = vadd.xlane.f32.xlu0 %v195
    %v197 = vpop.xlane.xlu0 %196
    %v198 = vrcp.pop 32.0
    %v199 = vmul.f32 %v194, %v198
    %v200 = vmul.f32 %v197, %v198
    %v201 = vsub.f32 %v187, %v199
    %v202 = vsub.f32 %v188, %v200
    %v203 = vmul.f32 %v201, %v201
    %v204 = vmul.f32 %v202, %v202
    %v205 = vsel %vm191, %v203, 0.0
    %206 = vadd.xlane.f32.xlu0 %v205
    %v207 = vpop.xlane.xlu0 %206
    %v208 = vsel %vm191, %v204, 0.0
    %209 = vadd.xlane.f32.xlu0 %v208
    %v210 = vpop.xlane.xlu0 %209
    %v211 = vmul.f32 %v207, %v198
    %v212 = vmul.f32 %v210, %v198
    %v213 = vadd.f32 %v211, 1e-12
    %v214 = vadd.f32 %v212, 1e-12
    %v215 = vrsqrt.pop %v213
    %v216 = vrsqrt.pop %v214
    %v217 = vmul.f32 %v201, %v215
    %v218 = vmul.f32 %v202, %v216
    %v220 = vlaneseq
    %v221 = vshrl.u32 %v220, 7
    %v222 = vsub.s32 0, %v221
    %v223 = vrot.slane %v189, %v222
    %v225 = vmul.f32 %v217, %v223
    %v226 = vmul.f32 %v218, %v223
    %v228 = vlaneseq
    %v229 = vshrl.u32 %v228, 7
    %v230 = vsub.s32 0, %v229
    %v231 = vrot.slane %v190, %v230
    %v233 = vadd.f32 %v225, %v231
    %v234 = vadd.f32 %v226, %v231
    %v235 = vpack.c.bf16 %v234, %v233
    %v236 = vld [vmem:[%s4] sm:$0xf]
    %v237 = vld [vmem:[%s4 + $0x4] sm:$0xf]
    %v238 = vld [vmem:[%s4 + $0x8] sm:$0xf]
    %v239 = vld [vmem:[%s4 + $0xc] sm:$0xf]
    %v240 = vld [vmem:[#allocation8] sm:$0x1]
    %v242 = vlaneseq
    %v243 = vshrl.u32 %v242, 7
    %v244 = vsub.s32 0, %v243
    %v245 = vrot.slane %v240, %v244
    %v251 = vunpack.c.l.b16 %v236
    %v252 = vunpack.c.l.b16 %v237
    %v253 = vunpack.c.l.b16 %v238
    %v254 = vunpack.c.l.b16 %v239
    %v255 = vpack.c.b16 %v252, %v251
    %v256 = vpack.c.b16 %v254, %v253
    %v260 = vsel %vm191, %v235, 0
    %262 = vmatprep.subr.bf16.mxu0 0
    %263 = vmatpush1.bf16.msra.mxu0 %v255
    %264 = vmatprep.subr.bf16.mxu0 0
    %265 = vmatpush1.bf16.msra.mxu0 %v256
    %266 = vmatprep.subr.bf16.mxu0 0
    %267 = vmatpush1.bf16.msra.mxu0 0
    %268 = vmatprep.subr.bf16.mxu0 0
    %269 = vmatpush1.bf16.msra.mxu0 0
    %270 = vmatprep.subr.bf16.mxu0 0
    %271 = vmatpush1.bf16.msra.mxu0 0
    %272 = vmatprep.subr.bf16.mxu0 0
    %273 = vmatpush1.bf16.msra.mxu0 0
    %274 = vmatprep.subr.bf16.mxu0 0
    %275 = vmatpush1.bf16.msra.mxu0 0
    %276 = vmatprep.subr.bf16.mxu0 0
    %277 = vmatpush1.bf16.msra.mxu0 0
    %278 = vmatprep.subr.bf16.mxu0 0
    %279 = vmatpush1.bf16.msra.mxu0 0
    %280 = vmatprep.subr.bf16.mxu0 0
    %281 = vmatpush1.bf16.msra.mxu0 0
    %282 = vmatprep.subr.bf16.mxu0 0
    %283 = vmatpush1.bf16.msra.mxu0 0
    %284 = vmatprep.subr.bf16.mxu0 0
    %285 = vmatpush1.bf16.msra.mxu0 0
    %286 = vmatprep.subr.bf16.mxu0 0
    %287 = vmatpush1.bf16.msra.mxu0 0
    %288 = vmatprep.subr.bf16.mxu0 0
    %289 = vmatpush1.bf16.msra.mxu0 0
    %290 = vmatprep.subr.bf16.mxu0 0
    %291 = vmatpush1.bf16.msra.mxu0 0
    %292 = vmatprep.subr.bf16.mxu0 0
    %293 = vmatpush1.bf16.msra.mxu0 0
    %294 = vmatprep.mubr.bf16.mxu0 0
    %295 = vmatmul.mubr.bf16.gmra.mrb[0].mxu0 %v260
    %v296 = vpop.f32.mrb[0].mxu0
    %v297 = vadd.f32 %v245, %v296
    %v298 = vpop.f32.mrb[0].mxu0
    %v299 = vpop.f32.mrb[0].mxu0
    %v300 = vadd.f32 %v245, %v299
    %v301 = vpop.f32.mrb[0].mxu0
    %302 = vdwg.mxu0
    %v303 = vpack.c.bf16 %v300, %v297
    %305 = vrot.lane.b32.xlu0 %v303, 96
    %v306 = vpop.permute.xlu0 %305
    %vm307 = vcmask 64512
    %v309 = vsel %vm307, %v303, 0
    %v312 = vsel %vm307, %v306, 0
    %314 = vmatprep.subr.bf16.mxu0 0
    %315 = vmatpush1.bf16.xpose.msra.mxu0 %v312
    %316 = vmatprep.subr.bf16.mxu0 0
    %317 = vmatpush1.bf16.xpose.msra.mxu0 0
    %318 = vmatprep.subr.bf16.mxu0 0
    %319 = vmatpush1.bf16.xpose.msra.mxu0 0
    %320 = vmatprep.subr.bf16.mxu0 0
    %321 = vmatpush1.bf16.xpose.msra.mxu0 0
    %322 = vmatprep.subr.bf16.mxu0 0
    %323 = vmatpush1.bf16.xpose.msra.mxu0 0
    %324 = vmatprep.subr.bf16.mxu0 0
    %325 = vmatpush1.bf16.xpose.msra.mxu0 0
    %326 = vmatprep.subr.bf16.mxu0 0
    %327 = vmatpush1.bf16.xpose.msra.mxu0 0
    %328 = vmatprep.subr.bf16.mxu0 0
    %329 = vmatpush1.bf16.xpose.msra.mxu0 0
    %330 = vmatprep.subr.bf16.mxu0 0
    %331 = vmatpush1.bf16.xpose.msra.mxu0 0
    %332 = vmatprep.subr.bf16.mxu0 0
    %333 = vmatpush1.bf16.xpose.msra.mxu0 0
    %334 = vmatprep.subr.bf16.mxu0 0
    %335 = vmatpush1.bf16.xpose.msra.mxu0 0
    %336 = vmatprep.subr.bf16.mxu0 0
    %337 = vmatpush1.bf16.xpose.msra.mxu0 0
    %338 = vmatprep.subr.bf16.mxu0 0
    %339 = vmatpush1.bf16.xpose.msra.mxu0 0
    %340 = vmatprep.subr.bf16.mxu0 0
    %341 = vmatpush1.bf16.xpose.msra.mxu0 0
    %342 = vmatprep.subr.bf16.mxu0 0
    %343 = vmatpush1.bf16.xpose.msra.mxu0 0
    %344 = vmatprep.subr.bf16.mxu0 0
    %345 = vmatpush1.bf16.xpose.msra.mxu0 0
    %346 = vmatprep.mubr.bf16.mxu0 0
    %347 = vmatmul.mubr.bf16.gmra.mrb[0].mxu0 %v309
    %v348 = vpop.f32.mrb[0].mxu0
    %v349 = vadd.f32 %v185, %v348
    %v350 = vpop.f32.mrb[0].mxu0
    %v351 = vpop.f32.mrb[0].mxu0
    %v352 = vadd.f32 %v186, %v351
    %v353 = vpop.f32.mrb[0].mxu0
    %354 = vdwg.mxu0
    %vm355 = vcmask 130048
    %v356 = vsel %vm355, %v349, -inf
    %357 = vmax.xlane.f32.xlu0 %v356
    %v358 = vpop.xlane.xlu0 %357
    %v359 = vsel %vm355, %v352, -inf
    %360 = vmax.xlane.f32.xlu0 %v359
    %v361 = vpop.xlane.xlu0 %360
    %v362 = vsub.f32 %v349, %v358
    %v363 = vsub.f32 %v352, %v361
    %v364 = vmul.f32 %v362, 1.442695
    %v365 = vpow.pop %v364
    %v366 = vmul.f32 %v363, 1.442695
    %v367 = vpow.pop %v366
    %v368 = vsel %vm355, %v365, 0.0
    %369 = vadd.xlane.f32.xlu0 %v368
    %v370 = vpop.xlane.xlu0 %369
    %v371 = vsel %vm355, %v367, 0.0
    %372 = vadd.xlane.f32.xlu0 %v371
    %v373 = vpop.xlane.xlu0 %372
    %v374 = vrcp.pop %v370
    %v375 = vrcp.pop %v373
    %v376 = vmul.f32 %v365, %v374
    %v377 = vmul.f32 %v367, %v375
    %v378 = vpack.c.bf16 %v377, %v376
    %379 = vrot.lane.b32.xlu0 %v303, 64
    %v380 = vpop.permute.xlu0 %379
    %v383 = vsel %vm355, %v378, 0
    %385 = vmatprep.subr.bf16.mxu0 0
    %386 = vmatpush1.bf16.msra.mxu0 %v380
    %387 = vmatprep.subr.bf16.mxu0 0
    %388 = vmatpush1.bf16.msra.mxu0 0
    %389 = vmatprep.subr.bf16.mxu0 0
    %390 = vmatpush1.bf16.msra.mxu0 0
    %391 = vmatprep.subr.bf16.mxu0 0
    %392 = vmatpush1.bf16.msra.mxu0 0
    %393 = vmatprep.subr.bf16.mxu0 0
    %394 = vmatpush1.bf16.msra.mxu0 0
    %395 = vmatprep.subr.bf16.mxu0 0
    %396 = vmatpush1.bf16.msra.mxu0 0
    %397 = vmatprep.subr.bf16.mxu0 0
    %398 = vmatpush1.bf16.msra.mxu0 0
    %399 = vmatprep.subr.bf16.mxu0 0
    %400 = vmatpush1.bf16.msra.mxu0 0
    %401 = vmatprep.subr.bf16.mxu0 0
    %402 = vmatpush1.bf16.msra.mxu0 0
    %403 = vmatprep.subr.bf16.mxu0 0
    %404 = vmatpush1.bf16.msra.mxu0 0
    %405 = vmatprep.subr.bf16.mxu0 0
    %406 = vmatpush1.bf16.msra.mxu0 0
    %407 = vmatprep.subr.bf16.mxu0 0
    %408 = vmatpush1.bf16.msra.mxu0 0
    %409 = vmatprep.subr.bf16.mxu0 0
    %410 = vmatpush1.bf16.msra.mxu0 0
    %411 = vmatprep.subr.bf16.mxu0 0
    %412 = vmatpush1.bf16.msra.mxu0 0
    %413 = vmatprep.subr.bf16.mxu0 0
    %414 = vmatpush1.bf16.msra.mxu0 0
    %415 = vmatprep.subr.bf16.mxu0 0
    %416 = vmatpush1.bf16.msra.mxu0 0
    %417 = vmatprep.mubr.bf16.mxu0 0
    %418 = vmatmul.mubr.bf16.gmra.mrb[0].mxu0 %v383
    %v419 = vpop.f32.mrb[0].mxu0
    %v420 = vadd.f32 0.0, %v419
    %v421 = vpop.f32.mrb[0].mxu0
    %v422 = vpop.f32.mrb[0].mxu0
    %v423 = vadd.f32 0.0, %v422
    %v424 = vpop.f32.mrb[0].mxu0
    %425 = vdwg.mxu0
    %426 = vrot.lane.b32.xlu0 %v303, 120
    %v427 = vpop.permute.xlu0 %426
    %428 = vrot.lane.b32.xlu0 %v303, 88
    %v429 = vpop.permute.xlu0 %428
    %v431 = vsel %vm307, %v427, 0
    %v434 = vsel %vm307, %v429, 0
    %436 = vmatprep.subr.bf16.mxu0 0
    %437 = vmatpush1.bf16.xpose.msra.mxu0 %v434
    %438 = vmatprep.subr.bf16.mxu0 0
    %439 = vmatpush1.bf16.xpose.msra.mxu0 0
    %440 = vmatprep.subr.bf16.mxu0 0
    %441 = vmatpush1.bf16.xpose.msra.mxu0 0
    %442 = vmatprep.subr.bf16.mxu0 0
    %443 = vmatpush1.bf16.xpose.msra.mxu0 0
    %444 = vmatprep.subr.bf16.mxu0 0
    %445 = vmatpush1.bf16.xpose.msra.mxu0 0
    %446 = vmatprep.subr.bf16.mxu0 0
    %447 = vmatpush1.bf16.xpose.msra.mxu0 0
    %448 = vmatprep.subr.bf16.mxu0 0
    %449 = vmatpush1.bf16.xpose.msra.mxu0 0
    %450 = vmatprep.subr.bf16.mxu0 0
    %451 = vmatpush1.bf16.xpose.msra.mxu0 0
    %452 = vmatprep.subr.bf16.mxu0 0
    %453 = vmatpush1.bf16.xpose.msra.mxu0 0
    %454 = vmatprep.subr.bf16.mxu0 0
    %455 = vmatpush1.bf16.xpose.msra.mxu0 0
    %456 = vmatprep.subr.bf16.mxu0 0
    %457 = vmatpush1.bf16.xpose.msra.mxu0 0
    %458 = vmatprep.subr.bf16.mxu0 0
    %459 = vmatpush1.bf16.xpose.msra.mxu0 0
    %460 = vmatprep.subr.bf16.mxu0 0
    %461 = vmatpush1.bf16.xpose.msra.mxu0 0
    %462 = vmatprep.subr.bf16.mxu0 0
    %463 = vmatpush1.bf16.xpose.msra.mxu0 0
    %464 = vmatprep.subr.bf16.mxu0 0
    %465 = vmatpush1.bf16.xpose.msra.mxu0 0
    %466 = vmatprep.subr.bf16.mxu0 0
    %467 = vmatpush1.bf16.xpose.msra.mxu0 0
    %468 = vmatprep.mubr.bf16.mxu0 0
    %469 = vmatmul.mubr.bf16.gmra.mrb[0].mxu0 %v431
    %v470 = vpop.f32.mrb[0].mxu0
    %v471 = vadd.f32 %v185, %v470
    %v472 = vpop.f32.mrb[0].mxu0
    %v473 = vpop.f32.mrb[0].mxu0
    %v474 = vadd.f32 %v186, %v473
    %v475 = vpop.f32.mrb[0].mxu0
    %476 = vdwg.mxu0
    %v477 = vsel %vm355, %v471, -inf
    %478 = vmax.xlane.f32.xlu0 %v477
    %v479 = vpop.xlane.xlu0 %478
    %v480 = vsel %vm355, %v474, -inf
    %481 = vmax.xlane.f32.xlu0 %v480
    %v482 = vpop.xlane.xlu0 %481
    %v483 = vsub.f32 %v471, %v479
    %v484 = vsub.f32 %v474, %v482
    %v485 = vmul.f32 %v483, 1.442695
    %v486 = vpow.pop %v485
    %v487 = vmul.f32 %v484, 1.442695
    %v488 = vpow.pop %v487
    %v489 = vsel %vm355, %v486, 0.0
    %490 = vadd.xlane.f32.xlu0 %v489
    %v491 = vpop.xlane.xlu0 %490
    %v492 = vsel %vm355, %v488, 0.0
    %493 = vadd.xlane.f32.xlu0 %v492
    %v494 = vpop.xlane.xlu0 %493
    %v495 = vrcp.pop %v491
    %v496 = vrcp.pop %v494
    %v497 = vmul.f32 %v486, %v495
    %v498 = vmul.f32 %v488, %v496
    %v499 = vpack.c.bf16 %v498, %v497
    %500 = vrot.lane.b32.xlu0 %v303, 56
    %v501 = vpop.permute.xlu0 %500
    %v504 = vsel %vm355, %v499, 0
    %506 = vmatprep.subr.bf16.mxu0 0
    %507 = vmatpush1.bf16.msra.mxu0 %v501
    %508 = vmatprep.subr.bf16.mxu0 0
    %509 = vmatpush1.bf16.msra.mxu0 0
    %510 = vmatprep.subr.bf16.mxu0 0
    %511 = vmatpush1.bf16.msra.mxu0 0
    %512 = vmatprep.subr.bf16.mxu0 0
    %513 = vmatpush1.bf16.msra.mxu0 0
    %514 = vmatprep.subr.bf16.mxu0 0
    %515 = vmatpush1.bf16.msra.mxu0 0
    %516 = vmatprep.subr.bf16.mxu0 0
    %517 = vmatpush1.bf16.msra.mxu0 0
    %518 = vmatprep.subr.bf16.mxu0 0
    %519 = vmatpush1.bf16.msra.mxu0 0
    %520 = vmatprep.subr.bf16.mxu0 0
    %521 = vmatpush1.bf16.msra.mxu0 0
    %522 = vmatprep.subr.bf16.mxu0 0
    %523 = vmatpush1.bf16.msra.mxu0 0
    %524 = vmatprep.subr.bf16.mxu0 0
    %525 = vmatpush1.bf16.msra.mxu0 0
    %526 = vmatprep.subr.bf16.mxu0 0
    %527 = vmatpush1.bf16.msra.mxu0 0
    %528 = vmatprep.subr.bf16.mxu0 0
    %529 = vmatpush1.bf16.msra.mxu0 0
    %530 = vmatprep.subr.bf16.mxu0 0
    %531 = vmatpush1.bf16.msra.mxu0 0
    %532 = vmatprep.subr.bf16.mxu0 0
    %533 = vmatpush1.bf16.msra.mxu0 0
    %534 = vmatprep.subr.bf16.mxu0 0
    %535 = vmatpush1.bf16.msra.mxu0 0
    %536 = vmatprep.subr.bf16.mxu0 0
    %537 = vmatpush1.bf16.msra.mxu0 0
    %538 = vmatprep.mubr.bf16.mxu0 0
    %539 = vmatmul.mubr.bf16.gmra.mrb[0].mxu0 %v504
    %v540 = vpop.f32.mrb[0].mxu0
    %v541 = vadd.f32 0.0, %v540
    %v542 = vpop.f32.mrb[0].mxu0
    %v543 = vpop.f32.mrb[0].mxu0
    %v544 = vadd.f32 0.0, %v543
    %v545 = vpop.f32.mrb[0].mxu0
    %546 = vdwg.mxu0
    %547 = vrot.lane.b32.xlu0 %v303, 112
    %v548 = vpop.permute.xlu0 %547
    %549 = vrot.lane.b32.xlu0 %v303, 80
    %v550 = vpop.permute.xlu0 %549
    %v552 = vsel %vm307, %v548, 0
    %v555 = vsel %vm307, %v550, 0
    %557 = vmatprep.subr.bf16.mxu0 0
    %558 = vmatpush1.bf16.xpose.msra.mxu0 %v555
    %559 = vmatprep.subr.bf16.mxu0 0
    %560 = vmatpush1.bf16.xpose.msra.mxu0 0
    %561 = vmatprep.subr.bf16.mxu0 0
    %562 = vmatpush1.bf16.xpose.msra.mxu0 0
    %563 = vmatprep.subr.bf16.mxu0 0
    %564 = vmatpush1.bf16.xpose.msra.mxu0 0
    %565 = vmatprep.subr.bf16.mxu0 0
    %566 = vmatpush1.bf16.xpose.msra.mxu0 0
    %567 = vmatprep.subr.bf16.mxu0 0
    %568 = vmatpush1.bf16.xpose.msra.mxu0 0
    %569 = vmatprep.subr.bf16.mxu0 0
    %570 = vmatpush1.bf16.xpose.msra.mxu0 0
    %571 = vmatprep.subr.bf16.mxu0 0
    %572 = vmatpush1.bf16.xpose.msra.mxu0 0
    %573 = vmatprep.subr.bf16.mxu0 0
    %574 = vmatpush1.bf16.xpose.msra.mxu0 0
    %575 = vmatprep.subr.bf16.mxu0 0
    %576 = vmatpush1.bf16.xpose.msra.mxu0 0
    %577 = vmatprep.subr.bf16.mxu0 0
    %578 = vmatpush1.bf16.xpose.msra.mxu0 0
    %579 = vmatprep.subr.bf16.mxu0 0
    %580 = vmatpush1.bf16.xpose.msra.mxu0 0
    %581 = vmatprep.subr.bf16.mxu0 0
    %582 = vmatpush1.bf16.xpose.msra.mxu0 0
    %583 = vmatprep.subr.bf16.mxu0 0
    %584 = vmatpush1.bf16.xpose.msra.mxu0 0
    %585 = vmatprep.subr.bf16.mxu0 0
    %586 = vmatpush1.bf16.xpose.msra.mxu0 0
    %587 = vmatprep.subr.bf16.mxu0 0
    %588 = vmatpush1.bf16.xpose.msra.mxu0 0
    %589 = vmatprep.mubr.bf16.mxu0 0
    %590 = vmatmul.mubr.bf16.gmra.mrb[0].mxu0 %v552
    %v591 = vpop.f32.mrb[0].mxu0
    %v592 = vadd.f32 %v185, %v591
    %v593 = vpop.f32.mrb[0].mxu0
    %v594 = vpop.f32.mrb[0].mxu0
    %v595 = vadd.f32 %v186, %v594
    %v596 = vpop.f32.mrb[0].mxu0
    %597 = vdwg.mxu0
    %v598 = vsel %vm355, %v592, -inf
    %599 = vmax.xlane.f32.xlu0 %v598
    %v600 = vpop.xlane.xlu0 %599
    %v601 = vsel %vm355, %v595, -inf
    %602 = vmax.xlane.f32.xlu0 %v601
    %v603 = vpop.xlane.xlu0 %602
    %v604 = vsub.f32 %v592, %v600
    %v605 = vsub.f32 %v595, %v603
    %v606 = vmul.f32 %v604, 1.442695
    %v607 = vpow.pop %v606
    %v608 = vmul.f32 %v605, 1.442695
    %v609 = vpow.pop %v608
    %v610 = vsel %vm355, %v607, 0.0
    %611 = vadd.xlane.f32.xlu0 %v610
    %v612 = vpop.xlane.xlu0 %611
    %v613 = vsel %vm355, %v609, 0.0
    %614 = vadd.xlane.f32.xlu0 %v613
    %v615 = vpop.xlane.xlu0 %614
    %v616 = vrcp.pop %v612
    %v617 = vrcp.pop %v615
    %v618 = vmul.f32 %v607, %v616
    %v619 = vmul.f32 %v609, %v617
    %v620 = vpack.c.bf16 %v619, %v618
    %621 = vrot.lane.b32.xlu0 %v303, 48
    %v622 = vpop.permute.xlu0 %621
    %v625 = vsel %vm355, %v620, 0
    %627 = vmatprep.subr.bf16.mxu0 0
    %628 = vmatpush1.bf16.msra.mxu0 %v622
    %629 = vmatprep.subr.bf16.mxu0 0
    %630 = vmatpush1.bf16.msra.mxu0 0
    %631 = vmatprep.subr.bf16.mxu0 0
    %632 = vmatpush1.bf16.msra.mxu0 0
    %633 = vmatprep.subr.bf16.mxu0 0
    %634 = vmatpush1.bf16.msra.mxu0 0
    %635 = vmatprep.subr.bf16.mxu0 0
    %636 = vmatpush1.bf16.msra.mxu0 0
    %637 = vmatprep.subr.bf16.mxu0 0
    %638 = vmatpush1.bf16.msra.mxu0 0
    %639 = vmatprep.subr.bf16.mxu0 0
    %640 = vmatpush1.bf16.msra.mxu0 0
    %641 = vmatprep.subr.bf16.mxu0 0
    %642 = vmatpush1.bf16.msra.mxu0 0
    %643 = vmatprep.subr.bf16.mxu0 0
    %644 = vmatpush1.bf16.msra.mxu0 0
    %645 = vmatprep.subr.bf16.mxu0 0
    %646 = vmatpush1.bf16.msra.mxu0 0
    %647 = vmatprep.subr.bf16.mxu0 0
    %648 = vmatpush1.bf16.msra.mxu0 0
    %649 = vmatprep.subr.bf16.mxu0 0
    %650 = vmatpush1.bf16.msra.mxu0 0
    %651 = vmatprep.subr.bf16.mxu0 0
    %652 = vmatpush1.bf16.msra.mxu0 0
    %653 = vmatprep.subr.bf16.mxu0 0
    %654 = vmatpush1.bf16.msra.mxu0 0
    %655 = vmatprep.subr.bf16.mxu0 0
    %656 = vmatpush1.bf16.msra.mxu0 0
    %657 = vmatprep.subr.bf16.mxu0 0
    %658 = vmatpush1.bf16.msra.mxu0 0
    %659 = vmatprep.mubr.bf16.mxu0 0
    %660 = vmatmul.mubr.bf16.gmra.mrb[0].mxu0 %v625
    %v661 = vpop.f32.mrb[0].mxu0
    %v662 = vadd.f32 0.0, %v661
    %v663 = vpop.f32.mrb[0].mxu0
    %v664 = vpop.f32.mrb[0].mxu0
    %v665 = vadd.f32 0.0, %v664
    %v666 = vpop.f32.mrb[0].mxu0
    %667 = vdwg.mxu0
    %668 = vrot.lane.b32.xlu0 %v303, 104
    %v669 = vpop.permute.xlu0 %668
    %670 = vrot.lane.b32.xlu0 %v303, 72
    %v671 = vpop.permute.xlu0 %670
    %v673 = vsel %vm307, %v669, 0
    %v676 = vsel %vm307, %v671, 0
    %678 = vmatprep.subr.bf16.mxu0 0
    %679 = vmatpush1.bf16.xpose.msra.mxu0 %v676
    %680 = vmatprep.subr.bf16.mxu0 0
    %681 = vmatpush1.bf16.xpose.msra.mxu0 0
    %682 = vmatprep.subr.bf16.mxu0 0
    %683 = vmatpush1.bf16.xpose.msra.mxu0 0
    %684 = vmatprep.subr.bf16.mxu0 0
    %685 = vmatpush1.bf16.xpose.msra.mxu0 0
    %686 = vmatprep.subr.bf16.mxu0 0
    %687 = vmatpush1.bf16.xpose.msra.mxu0 0
    %688 = vmatprep.subr.bf16.mxu0 0
    %689 = vmatpush1.bf16.xpose.msra.mxu0 0
    %690 = vmatprep.subr.bf16.mxu0 0
    %691 = vmatpush1.bf16.xpose.msra.mxu0 0
    %692 = vmatprep.subr.bf16.mxu0 0
    %693 = vmatpush1.bf16.xpose.msra.mxu0 0
    %694 = vmatprep.subr.bf16.mxu0 0
    %695 = vmatpush1.bf16.xpose.msra.mxu0 0
    %696 = vmatprep.subr.bf16.mxu0 0
    %697 = vmatpush1.bf16.xpose.msra.mxu0 0
    %698 = vmatprep.subr.bf16.mxu0 0
    %699 = vmatpush1.bf16.xpose.msra.mxu0 0
    %700 = vmatprep.subr.bf16.mxu0 0
    %701 = vmatpush1.bf16.xpose.msra.mxu0 0
    %702 = vmatprep.subr.bf16.mxu0 0
    %703 = vmatpush1.bf16.xpose.msra.mxu0 0
    %704 = vmatprep.subr.bf16.mxu0 0
    %705 = vmatpush1.bf16.xpose.msra.mxu0 0
    %706 = vmatprep.subr.bf16.mxu0 0
    %707 = vmatpush1.bf16.xpose.msra.mxu0 0
    %708 = vmatprep.subr.bf16.mxu0 0
    %709 = vmatpush1.bf16.xpose.msra.mxu0 0
    %710 = vmatprep.mubr.bf16.mxu0 0
    %711 = vmatmul.mubr.bf16.gmra.mrb[0].mxu0 %v673
    %v712 = vpop.f32.mrb[0].mxu0
    %v713 = vadd.f32 %v185, %v712
    %v714 = vpop.f32.mrb[0].mxu0
    %v715 = vpop.f32.mrb[0].mxu0
    %v716 = vadd.f32 %v186, %v715
    %v717 = vpop.f32.mrb[0].mxu0
    %718 = vdwg.mxu0
    %v719 = vsel %vm355, %v713, -inf
    %720 = vmax.xlane.f32.xlu0 %v719
    %v721 = vpop.xlane.xlu0 %720
    %v722 = vsel %vm355, %v716, -inf
    %723 = vmax.xlane.f32.xlu0 %v722
    %v724 = vpop.xlane.xlu0 %723
    %v725 = vsub.f32 %v713, %v721
    %v726 = vsub.f32 %v716, %v724
    %v727 = vmul.f32 %v725, 1.442695
    %v728 = vpow.pop %v727
    %v729 = vmul.f32 %v726, 1.442695
    %v730 = vpow.pop %v729
    %v731 = vsel %vm355, %v728, 0.0
    %732 = vadd.xlane.f32.xlu0 %v731
    %v733 = vpop.xlane.xlu0 %732
    %v734 = vsel %vm355, %v730, 0.0
    %735 = vadd.xlane.f32.xlu0 %v734
    %v736 = vpop.xlane.xlu0 %735
    %v737 = vrcp.pop %v733
    %v738 = vrcp.pop %v736
    %v739 = vmul.f32 %v728, %v737
    %v740 = vmul.f32 %v730, %v738
    %v741 = vpack.c.bf16 %v740, %v739
    %742 = vrot.lane.b32.xlu0 %v303, 40
    %v743 = vpop.permute.xlu0 %742
    %v746 = vsel %vm355, %v741, 0
    %748 = vmatprep.subr.bf16.mxu0 0
    %749 = vmatpush1.bf16.msra.mxu0 %v743
    %750 = vmatprep.subr.bf16.mxu0 0
    %751 = vmatpush1.bf16.msra.mxu0 0
    %752 = vmatprep.subr.bf16.mxu0 0
    %753 = vmatpush1.bf16.msra.mxu0 0
    %754 = vmatprep.subr.bf16.mxu0 0
    %755 = vmatpush1.bf16.msra.mxu0 0
    %756 = vmatprep.subr.bf16.mxu0 0
    %757 = vmatpush1.bf16.msra.mxu0 0
    %758 = vmatprep.subr.bf16.mxu0 0
    %759 = vmatpush1.bf16.msra.mxu0 0
    %760 = vmatprep.subr.bf16.mxu0 0
    %761 = vmatpush1.bf16.msra.mxu0 0
    %762 = vmatprep.subr.bf16.mxu0 0
    %763 = vmatpush1.bf16.msra.mxu0 0
    %764 = vmatprep.subr.bf16.mxu0 0
    %765 = vmatpush1.bf16.msra.mxu0 0
    %766 = vmatprep.subr.bf16.mxu0 0
    %767 = vmatpush1.bf16.msra.mxu0 0
    %768 = vmatprep.subr.bf16.mxu0 0
    %769 = vmatpush1.bf16.msra.mxu0 0
    %770 = vmatprep.subr.bf16.mxu0 0
    %771 = vmatpush1.bf16.msra.mxu0 0
    %772 = vmatprep.subr.bf16.mxu0 0
    %773 = vmatpush1.bf16.msra.mxu0 0
    %774 = vmatprep.subr.bf16.mxu0 0
    %775 = vmatpush1.bf16.msra.mxu0 0
    %776 = vmatprep.subr.bf16.mxu0 0
    %777 = vmatpush1.bf16.msra.mxu0 0
    %778 = vmatprep.subr.bf16.mxu0 0
    %779 = vmatpush1.bf16.msra.mxu0 0
    %780 = vmatprep.mubr.bf16.mxu0 0
    %781 = vmatmul.mubr.bf16.gmra.mrb[0].mxu0 %v746
    %v782 = vpop.f32.mrb[0].mxu0
    %v783 = vadd.f32 0.0, %v782
    %v784 = vpop.f32.mrb[0].mxu0
    %v785 = vpop.f32.mrb[0].mxu0
    %v786 = vadd.f32 0.0, %v785
    %v787 = vpop.f32.mrb[0].mxu0
    %788 = vdwg.mxu0
    %791 = vrot.lane.b32.xlu0 %v541, 8
    %v792 = vpop.permute.xlu0 %791
    %793 = vrot.lane.b32.xlu0 %v544, 8
    %v794 = vpop.permute.xlu0 %793
    %799 = vrot.lane.b32.xlu0 %v662, 16
    %v800 = vpop.permute.xlu0 %799
    %801 = vrot.lane.b32.xlu0 %v665, 16
    %v802 = vpop.permute.xlu0 %801
    %807 = vrot.lane.b32.xlu0 %v783, 24
    %v808 = vpop.permute.xlu0 %807
    %809 = vrot.lane.b32.xlu0 %v786, 24
    %v810 = vpop.permute.xlu0 %809
    %v813 = vsel %vm307, %v420, %v792
    %v814 = vsel %vm307, %v423, %v794
    %v815 = vsel %vm355, %v813, %v800
    %v816 = vsel %vm355, %v814, %v802
    %vm817 = vcmask 195584
    %v818 = vsel %vm817, %v815, %v808
    %v819 = vsel %vm817, %v816, %v810
    %v820 = vpack.c.bf16 %v819, %v818
    %v821 = vld [vmem:[%s6] sm:$0xf]
    %v822 = vld [vmem:[%s6 + $0x4] sm:$0xf]
    %v823 = vld [vmem:[%s6 + $0x8] sm:$0xf]
    %v824 = vld [vmem:[%s6 + $0xc] sm:$0xf]
    %v825 = vld [vmem:[#allocation10] sm:$0x1]
    %v827 = vlaneseq
    %v828 = vshrl.u32 %v827, 7
    %v829 = vsub.s32 0, %v828
    %v830 = vrot.slane %v825, %v829
    %v836 = vunpack.c.l.b16 %v821
    %v837 = vunpack.c.l.b16 %v822
    %v838 = vunpack.c.l.b16 %v823
    %v839 = vunpack.c.l.b16 %v824
    %v840 = vpack.c.b16 %v837, %v836
    %v841 = vpack.c.b16 %v839, %v838
    %v845 = vsel %vm191, %v820, 0
    %847 = vmatprep.subr.bf16.mxu0 0
    %848 = vmatpush1.bf16.msra.mxu0 %v840
    %849 = vmatprep.subr.bf16.mxu0 0
    %850 = vmatpush1.bf16.msra.mxu0 %v841
    %851 = vmatprep.subr.bf16.mxu0 0
    %852 = vmatpush1.bf16.msra.mxu0 0
    %853 = vmatprep.subr.bf16.mxu0 0
    %854 = vmatpush1.bf16.msra.mxu0 0
    %855 = vmatprep.subr.bf16.mxu0 0
    %856 = vmatpush1.bf16.msra.mxu0 0
    %857 = vmatprep.subr.bf16.mxu0 0
    %858 = vmatpush1.bf16.msra.mxu0 0
    %859 = vmatprep.subr.bf16.mxu0 0
    %860 = vmatpush1.bf16.msra.mxu0 0
    %861 = vmatprep.subr.bf16.mxu0 0
    %862 = vmatpush1.bf16.msra.mxu0 0
    %863 = vmatprep.subr.bf16.mxu0 0
    %864 = vmatpush1.bf16.msra.mxu0 0
    %865 = vmatprep.subr.bf16.mxu0 0
    %866 = vmatpush1.bf16.msra.mxu0 0
    %867 = vmatprep.subr.bf16.mxu0 0
    %868 = vmatpush1.bf16.msra.mxu0 0
    %869 = vmatprep.subr.bf16.mxu0 0
    %870 = vmatpush1.bf16.msra.mxu0 0
    %871 = vmatprep.subr.bf16.mxu0 0
    %872 = vmatpush1.bf16.msra.mxu0 0
    %873 = vmatprep.subr.bf16.mxu0 0
    %874 = vmatpush1.bf16.msra.mxu0 0
    %875 = vmatprep.subr.bf16.mxu0 0
    %876 = vmatpush1.bf16.msra.mxu0 0
    %877 = vmatprep.subr.bf16.mxu0 0
    %878 = vmatpush1.bf16.msra.mxu0 0
    %879 = vmatprep.mubr.bf16.mxu0 0
    %880 = vmatmul.mubr.bf16.gmra.mrb[0].mxu0 %v845
    %v881 = vpop.f32.mrb[0].mxu0
    %v882 = vadd.f32 %v830, %v881
    %v883 = vpop.f32.mrb[0].mxu0
    %v884 = vpop.f32.mrb[0].mxu0
    %v885 = vadd.f32 %v830, %v884
    %v886 = vpop.f32.mrb[0].mxu0
    %887 = vdwg.mxu0
    %v888 = vadd.f32 %v233, %v882
    %v889 = vadd.f32 %v234, %v885
    %v890 = vld [vmem:[#allocation11] sm:$0x1]
    %v891 = vld [vmem:[#allocation13] sm:$0x1]
    %v892 = vsel %vm191, %v888, 0.0
    %893 = vadd.xlane.f32.xlu0 %v892
    %v894 = vpop.xlane.xlu0 %893
    %v895 = vsel %vm191, %v889, 0.0
    %896 = vadd.xlane.f32.xlu0 %v895
    %v897 = vpop.xlane.xlu0 %896
    %v898 = vmul.f32 %v894, %v198
    %v899 = vmul.f32 %v897, %v198
    %v900 = vsub.f32 %v888, %v898
    %v901 = vsub.f32 %v889, %v899
    %v902 = vmul.f32 %v900, %v900
    %v903 = vmul.f32 %v901, %v901
    %v904 = vsel %vm191, %v902, 0.0
    %905 = vadd.xlane.f32.xlu0 %v904
    %v906 = vpop.xlane.xlu0 %905
    %v907 = vsel %vm191, %v903, 0.0
    %908 = vadd.xlane.f32.xlu0 %v907
    %v909 = vpop.xlane.xlu0 %908
    %v910 = vmul.f32 %v906, %v198
    %v911 = vmul.f32 %v909, %v198
    %v912 = vadd.f32 %v910, 1e-12
    %v913 = vadd.f32 %v911, 1e-12
    %v914 = vrsqrt.pop %v912
    %v915 = vrsqrt.pop %v913
    %v916 = vmul.f32 %v900, %v914
    %v917 = vmul.f32 %v901, %v915
    %v919 = vlaneseq
    %v920 = vshrl.u32 %v919, 7
    %v921 = vsub.s32 0, %v920
    %v922 = vrot.slane %v890, %v921
    %v924 = vmul.f32 %v916, %v922
    %v925 = vmul.f32 %v917, %v922
    %v927 = vlaneseq
    %v928 = vshrl.u32 %v927, 7
    %v929 = vsub.s32 0, %v928
    %v930 = vrot.slane %v891, %v929
    %v932 = vadd.f32 %v924, %v930
    %v933 = vadd.f32 %v925, %v930
    %v934 = vld [vmem:[%s10] sm:$0xf]
    %v935 = vld [vmem:[%s10 + $0x4] sm:$0xf]
    %v936 = vld [vmem:[%s10 + $0x8] sm:$0xf]
    %v937 = vld [vmem:[%s10 + $0xc] sm:$0xf]
    %v938 = vpack.c.bf16 %v933, %v932
    %v939 = vld [vmem:[#allocation14] sm:$0x1]
    %v941 = vlaneseq
    %v942 = vshrl.u32 %v941, 7
    %v943 = vsub.s32 0, %v942
    %v944 = vrot.slane %v939, %v943
    %v950 = vunpack.c.l.b16 %v934
    %v951 = vunpack.c.l.b16 %v935
    %v952 = vunpack.c.l.b16 %v936
    %v953 = vunpack.c.l.b16 %v937
    %v954 = vpack.c.b16 %v951, %v950
    %v955 = vpack.c.b16 %v953, %v952
    %v959 = vsel %vm191, %v938, 0
    %961 = vmatprep.subr.bf16.mxu0 0
    %962 = vmatpush1.bf16.msra.mxu0 %v954
    %963 = vmatprep.subr.bf16.mxu0 0
    %964 = vmatpush1.bf16.msra.mxu0 %v955
    %965 = vmatprep.subr.bf16.mxu0 0
    %966 = vmatpush1.bf16.msra.mxu0 0
    %967 = vmatprep.subr.bf16.mxu0 0
    %968 = vmatpush1.bf16.msra.mxu0 0
    %969 = vmatprep.subr.bf16.mxu0 0
    %970 = vmatpush1.bf16.msra.mxu0 0
    %971 = vmatprep.subr.bf16.mxu0 0
    %972 = vmatpush1.bf16.msra.mxu0 0
    %973 = vmatprep.subr.bf16.mxu0 0
    %974 = vmatpush1.bf16.msra.mxu0 0
    %975 = vmatprep.subr.bf16.mxu0 0
    %976 = vmatpush1.bf16.msra.mxu0 0
    %977 = vmatprep.subr.bf16.mxu0 0
    %978 = vmatpush1.bf16.msra.mxu0 0
    %979 = vmatprep.subr.bf16.mxu0 0
    %980 = vmatpush1.bf16.msra.mxu0 0
    %981 = vmatprep.subr.bf16.mxu0 0
    %982 = vmatpush1.bf16.msra.mxu0 0
    %983 = vmatprep.subr.bf16.mxu0 0
    %984 = vmatpush1.bf16.msra.mxu0 0
    %985 = vmatprep.subr.bf16.mxu0 0
    %986 = vmatpush1.bf16.msra.mxu0 0
    %987 = vmatprep.subr.bf16.mxu0 0
    %988 = vmatpush1.bf16.msra.mxu0 0
    %989 = vmatprep.subr.bf16.mxu0 0
    %990 = vmatpush1.bf16.msra.mxu0 0
    %991 = vmatprep.subr.bf16.mxu0 0
    %992 = vmatpush1.bf16.msra.mxu0 0
    %993 = vmatprep.mubr.bf16.mxu0 0
    %994 = vmatmul.mubr.bf16.gmra.mrb[0].mxu0 %v959
    %v995 = vpop.f32.mrb[0].mxu0
    %v996 = vadd.f32 %v944, %v995
    %v997 = vpop.f32.mrb[0].mxu0
    %v998 = vpop.f32.mrb[0].mxu0
    %v999 = vadd.f32 %v944, %v998
    %v1000 = vpop.f32.mrb[0].mxu0
    %1001 = vdwg.mxu0
    %v1002 = vmul.f32 %v996, %v996
    %v1003 = vmul.f32 %v999, %v999
    %v1004 = vmul.f32 %v996, %v1002
    %v1005 = vmul.f32 %v999, %v1003
    %v1006 = vmul.f32 %v1004, 0.044715
    %v1007 = vmul.f32 %v1005, 0.044715
    %v1008 = vadd.f32 %v996, %v1006
    %v1009 = vadd.f32 %v999, %v1007
    %v1010 = vmul.f32 %v1008, 0.7978846
    %v1011 = vmul.f32 %v1009, 0.7978846
    %v1012 = vtanh.pop %v1010
    %v1013 = vtanh.pop %v1011
    %v1014 = vadd.f32 %v1012, 1.0
    %v1015 = vadd.f32 %v1013, 1.0
    %v1016 = vmul.f32 %v1014, 0.5
    %v1017 = vmul.f32 %v1015, 0.5
    %v1018 = vmul.f32 %v996, %v1016
    %v1019 = vmul.f32 %v999, %v1017
    %v1020 = vld [vmem:[%s12] sm:$0xf]
    %v1021 = vld [vmem:[%s12 + $0x4] sm:$0xf]
    %v1022 = vld [vmem:[%s12 + $0x8] sm:$0xf]
    %v1023 = vld [vmem:[%s12 + $0xc] sm:$0xf]
    %v1024 = vld [vmem:[%s12 + $0x10] sm:$0xf]
    %v1025 = vld [vmem:[%s12 + $0x14] sm:$0xf]
    %v1026 = vld [vmem:[%s12 + $0x18] sm:$0xf]
    %v1027 = vld [vmem:[%s12 + $0x1c] sm:$0xf]
    %v1028 = vpack.c.bf16 %v1019, %v1018
    %v1029 = vld [vmem:[#allocation16] sm:$0x1]
    %v1031 = vlaneseq
    %v1032 = vshrl.u32 %v1031, 7
    %v1033 = vsub.s32 0, %v1032
    %v1034 = vrot.slane %v1029, %v1033
    %v1044 = vunpack.c.l.b16 %v1020
    %v1045 = vunpack.c.l.b16 %v1021
    %v1046 = vunpack.c.l.b16 %v1022
    %v1047 = vunpack.c.l.b16 %v1023
    %v1048 = vunpack.c.l.b16 %v1024
    %v1049 = vunpack.c.l.b16 %v1025
    %v1050 = vunpack.c.l.b16 %v1026
    %v1051 = vunpack.c.l.b16 %v1027
    %v1052 = vpack.c.b16 %v1045, %v1044
    %v1053 = vpack.c.b16 %v1047, %v1046
    %v1054 = vpack.c.b16 %v1049, %v1048
    %v1055 = vpack.c.b16 %v1051, %v1050
    %vm1060 = vcmask 523264
    %v1062 = vsel %vm1060, %v1028, 0
    %1064 = vmatprep.subr.bf16.mxu0 0
    %1065 = vmatpush1.bf16.msra.mxu0 %v1052
    %1066 = vmatprep.subr.bf16.mxu0 0
    %1067 = vmatpush1.bf16.msra.mxu0 %v1053
    %1068 = vmatprep.subr.bf16.mxu0 0
    %1069 = vmatpush1.bf16.msra.mxu0 %v1054
    %1070 = vmatprep.subr.bf16.mxu0 0
    %1071 = vmatpush1.bf16.msra.mxu0 %v1055
    %1072 = vmatprep.subr.bf16.mxu0 0
    %1073 = vmatpush1.bf16.msra.mxu0 0
    %1074 = vmatprep.subr.bf16.mxu0 0
    %1075 = vmatpush1.bf16.msra.mxu0 0
    %1076 = vmatprep.subr.bf16.mxu0 0
    %1077 = vmatpush1.bf16.msra.mxu0 0
    %1078 = vmatprep.subr.bf16.mxu0 0
    %1079 = vmatpush1.bf16.msra.mxu0 0
    %1080 = vmatprep.subr.bf16.mxu0 0
    %1081 = vmatpush1.bf16.msra.mxu0 0
    %1082 = vmatprep.subr.bf16.mxu0 0
    %1083 = vmatpush1.bf16.msra.mxu0 0
    %1084 = vmatprep.subr.bf16.mxu0 0
    %1085 = vmatpush1.bf16.msra.mxu0 0
    %1086 = vmatprep.subr.bf16.mxu0 0
    %1087 = vmatpush1.bf16.msra.mxu0 0
    %1088 = vmatprep.subr.bf16.mxu0 0
    %1089 = vmatpush1.bf16.msra.mxu0 0
    %1090 = vmatprep.subr.bf16.mxu0 0
    %1091 = vmatpush1.bf16.msra.mxu0 0
    %1092 = vmatprep.subr.bf16.mxu0 0
    %1093 = vmatpush1.bf16.msra.mxu0 0
    %1094 = vmatprep.subr.bf16.mxu0 0
    %1095 = vmatpush1.bf16.msra.mxu0 0
    %1096 = vmatprep.mubr.bf16.mxu0 0
    %1097 = vmatmul.mubr.bf16.gmra.mrb[0].mxu0 %v1062
    %v1098 = vpop.f32.mrb[0].mxu0
    %v1099 = vadd.f32 %v1034, %v1098
    %v1100 = vpop.f32.mrb[0].mxu0
    %v1101 = vpop.f32.mrb[0].mxu0
    %v1102 = vadd.f32 %v1034, %v1101
    %v1103 = vpop.f32.mrb[0].mxu0
    %1104 = vdwg.mxu0
    %v1105 = vadd.f32 %v932, %v1099
    %v1106 = vadd.f32 %v933, %v1102
    %v1107 = vld [vmem:[%s14] sm:$0x1]
    %v1108 = vld [vmem:[%s15] sm:$0x1]
    %v1109 = vsel %vm191, %v1105, 0.0
    %1110 = vadd.xlane.f32.xlu0 %v1109
    %v1111 = vpop.xlane.xlu0 %1110
    %v1112 = vsel %vm191, %v1106, 0.0
    %1113 = vadd.xlane.f32.xlu0 %v1112
    %v1114 = vpop.xlane.xlu0 %1113
    %v1115 = vmul.f32 %v1111, %v198
    %v1116 = vmul.f32 %v1114, %v198
    %v1117 = vsub.f32 %v1105, %v1115
    %v1118 = vsub.f32 %v1106, %v1116
    %v1119 = vmul.f32 %v1117, %v1117
    %v1120 = vmul.f32 %v1118, %v1118
    %v1121 = vsel %vm191, %v1119, 0.0
    %1122 = vadd.xlane.f32.xlu0 %v1121
    %v1123 = vpop.xlane.xlu0 %1122
    %v1124 = vsel %vm191, %v1120, 0.0
    %1125 = vadd.xlane.f32.xlu0 %v1124
    %v1126 = vpop.xlane.xlu0 %1125
    %v1127 = vmul.f32 %v1123, %v198
    %v1128 = vmul.f32 %v1126, %v198
    %v1129 = vadd.f32 %v1127, 1e-12
    %v1130 = vadd.f32 %v1128, 1e-12
    %v1131 = vrsqrt.pop %v1129
    %v1132 = vrsqrt.pop %v1130
    %v1133 = vmul.f32 %v1117, %v1131
    %v1134 = vmul.f32 %v1118, %v1132
    %v1136 = vlaneseq
    %v1137 = vshrl.u32 %v1136, 7
    %v1138 = vsub.s32 0, %v1137
    %v1139 = vrot.slane %v1107, %v1138
    %v1141 = vmul.f32 %v1133, %v1139
    %v1142 = vmul.f32 %v1134, %v1139
    %v1144 = vlaneseq
    %v1145 = vshrl.u32 %v1144, 7
    %v1146 = vsub.s32 0, %v1145
    %v1147 = vrot.slane %v1108, %v1146
    %v1149 = vadd.f32 %v1141, %v1147
    %v1150 = vadd.f32 %v1142, %v1147
    %v1151 = vpack.c.bf16 %v1150, %v1149
    %s1152 = scalar_lea.vmem %s4, 16
    %v1153 = vld [vmem:[%s1152] sm:$0xf]
    %v1154 = vld [vmem:[%s1152 + $0x4] sm:$0xf]
    %v1155 = vld [vmem:[%s1152 + $0x8] sm:$0xf]
    %v1156 = vld [vmem:[%s1152 + $0xc] sm:$0xf]
    %s1157 = scalar_lea.vmem [#allocation8], 1
    %v1158 = vld [vmem:[%s1157] sm:$0x1]
    %v1160 = vlaneseq
    %v1161 = vshrl.u32 %v1160, 7
    %v1162 = vsub.s32 0, %v1161
    %v1163 = vrot.slane %v1158, %v1162
    %v1169 = vunpack.c.l.b16 %v1153
    %v1170 = vunpack.c.l.b16 %v1154
    %v1171 = vunpack.c.l.b16 %v1155
    %v1172 = vunpack.c.l.b16 %v1156
    %v1173 = vpack.c.b16 %v1170, %v1169
    %v1174 = vpack.c.b16 %v1172, %v1171
    %v1178 = vsel %vm191, %v1151, 0
    %1180 = vmatprep.subr.bf16.mxu0 0
    %1181 = vmatpush1.bf16.msra.mxu0 %v1173
    %1182 = vmatprep.subr.bf16.mxu0 0
    %1183 = vmatpush1.bf16.msra.mxu0 %v1174
    %1184 = vmatprep.subr.bf16.mxu0 0
    %1185 = vmatpush1.bf16.msra.mxu0 0
    %1186 = vmatprep.subr.bf16.mxu0 0
    %1187 = vmatpush1.bf16.msra.mxu0 0
    %1188 = vmatprep.subr.bf16.mxu0 0
    %1189 = vmatpush1.bf16.msra.mxu0 0
    %1190 = vmatprep.subr.bf16.mxu0 0
    %1191 = vmatpush1.bf16.msra.mxu0 0
    %1192 = vmatprep.subr.bf16.mxu0 0
    %1193 = vmatpush1.bf16.msra.mxu0 0
    %1194 = vmatprep.subr.bf16.mxu0 0
    %1195 = vmatpush1.bf16.msra.mxu0 0
    %1196 = vmatprep.subr.bf16.mxu0 0
    %1197 = vmatpush1.bf16.msra.mxu0 0
    %1198 = vmatprep.subr.bf16.mxu0 0
    %1199 = vmatpush1.bf16.msra.mxu0 0
    %1200 = vmatprep.subr.bf16.mxu0 0
    %1201 = vmatpush1.bf16.msra.mxu0 0
    %1202 = vmatprep.subr.bf16.mxu0 0
    %1203 = vmatpush1.bf16.msra.mxu0 0
    %1204 = vmatprep.subr.bf16.mxu0 0
    %1205 = vmatpush1.bf16.msra.mxu0 0
    %1206 = vmatprep.subr.bf16.mxu0 0
    %1207 = vmatpush1.bf16.msra.mxu0 0
    %1208 = vmatprep.subr.bf16.mxu0 0
    %1209 = vmatpush1.bf16.msra.mxu0 0
    %1210 = vmatprep.subr.bf16.mxu0 0
    %1211 = vmatpush1.bf16.msra.mxu0 0
    %1212 = vmatprep.mubr.bf16.mxu0 0
    %1213 = vmatmul.mubr.bf16.gmra.mrb[0].mxu0 %v1178
    %v1214 = vpop.f32.mrb[0].mxu0
    %v1215 = vadd.f32 %v1163, %v1214
    %v1216 = vpop.f32.mrb[0].mxu0
    %v1217 = vpop.f32.mrb[0].mxu0
    %v1218 = vadd.f32 %v1163, %v1217
    %v1219 = vpop.f32.mrb[0].mxu0
    %1220 = vdwg.mxu0
    %v1221 = vpack.c.bf16 %v1218, %v1215
    %1223 = vrot.lane.b32.xlu0 %v1221, 96
    %v1224 = vpop.permute.xlu0 %1223
    %v1226 = vsel %vm307, %v1221, 0
    %v1229 = vsel %vm307, %v1224, 0
    %1231 = vmatprep.subr.bf16.mxu0 0
    %1232 = vmatpush1.bf16.xpose.msra.mxu0 %v1229
    %1233 = vmatprep.subr.bf16.mxu0 0
    %1234 = vmatpush1.bf16.xpose.msra.mxu0 0
    %1235 = vmatprep.subr.bf16.mxu0 0
    %1236 = vmatpush1.bf16.xpose.msra.mxu0 0
    %1237 = vmatprep.subr.bf16.mxu0 0
    %1238 = vmatpush1.bf16.xpose.msra.mxu0 0
    %1239 = vmatprep.subr.bf16.mxu0 0
    %1240 = vmatpush1.bf16.xpose.msra.mxu0 0
    %1241 = vmatprep.subr.bf16.mxu0 0
    %1242 = vmatpush1.bf16.xpose.msra.mxu0 0
    %1243 = vmatprep.subr.bf16.mxu0 0
    %1244 = vmatpush1.bf16.xpose.msra.mxu0 0
    %1245 = vmatprep.subr.bf16.mxu0 0
    %1246 = vmatpush1.bf16.xpose.msra.mxu0 0
    %1247 = vmatprep.subr.bf16.mxu0 0
    %1248 = vmatpush1.bf16.xpose.msra.mxu0 0
    %1249 = vmatprep.subr.bf16.mxu0 0
    %1250 = vmatpush1.bf16.xpose.msra.mxu0 0
    %1251 = vmatprep.subr.bf16.mxu0 0
    %1252 = vmatpush1.bf16.xpose.msra.mxu0 0
    %1253 = vmatprep.subr.bf16.mxu0 0
    %1254 = vmatpush1.bf16.xpose.msra.mxu0 0
    %1255 = vmatprep.subr.bf16.mxu0 0
    %1256 = vmatpush1.bf16.xpose.msra.mxu0 0
    %1257 = vmatprep.subr.bf16.mxu0 0
    %1258 = vmatpush1.bf16.xpose.msra.mxu0 0
    %1259 = vmatprep.subr.bf16.mxu0 0
    %1260 = vmatpush1.bf16.xpose.msra.mxu0 0
    %1261 = vmatprep.subr.bf16.mxu0 0
    %1262 = vmatpush1.bf16.xpose.msra.mxu0 0
    %1263 = vmatprep.mubr.bf16.mxu0 0
    %1264 = vmatmul.mubr.bf16.gmra.mrb[0].mxu0 %v1226
    %v1265 = vpop.f32.mrb[0].mxu0
    %v1266 = vadd.f32 %v185, %v1265
    %v1267 = vpop.f32.mrb[0].mxu0
    %v1268 = vpop.f32.mrb[0].mxu0
    %v1269 = vadd.f32 %v186, %v1268
    %v1270 = vpop.f32.mrb[0].mxu0
    %1271 = vdwg.mxu0
    %v1272 = vsel %vm355, %v1266, -inf
    %1273 = vmax.xlane.f32.xlu0 %v1272
    %v1274 = vpop.xlane.xlu0 %1273
    %v1275 = vsel %vm355, %v1269, -inf
    %1276 = vmax.xlane.f32.xlu0 %v1275
    %v1277 = vpop.xlane.xlu0 %1276
    %v1278 = vsub.f32 %v1266, %v1274
    %v1279 = vsub.f32 %v1269, %v1277
    %v1280 = vmul.f32 %v1278, 1.442695
    %v1281 = vpow.pop %v1280
    %v1282 = vmul.f32 %v1279, 1.442695
    %v1283 = vpow.pop %v1282
    %v1284 = vsel %vm355, %v1281, 0.0
    %1285 = vadd.xlane.f32.xlu0 %v1284
    %v1286 = vpop.xlane.xlu0 %1285
    %v1287 = vsel %vm355, %v1283, 0.0
    %1288 = vadd.xlane.f32.xlu0 %v1287
    %v1289 = vpop.xlane.xlu0 %1288
    %v1290 = vrcp.pop %v1286
    %v1291 = vrcp.pop %v1289
    %v1292 = vmul.f32 %v1281, %v1290
    %v1293 = vmul.f32 %v1283, %v1291
    %v1294 = vpack.c.bf16 %v1293, %v1292
    %1295 = vrot.lane.b32.xlu0 %v1221, 64
    %v1296 = vpop.permute.xlu0 %1295
    %v1299 = vsel %vm355, %v1294, 0
    %1301 = vmatprep.subr.bf16.mxu0 0
    %1302 = vmatpush1.bf16.msra.mxu0 %v1296
    %1303 = vmatprep.subr.bf16.mxu0 0
    %1304 = vmatpush1.bf16.msra.mxu0 0
    %1305 = vmatprep.subr.bf16.mxu0 0
    %1306 = vmatpush1.bf16.msra.mxu0 0
    %1307 = vmatprep.subr.bf16.mxu0 0
    %1308 = vmatpush1.bf16.msra.mxu0 0
    %1309 = vmatprep.subr.bf16.mxu0 0
    %1310 = vmatpush1.bf16.msra.mxu0 0
    %1311 = vmatprep.subr.bf16.mxu0 0
    %1312 = vmatpush1.bf16.msra.mxu0 0
    %1313 = vmatprep.subr.bf16.mxu0 0
    %1314 = vmatpush1.bf16.msra.mxu0 0
    %1315 = vmatprep.subr.bf16.mxu0 0
    %1316 = vmatpush1.bf16.msra.mxu0 0
    %1317 = vmatprep.subr.bf16.mxu0 0
    %1318 = vmatpush1.bf16.msra.mxu0 0
    %1319 = vmatprep.subr.bf16.mxu0 0
    %1320 = vmatpush1.bf16.msra.mxu0 0
    %1321 = vmatprep.subr.bf16.mxu0 0
    %1322 = vmatpush1.bf16.msra.mxu0 0
    %1323 = vmatprep.subr.bf16.mxu0 0
    %1324 = vmatpush1.bf16.msra.mxu0 0
    %1325 = vmatprep.subr.bf16.mxu0 0
    %1326 = vmatpush1.bf16.msra.mxu0 0
    %1327 = vmatprep.subr.bf16.mxu0 0
    %1328 = vmatpush1.bf16.msra.mxu0 0
    %1329 = vmatprep.subr.bf16.mxu0 0
    %1330 = vmatpush1.bf16.msra.mxu0 0
    %1331 = vmatprep.subr.bf16.mxu0 0
    %1332 = vmatpush1.bf16.msra.mxu0 0
    %1333 = vmatprep.mubr.bf16.mxu0 0
    %1334 = vmatmul.mubr.bf16.gmra.mrb[0].mxu0 %v1299
    %v1335 = vpop.f32.mrb[0].mxu0
    %v1336 = vadd.f32 0.0, %v1335
    %v1337 = vpop.f32.mrb[0].mxu0
    %v1338 = vpop.f32.mrb[0].mxu0
    %v1339 = vadd.f32 0.0, %v1338
    %v1340 = vpop.f32.mrb[0].mxu0
    %1341 = vdwg.mxu0
    %1342 = vrot.lane.b32.xlu0 %v1221, 120
    %v1343 = vpop.permute.xlu0 %1342
    %1344 = vrot.lane.b32.xlu0 %v1221, 88
    %v1345 = vpop.permute.xlu0 %1344
    %v1347 = vsel %vm307, %v1343, 0
    %v1350 = vsel %vm307, %v1345, 0
    %1352 = vmatprep.subr.bf16.mxu0 0
    %1353 = vmatpush1.bf16.xpose.msra.mxu0 %v1350
    %1354 = vmatprep.subr.bf16.mxu0 0
    %1355 = vmatpush1.bf16.xpose.msra.mxu0 0
    %1356 = vmatprep.subr.bf16.mxu0 0
    %1357 = vmatpush1.bf16.xpose.msra.mxu0 0
    %1358 = vmatprep.subr.bf16.mxu0 0
    %1359 = vmatpush1.bf16.xpose.msra.mxu0 0
    %1360 = vmatprep.subr.bf16.mxu0 0
    %1361 = vmatpush1.bf16.xpose.msra.mxu0 0
    %1362 = vmatprep.subr.bf16.mxu0 0
    %1363 = vmatpush1.bf16.xpose.msra.mxu0 0
    %1364 = vmatprep.subr.bf16.mxu0 0
    %1365 = vmatpush1.bf16.xpose.msra.mxu0 0
    %1366 = vmatprep.subr.bf16.mxu0 0
    %1367 = vmatpush1.bf16.xpose.msra.mxu0 0
    %1368 = vmatprep.subr.bf16.mxu0 0
    %1369 = vmatpush1.bf16.xpose.msra.mxu0 0
    %1370 = vmatprep.subr.bf16.mxu0 0
    %1371 = vmatpush1.bf16.xpose.msra.mxu0 0
    %1372 = vmatprep.subr.bf16.mxu0 0
    %1373 = vmatpush1.bf16.xpose.msra.mxu0 0
    %1374 = vmatprep.subr.bf16.mxu0 0
    %1375 = vmatpush1.bf16.xpose.msra.mxu0 0
    %1376 = vmatprep.subr.bf16.mxu0 0
    %1377 = vmatpush1.bf16.xpose.msra.mxu0 0
    %1378 = vmatprep.subr.bf16.mxu0 0
    %1379 = vmatpush1.bf16.xpose.msra.mxu0 0
    %1380 = vmatprep.subr.bf16.mxu0 0
    %1381 = vmatpush1.bf16.xpose.msra.mxu0 0
    %1382 = vmatprep.subr.bf16.mxu0 0
    %1383 = vmatpush1.bf16.xpose.msra.mxu0 0
    %1384 = vmatprep.mubr.bf16.mxu0 0
    %1385 = vmatmul.mubr.bf16.gmra.mrb[0].mxu0 %v1347
    %v1386 = vpop.f32.mrb[0].mxu0
    %v1387 = vadd.f32 %v185, %v1386
    %v1388 = vpop.f32.mrb[0].mxu0
    %v1389 = vpop.f32.mrb[0].mxu0
    %v1390 = vadd.f32 %v186, %v1389
    %v1391 = vpop.f32.mrb[0].mxu0
    %1392 = vdwg.mxu0
    %v1393 = vsel %vm355, %v1387, -inf
    %1394 = vmax.xlane.f32.xlu0 %v1393
    %v1395 = vpop.xlane.xlu0 %1394
    %v1396 = vsel %vm355, %v1390, -inf
    %1397 = vmax.xlane.f32.xlu0 %v1396
    %v1398 = vpop.xlane.xlu0 %1397
    %v1399 = vsub.f32 %v1387, %v1395
    %v1400 = vsub.f32 %v1390, %v1398
    %v1401 = vmul.f32 %v1399, 1.442695
    %v1402 = vpow.pop %v1401
    %v1403 = vmul.f32 %v1400, 1.442695
    %v1404 = vpow.pop %v1403
    %v1405 = vsel %vm355, %v1402, 0.0
    %1406 = vadd.xlane.f32.xlu0 %v1405
    %v1407 = vpop.xlane.xlu0 %1406
    %v1408 = vsel %vm355, %v1404, 0.0
    %1409 = vadd.xlane.f32.xlu0 %v1408
    %v1410 = vpop.xlane.xlu0 %1409
    %v1411 = vrcp.pop %v1407
    %v1412 = vrcp.pop %v1410
    %v1413 = vmul.f32 %v1402, %v1411
    %v1414 = vmul.f32 %v1404, %v1412
    %v1415 = vpack.c.bf16 %v1414, %v1413
    %1416 = vrot.lane.b32.xlu0 %v1221, 56
    %v1417 = vpop.permute.xlu0 %1416
    %v1420 = vsel %vm355, %v1415, 0
    %1422 = vmatprep.subr.bf16.mxu0 0
    %1423 = vmatpush1.bf16.msra.mxu0 %v1417
    %1424 = vmatprep.subr.bf16.mxu0 0
    %1425 = vmatpush1.bf16.msra.mxu0 0
    %1426 = vmatprep.subr.bf16.mxu0 0
    %1427 = vmatpush1.bf16.msra.mxu0 0
    %1428 = vmatprep.subr.bf16.mxu0 0
    %1429 = vmatpush1.bf16.msra.mxu0 0
    %1430 = vmatprep.subr.bf16.mxu0 0
    %1431 = vmatpush1.bf16.msra.mxu0 0
    %1432 = vmatprep.subr.bf16.mxu0 0
    %1433 = vmatpush1.bf16.msra.mxu0 0
    %1434 = vmatprep.subr.bf16.mxu0 0
    %1435 = vmatpush1.bf16.msra.mxu0 0
    %1436 = vmatprep.subr.bf16.mxu0 0
    %1437 = vmatpush1.bf16.msra.mxu0 0
    %1438 = vmatprep.subr.bf16.mxu0 0
    %1439 = vmatpush1.bf16.msra.mxu0 0
    %1440 = vmatprep.subr.bf16.mxu0 0
    %1441 = vmatpush1.bf16.msra.mxu0 0
    %1442 = vmatprep.subr.bf16.mxu0 0
    %1443 = vmatpush1.bf16.msra.mxu0 0
    %1444 = vmatprep.subr.bf16.mxu0 0
    %1445 = vmatpush1.bf16.msra.mxu0 0
    %1446 = vmatprep.subr.bf16.mxu0 0
    %1447 = vmatpush1.bf16.msra.mxu0 0
    %1448 = vmatprep.subr.bf16.mxu0 0
    %1449 = vmatpush1.bf16.msra.mxu0 0
    %1450 = vmatprep.subr.bf16.mxu0 0
    %1451 = vmatpush1.bf16.msra.mxu0 0
    %1452 = vmatprep.subr.bf16.mxu0 0
    %1453 = vmatpush1.bf16.msra.mxu0 0
    %1454 = vmatprep.mubr.bf16.mxu0 0
    %1455 = vmatmul.mubr.bf16.gmra.mrb[0].mxu0 %v1420
    %v1456 = vpop.f32.mrb[0].mxu0
    %v1457 = vadd.f32 0.0, %v1456
    %v1458 = vpop.f32.mrb[0].mxu0
    %v1459 = vpop.f32.mrb[0].mxu0
    %v1460 = vadd.f32 0.0, %v1459
    %v1461 = vpop.f32.mrb[0].mxu0
    %1462 = vdwg.mxu0
    %1463 = vrot.lane.b32.xlu0 %v1221, 112
    %v1464 = vpop.permute.xlu0 %1463
    %1465 = vrot.lane.b32.xlu0 %v1221, 80
    %v1466 = vpop.permute.xlu0 %1465
    %v1468 = vsel %vm307, %v1464, 0
    %v1471 = vsel %vm307, %v1466, 0
    %1473 = vmatprep.subr.bf16.mxu0 0
    %1474 = vmatpush1.bf16.xpose.msra.mxu0 %v1471
    %1475 = vmatprep.subr.bf16.mxu0 0
    %1476 = vmatpush1.bf16.xpose.msra.mxu0 0
    %1477 = vmatprep.subr.bf16.mxu0 0
    %1478 = vmatpush1.bf16.xpose.msra.mxu0 0
    %1479 = vmatprep.subr.bf16.mxu0 0
    %1480 = vmatpush1.bf16.xpose.msra.mxu0 0
    %1481 = vmatprep.subr.bf16.mxu0 0
    %1482 = vmatpush1.bf16.xpose.msra.mxu0 0
    %1483 = vmatprep.subr.bf16.mxu0 0
    %1484 = vmatpush1.bf16.xpose.msra.mxu0 0
    %1485 = vmatprep.subr.bf16.mxu0 0
    %1486 = vmatpush1.bf16.xpose.msra.mxu0 0
    %1487 = vmatprep.subr.bf16.mxu0 0
    %1488 = vmatpush1.bf16.xpose.msra.mxu0 0
    %1489 = vmatprep.subr.bf16.mxu0 0
    %1490 = vmatpush1.bf16.xpose.msra.mxu0 0
    %1491 = vmatprep.subr.bf16.mxu0 0
    %1492 = vmatpush1.bf16.xpose.msra.mxu0 0
    %1493 = vmatprep.subr.bf16.mxu0 0
    %1494 = vmatpush1.bf16.xpose.msra.mxu0 0
    %1495 = vmatprep.subr.bf16.mxu0 0
    %1496 = vmatpush1.bf16.xpose.msra.mxu0 0
    %1497 = vmatprep.subr.bf16.mxu0 0
    %1498 = vmatpush1.bf16.xpose.msra.mxu0 0
    %1499 = vmatprep.subr.bf16.mxu0 0
    %1500 = vmatpush1.bf16.xpose.msra.mxu0 0
    %1501 = vmatprep.subr.bf16.mxu0 0
    %1502 = vmatpush1.bf16.xpose.msra.mxu0 0
    %1503 = vmatprep.subr.bf16.mxu0 0
    %1504 = vmatpush1.bf16.xpose.msra.mxu0 0
    %1505 = vmatprep.mubr.bf16.mxu0 0
    %1506 = vmatmul.mubr.bf16.gmra.mrb[0].mxu0 %v1468
    %v1507 = vpop.f32.mrb[0].mxu0
    %v1508 = vadd.f32 %v185, %v1507
    %v1509 = vpop.f32.mrb[0].mxu0
    %v1510 = vpop.f32.mrb[0].mxu0
    %v1511 = vadd.f32 %v186, %v1510
    %v1512 = vpop.f32.mrb[0].mxu0
    %1513 = vdwg.mxu0
    %v1514 = vsel %vm355, %v1508, -inf
    %1515 = vmax.xlane.f32.xlu0 %v1514
    %v1516 = vpop.xlane.xlu0 %1515
    %v1517 = vsel %vm355, %v1511, -inf
    %1518 = vmax.xlane.f32.xlu0 %v1517
    %v1519 = vpop.xlane.xlu0 %1518
    %v1520 = vsub.f32 %v1508, %v1516
    %v1521 = vsub.f32 %v1511, %v1519
    %v1522 = vmul.f32 %v1520, 1.442695
    %v1523 = vpow.pop %v1522
    %v1524 = vmul.f32 %v1521, 1.442695
    %v1525 = vpow.pop %v1524
    %v1526 = vsel %vm355, %v1523, 0.0
    %1527 = vadd.xlane.f32.xlu0 %v1526
    %v1528 = vpop.xlane.xlu0 %1527
    %v1529 = vsel %vm355, %v1525, 0.0
    %1530 = vadd.xlane.f32.xlu0 %v1529
    %v1531 = vpop.xlane.xlu0 %1530
    %v1532 = vrcp.pop %v1528
    %v1533 = vrcp.pop %v1531
    %v1534 = vmul.f32 %v1523, %v1532
    %v1535 = vmul.f32 %v1525, %v1533
    %v1536 = vpack.c.bf16 %v1535, %v1534
    %1537 = vrot.lane.b32.xlu0 %v1221, 48
    %v1538 = vpop.permute.xlu0 %1537
    %v1541 = vsel %vm355, %v1536, 0
    %1543 = vmatprep.subr.bf16.mxu0 0
    %1544 = vmatpush1.bf16.msra.mxu0 %v1538
    %1545 = vmatprep.subr.bf16.mxu0 0
    %1546 = vmatpush1.bf16.msra.mxu0 0
    %1547 = vmatprep.subr.bf16.mxu0 0
    %1548 = vmatpush1.bf16.msra.mxu0 0
    %1549 = vmatprep.subr.bf16.mxu0 0
    %1550 = vmatpush1.bf16.msra.mxu0 0
    %1551 = vmatprep.subr.bf16.mxu0 0
    %1552 = vmatpush1.bf16.msra.mxu0 0
    %1553 = vmatprep.subr.bf16.mxu0 0
    %1554 = vmatpush1.bf16.msra.mxu0 0
    %1555 = vmatprep.subr.bf16.mxu0 0
    %1556 = vmatpush1.bf16.msra.mxu0 0
    %1557 = vmatprep.subr.bf16.mxu0 0
    %1558 = vmatpush1.bf16.msra.mxu0 0
    %1559 = vmatprep.subr.bf16.mxu0 0
    %1560 = vmatpush1.bf16.msra.mxu0 0
    %1561 = vmatprep.subr.bf16.mxu0 0
    %1562 = vmatpush1.bf16.msra.mxu0 0
    %1563 = vmatprep.subr.bf16.mxu0 0
    %1564 = vmatpush1.bf16.msra.mxu0 0
    %1565 = vmatprep.subr.bf16.mxu0 0
    %1566 = vmatpush1.bf16.msra.mxu0 0
    %1567 = vmatprep.subr.bf16.mxu0 0
    %1568 = vmatpush1.bf16.msra.mxu0 0
    %1569 = vmatprep.subr.bf16.mxu0 0
    %1570 = vmatpush1.bf16.msra.mxu0 0
    %1571 = vmatprep.subr.bf16.mxu0 0
    %1572 = vmatpush1.bf16.msra.mxu0 0
    %1573 = vmatprep.subr.bf16.mxu0 0
    %1574 = vmatpush1.bf16.msra.mxu0 0
    %1575 = vmatprep.mubr.bf16.mxu0 0
    %1576 = vmatmul.mubr.bf16.gmra.mrb[0].mxu0 %v1541
    %v1577 = vpop.f32.mrb[0].mxu0
    %v1578 = vadd.f32 0.0, %v1577
    %v1579 = vpop.f32.mrb[0].mxu0
    %v1580 = vpop.f32.mrb[0].mxu0
    %v1581 = vadd.f32 0.0, %v1580
    %v1582 = vpop.f32.mrb[0].mxu0
    %1583 = vdwg.mxu0
    %1584 = vrot.lane.b32.xlu0 %v1221, 104
    %v1585 = vpop.permute.xlu0 %1584
    %1586 = vrot.lane.b32.xlu0 %v1221, 72
    %v1587 = vpop.permute.xlu0 %1586
    %v1589 = vsel %vm307, %v1585, 0
    %v1592 = vsel %vm307, %v1587, 0
    %1594 = vmatprep.subr.bf16.mxu0 0
    %1595 = vmatpush1.bf16.xpose.msra.mxu0 %v1592
    %1596 = vmatprep.subr.bf16.mxu0 0
    %1597 = vmatpush1.bf16.xpose.msra.mxu0 0
    %1598 = vmatprep.subr.bf16.mxu0 0
    %1599 = vmatpush1.bf16.xpose.msra.mxu0 0
    %1600 = vmatprep.subr.bf16.mxu0 0
    %1601 = vmatpush1.bf16.xpose.msra.mxu0 0
    %1602 = vmatprep.subr.bf16.mxu0 0
    %1603 = vmatpush1.bf16.xpose.msra.mxu0 0
    %1604 = vmatprep.subr.bf16.mxu0 0
    %1605 = vmatpush1.bf16.xpose.msra.mxu0 0
    %1606 = vmatprep.subr.bf16.mxu0 0
    %1607 = vmatpush1.bf16.xpose.msra.mxu0 0
    %1608 = vmatprep.subr.bf16.mxu0 0
    %1609 = vmatpush1.bf16.xpose.msra.mxu0 0
    %1610 = vmatprep.subr.bf16.mxu0 0
    %1611 = vmatpush1.bf16.xpose.msra.mxu0 0
    %1612 = vmatprep.subr.bf16.mxu0 0
    %1613 = vmatpush1.bf16.xpose.msra.mxu0 0
    %1614 = vmatprep.subr.bf16.mxu0 0
    %1615 = vmatpush1.bf16.xpose.msra.mxu0 0
    %1616 = vmatprep.subr.bf16.mxu0 0
    %1617 = vmatpush1.bf16.xpose.msra.mxu0 0
    %1618 = vmatprep.subr.bf16.mxu0 0
    %1619 = vmatpush1.bf16.xpose.msra.mxu0 0
    %1620 = vmatprep.subr.bf16.mxu0 0
    %1621 = vmatpush1.bf16.xpose.msra.mxu0 0
    %1622 = vmatprep.subr.bf16.mxu0 0
    %1623 = vmatpush1.bf16.xpose.msra.mxu0 0
    %1624 = vmatprep.subr.bf16.mxu0 0
    %1625 = vmatpush1.bf16.xpose.msra.mxu0 0
    %1626 = vmatprep.mubr.bf16.mxu0 0
    %1627 = vmatmul.mubr.bf16.gmra.mrb[0].mxu0 %v1589
    %v1628 = vpop.f32.mrb[0].mxu0
    %v1629 = vadd.f32 %v185, %v1628
    %v1630 = vpop.f32.mrb[0].mxu0
    %v1631 = vpop.f32.mrb[0].mxu0
    %v1632 = vadd.f32 %v186, %v1631
    %v1633 = vpop.f32.mrb[0].mxu0
    %1634 = vdwg.mxu0
    %v1635 = vsel %vm355, %v1629, -inf
    %1636 = vmax.xlane.f32.xlu0 %v1635
    %v1637 = vpop.xlane.xlu0 %1636
    %v1638 = vsel %vm355, %v1632, -inf
    %1639 = vmax.xlane.f32.xlu0 %v1638
    %v1640 = vpop.xlane.xlu0 %1639
    %v1641 = vsub.f32 %v1629, %v1637
    %v1642 = vsub.f32 %v1632, %v1640
    %v1643 = vmul.f32 %v1641, 1.442695
    %v1644 = vpow.pop %v1643
    %v1645 = vmul.f32 %v1642, 1.442695
    %v1646 = vpow.pop %v1645
    %v1647 = vsel %vm355, %v1644, 0.0
    %1648 = vadd.xlane.f32.xlu0 %v1647
    %v1649 = vpop.xlane.xlu0 %1648
    %v1650 = vsel %vm355, %v1646, 0.0
    %1651 = vadd.xlane.f32.xlu0 %v1650
    %v1652 = vpop.xlane.xlu0 %1651
    %v1653 = vrcp.pop %v1649
    %v1654 = vrcp.pop %v1652
    %v1655 = vmul.f32 %v1644, %v1653
    %v1656 = vmul.f32 %v1646, %v1654
    %v1657 = vpack.c.bf16 %v1656, %v1655
    %1658 = vrot.lane.b32.xlu0 %v1221, 40
    %v1659 = vpop.permute.xlu0 %1658
    %v1662 = vsel %vm355, %v1657, 0
    %1664 = vmatprep.subr.bf16.mxu0 0
    %1665 = vmatpush1.bf16.msra.mxu0 %v1659
    %1666 = vmatprep.subr.bf16.mxu0 0
    %1667 = vmatpush1.bf16.msra.mxu0 0
    %1668 = vmatprep.subr.bf16.mxu0 0
    %1669 = vmatpush1.bf16.msra.mxu0 0
    %1670 = vmatprep.subr.bf16.mxu0 0
    %1671 = vmatpush1.bf16.msra.mxu0 0
    %1672 = vmatprep.subr.bf16.mxu0 0
    %1673 = vmatpush1.bf16.msra.mxu0 0
    %1674 = vmatprep.subr.bf16.mxu0 0
    %1675 = vmatpush1.bf16.msra.mxu0 0
    %1676 = vmatprep.subr.bf16.mxu0 0
    %1677 = vmatpush1.bf16.msra.mxu0 0
    %1678 = vmatprep.subr.bf16.mxu0 0
    %1679 = vmatpush1.bf16.msra.mxu0 0
    %1680 = vmatprep.subr.bf16.mxu0 0
    %1681 = vmatpush1.bf16.msra.mxu0 0
    %1682 = vmatprep.subr.bf16.mxu0 0
    %1683 = vmatpush1.bf16.msra.mxu0 0
    %1684 = vmatprep.subr.bf16.mxu0 0
    %1685 = vmatpush1.bf16.msra.mxu0 0
    %1686 = vmatprep.subr.bf16.mxu0 0
    %1687 = vmatpush1.bf16.msra.mxu0 0
    %1688 = vmatprep.subr.bf16.mxu0 0
    %1689 = vmatpush1.bf16.msra.mxu0 0
    %1690 = vmatprep.subr.bf16.mxu0 0
    %1691 = vmatpush1.bf16.msra.mxu0 0
    %1692 = vmatprep.subr.bf16.mxu0 0
    %1693 = vmatpush1.bf16.msra.mxu0 0
    %1694 = vmatprep.subr.bf16.mxu0 0
    %1695 = vmatpush1.bf16.msra.mxu0 0
    %1696 = vmatprep.mubr.bf16.mxu0 0
    %1697 = vmatmul.mubr.bf16.gmra.mrb[0].mxu0 %v1662
    %v1698 = vpop.f32.mrb[0].mxu0
    %v1699 = vadd.f32 0.0, %v1698
    %v1700 = vpop.f32.mrb[0].mxu0
    %v1701 = vpop.f32.mrb[0].mxu0
    %v1702 = vadd.f32 0.0, %v1701
    %v1703 = vpop.f32.mrb[0].mxu0
    %1704 = vdwg.mxu0
    %1707 = vrot.lane.b32.xlu0 %v1457, 8
    %v1708 = vpop.permute.xlu0 %1707
    %1709 = vrot.lane.b32.xlu0 %v1460, 8
    %v1710 = vpop.permute.xlu0 %1709
    %1715 = vrot.lane.b32.xlu0 %v1578, 16
    %v1716 = vpop.permute.xlu0 %1715
    %1717 = vrot.lane.b32.xlu0 %v1581, 16
    %v1718 = vpop.permute.xlu0 %1717
    %1723 = vrot.lane.b32.xlu0 %v1699, 24
    %v1724 = vpop.permute.xlu0 %1723
    %1725 = vrot.lane.b32.xlu0 %v1702, 24
    %v1726 = vpop.permute.xlu0 %1725
    %v1729 = vsel %vm307, %v1336, %v1708
    %v1730 = vsel %vm307, %v1339, %v1710
    %v1731 = vsel %vm355, %v1729, %v1716
    %v1732 = vsel %vm355, %v1730, %v1718
    %v1733 = vsel %vm817, %v1731, %v1724
    %v1734 = vsel %vm817, %v1732, %v1726
    %v1735 = vpack.c.bf16 %v1734, %v1733
    %s1736 = scalar_lea.vmem %s6, 16
    %v1737 = vld [vmem:[%s1736] sm:$0xf]
    %v1738 = vld [vmem:[%s1736 + $0x4] sm:$0xf]
    %v1739 = vld [vmem:[%s1736 + $0x8] sm:$0xf]
    %v1740 = vld [vmem:[%s1736 + $0xc] sm:$0xf]
    %s1741 = scalar_lea.vmem [#allocation10], 1
    %v1742 = vld [vmem:[%s1741] sm:$0x1]
    %v1744 = vlaneseq
    %v1745 = vshrl.u32 %v1744, 7
    %v1746 = vsub.s32 0, %v1745
    %v1747 = vrot.slane %v1742, %v1746
    %v1753 = vunpack.c.l.b16 %v1737
    %v1754 = vunpack.c.l.b16 %v1738
    %v1755 = vunpack.c.l.b16 %v1739
    %v1756 = vunpack.c.l.b16 %v1740
    %v1757 = vpack.c.b16 %v1754, %v1753
    %v1758 = vpack.c.b16 %v1756, %v1755
    %v1762 = vsel %vm191, %v1735, 0
    %1764 = vmatprep.subr.bf16.mxu0 0
    %1765 = vmatpush1.bf16.msra.mxu0 %v1757
    %1766 = vmatprep.subr.bf16.mxu0 0
    %1767 = vmatpush1.bf16.msra.mxu0 %v1758
    %1768 = vmatprep.subr.bf16.mxu0 0
    %1769 = vmatpush1.bf16.msra.mxu0 0
    %1770 = vmatprep.subr.bf16.mxu0 0
    %1771 = vmatpush1.bf16.msra.mxu0 0
    %1772 = vmatprep.subr.bf16.mxu0 0
    %1773 = vmatpush1.bf16.msra.mxu0 0
    %1774 = vmatprep.subr.bf16.mxu0 0
    %1775 = vmatpush1.bf16.msra.mxu0 0
    %1776 = vmatprep.subr.bf16.mxu0 0
    %1777 = vmatpush1.bf16.msra.mxu0 0
    %1778 = vmatprep.subr.bf16.mxu0 0
    %1779 = vmatpush1.bf16.msra.mxu0 0
    %1780 = vmatprep.subr.bf16.mxu0 0
    %1781 = vmatpush1.bf16.msra.mxu0 0
    %1782 = vmatprep.subr.bf16.mxu0 0
    %1783 = vmatpush1.bf16.msra.mxu0 0
    %1784 = vmatprep.subr.bf16.mxu0 0
    %1785 = vmatpush1.bf16.msra.mxu0 0
    %1786 = vmatprep.subr.bf16.mxu0 0
    %1787 = vmatpush1.bf16.msra.mxu0 0
    %1788 = vmatprep.subr.bf16.mxu0 0
    %1789 = vmatpush1.bf16.msra.mxu0 0
    %1790 = vmatprep.subr.bf16.mxu0 0
    %1791 = vmatpush1.bf16.msra.mxu0 0
    %1792 = vmatprep.subr.bf16.mxu0 0
    %1793 = vmatpush1.bf16.msra.mxu0 0
    %1794 = vmatprep.subr.bf16.mxu0 0
    %1795 = vmatpush1.bf16.msra.mxu0 0
    %1796 = vmatprep.mubr.bf16.mxu0 0
    %1797 = vmatmul.mubr.bf16.gmra.mrb[0].mxu0 %v1762
    %v1798 = vpop.f32.mrb[0].mxu0
    %v1799 = vadd.f32 %v1747, %v1798
    %v1800 = vpop.f32.mrb[0].mxu0
    %v1801 = vpop.f32.mrb[0].mxu0
    %v1802 = vadd.f32 %v1747, %v1801
    %v1803 = vpop.f32.mrb[0].mxu0
    %1804 = vdwg.mxu0
    %v1805 = vadd.f32 %v1149, %v1799
    %v1806 = vadd.f32 %v1150, %v1802
    %s1807 = scalar_lea.vmem [#allocation11], 1
    %v1808 = vld [vmem:[%s1807] sm:$0x1]
    %s1809 = scalar_lea.vmem [#allocation13], 1
    %v1810 = vld [vmem:[%s1809] sm:$0x1]
    %v1811 = vsel %vm191, %v1805, 0.0
    %1812 = vadd.xlane.f32.xlu0 %v1811
    %v1813 = vpop.xlane.xlu0 %1812
    %v1814 = vsel %vm191, %v1806, 0.0
    %1815 = vadd.xlane.f32.xlu0 %v1814
    %v1816 = vpop.xlane.xlu0 %1815
    %v1817 = vmul.f32 %v1813, %v198
    %v1818 = vmul.f32 %v1816, %v198
    %v1819 = vsub.f32 %v1805, %v1817
    %v1820 = vsub.f32 %v1806, %v1818
    %v1821 = vmul.f32 %v1819, %v1819
    %v1822 = vmul.f32 %v1820, %v1820
    %v1823 = vsel %vm191, %v1821, 0.0
    %1824 = vadd.xlane.f32.xlu0 %v1823
    %v1825 = vpop.xlane.xlu0 %1824
    %v1826 = vsel %vm191, %v1822, 0.0
    %1827 = vadd.xlane.f32.xlu0 %v1826
    %v1828 = vpop.xlane.xlu0 %1827
    %v1829 = vmul.f32 %v1825, %v198
    %v1830 = vmul.f32 %v1828, %v198
    %v1831 = vadd.f32 %v1829, 1e-12
    %v1832 = vadd.f32 %v1830, 1e-12
    %v1833 = vrsqrt.pop %v1831
    %v1834 = vrsqrt.pop %v1832
    %v1835 = vmul.f32 %v1819, %v1833
    %v1836 = vmul.f32 %v1820, %v1834
    %v1838 = vlaneseq
    %v1839 = vshrl.u32 %v1838, 7
    %v1840 = vsub.s32 0, %v1839
    %v1841 = vrot.slane %v1808, %v1840
    %v1843 = vmul.f32 %v1835, %v1841
    %v1844 = vmul.f32 %v1836, %v1841
    %v1846 = vlaneseq
    %v1847 = vshrl.u32 %v1846, 7
    %v1848 = vsub.s32 0, %v1847
    %v1849 = vrot.slane %v1810, %v1848
    %v1851 = vadd.f32 %v1843, %v1849
    %v1852 = vadd.f32 %v1844, %v1849
    %s1853 = scalar_lea.vmem %s10, 16
    %v1854 = vld [vmem:[%s1853] sm:$0xf]
    %v1855 = vld [vmem:[%s1853 + $0x4] sm:$0xf]
    %v1856 = vld [vmem:[%s1853 + $0x8] sm:$0xf]
    %v1857 = vld [vmem:[%s1853 + $0xc] sm:$0xf]
    %v1858 = vpack.c.bf16 %v1852, %v1851
    %s1859 = scalar_lea.vmem [#allocation14], 1
    %v1860 = vld [vmem:[%s1859] sm:$0x1]
    %v1862 = vlaneseq
    %v1863 = vshrl.u32 %v1862, 7
    %v1864 = vsub.s32 0, %v1863
    %v1865 = vrot.slane %v1860, %v1864
    %v1871 = vunpack.c.l.b16 %v1854
    %v1872 = vunpack.c.l.b16 %v1855
    %v1873 = vunpack.c.l.b16 %v1856
    %v1874 = vunpack.c.l.b16 %v1857
    %v1875 = vpack.c.b16 %v1872, %v1871
    %v1876 = vpack.c.b16 %v1874, %v1873
    %v1880 = vsel %vm191, %v1858, 0
    %1882 = vmatprep.subr.bf16.mxu0 0
    %1883 = vmatpush1.bf16.msra.mxu0 %v1875
    %1884 = vmatprep.subr.bf16.mxu0 0
    %1885 = vmatpush1.bf16.msra.mxu0 %v1876
    %1886 = vmatprep.subr.bf16.mxu0 0
    %1887 = vmatpush1.bf16.msra.mxu0 0
    %1888 = vmatprep.subr.bf16.mxu0 0
    %1889 = vmatpush1.bf16.msra.mxu0 0
    %1890 = vmatprep.subr.bf16.mxu0 0
    %1891 = vmatpush1.bf16.msra.mxu0 0
    %1892 = vmatprep.subr.bf16.mxu0 0
    %1893 = vmatpush1.bf16.msra.mxu0 0
    %1894 = vmatprep.subr.bf16.mxu0 0
    %1895 = vmatpush1.bf16.msra.mxu0 0
    %1896 = vmatprep.subr.bf16.mxu0 0
    %1897 = vmatpush1.bf16.msra.mxu0 0
    %1898 = vmatprep.subr.bf16.mxu0 0
    %1899 = vmatpush1.bf16.msra.mxu0 0
    %1900 = vmatprep.subr.bf16.mxu0 0
    %1901 = vmatpush1.bf16.msra.mxu0 0
    %1902 = vmatprep.subr.bf16.mxu0 0
    %1903 = vmatpush1.bf16.msra.mxu0 0
    %1904 = vmatprep.subr.bf16.mxu0 0
    %1905 = vmatpush1.bf16.msra.mxu0 0
    %1906 = vmatprep.subr.bf16.mxu0 0
    %1907 = vmatpush1.bf16.msra.mxu0 0
    %1908 = vmatprep.subr.bf16.mxu0 0
    %1909 = vmatpush1.bf16.msra.mxu0 0
    %1910 = vmatprep.subr.bf16.mxu0 0
    %1911 = vmatpush1.bf16.msra.mxu0 0
    %1912 = vmatprep.subr.bf16.mxu0 0
    %1913 = vmatpush1.bf16.msra.mxu0 0
    %1914 = vmatprep.mubr.bf16.mxu0 0
    %1915 = vmatmul.mubr.bf16.gmra.mrb[0].mxu0 %v1880
    %v1916 = vpop.f32.mrb[0].mxu0
    %v1917 = vadd.f32 %v1865, %v1916
    %v1918 = vpop.f32.mrb[0].mxu0
    %v1919 = vpop.f32.mrb[0].mxu0
    %v1920 = vadd.f32 %v1865, %v1919
    %v1921 = vpop.f32.mrb[0].mxu0
    %1922 = vdwg.mxu0
    %v1923 = vmul.f32 %v1917, %v1917
    %v1924 = vmul.f32 %v1920, %v1920
    %v1925 = vmul.f32 %v1917, %v1923
    %v1926 = vmul.f32 %v1920, %v1924
    %v1927 = vmul.f32 %v1925, 0.044715
    %v1928 = vmul.f32 %v1926, 0.044715
    %v1929 = vadd.f32 %v1917, %v1927
    %v1930 = vadd.f32 %v1920, %v1928
    %v1931 = vmul.f32 %v1929, 0.7978846
    %v1932 = vmul.f32 %v1930, 0.7978846
    %v1933 = vtanh.pop %v1931
    %v1934 = vtanh.pop %v1932
    %v1935 = vadd.f32 %v1933, 1.0
    %v1936 = vadd.f32 %v1934, 1.0
    %v1937 = vmul.f32 %v1935, 0.5
    %v1938 = vmul.f32 %v1936, 0.5
    %v1939 = vmul.f32 %v1917, %v1937
    %v1940 = vmul.f32 %v1920, %v1938
    %s1941 = scalar_lea.vmem %s12, 32
    %v1942 = vld [vmem:[%s1941] sm:$0xf]
    %v1943 = vld [vmem:[%s1941 + $0x4] sm:$0xf]
    %v1944 = vld [vmem:[%s1941 + $0x8] sm:$0xf]
    %v1945 = vld [vmem:[%s1941 + $0xc] sm:$0xf]
    %v1946 = vld [vmem:[%s1941 + $0x10] sm:$0xf]
    %v1947 = vld [vmem:[%s1941 + $0x14] sm:$0xf]
    %v1948 = vld [vmem:[%s1941 + $0x18] sm:$0xf]
    %v1949 = vld [vmem:[%s1941 + $0x1c] sm:$0xf]
    %v1950 = vpack.c.bf16 %v1940, %v1939
    %s1951 = scalar_lea.vmem [#allocation16], 1
    %v1952 = vld [vmem:[%s1951] sm:$0x1]
    %v1954 = vlaneseq
    %v1955 = vshrl.u32 %v1954, 7
    %v1956 = vsub.s32 0, %v1955
    %v1957 = vrot.slane %v1952, %v1956
    %v1967 = vunpack.c.l.b16 %v1942
    %v1968 = vunpack.c.l.b16 %v1943
    %v1969 = vunpack.c.l.b16 %v1944
    %v1970 = vunpack.c.l.b16 %v1945
    %v1971 = vunpack.c.l.b16 %v1946
    %v1972 = vunpack.c.l.b16 %v1947
    %v1973 = vunpack.c.l.b16 %v1948
    %v1974 = vunpack.c.l.b16 %v1949
    %v1975 = vpack.c.b16 %v1968, %v1967
    %v1976 = vpack.c.b16 %v1970, %v1969
    %v1977 = vpack.c.b16 %v1972, %v1971
    %v1978 = vpack.c.b16 %v1974, %v1973
    %v1984 = vsel %vm1060, %v1950, 0
    %1986 = vmatprep.subr.bf16.mxu0 0
    %1987 = vmatpush1.bf16.msra.mxu0 %v1975
    %1988 = vmatprep.subr.bf16.mxu0 0
    %1989 = vmatpush1.bf16.msra.mxu0 %v1976
    %1990 = vmatprep.subr.bf16.mxu0 0
    %1991 = vmatpush1.bf16.msra.mxu0 %v1977
    %1992 = vmatprep.subr.bf16.mxu0 0
    %1993 = vmatpush1.bf16.msra.mxu0 %v1978
    %1994 = vmatprep.subr.bf16.mxu0 0
    %1995 = vmatpush1.bf16.msra.mxu0 0
    %1996 = vmatprep.subr.bf16.mxu0 0
    %1997 = vmatpush1.bf16.msra.mxu0 0
    %1998 = vmatprep.subr.bf16.mxu0 0
    %1999 = vmatpush1.bf16.msra.mxu0 0
    %2000 = vmatprep.subr.bf16.mxu0 0
    %2001 = vmatpush1.bf16.msra.mxu0 0
    %2002 = vmatprep.subr.bf16.mxu0 0
    %2003 = vmatpush1.bf16.msra.mxu0 0
    %2004 = vmatprep.subr.bf16.mxu0 0
    %2005 = vmatpush1.bf16.msra.mxu0 0
    %2006 = vmatprep.subr.bf16.mxu0 0
    %2007 = vmatpush1.bf16.msra.mxu0 0
    %2008 = vmatprep.subr.bf16.mxu0 0
    %2009 = vmatpush1.bf16.msra.mxu0 0
    %2010 = vmatprep.subr.bf16.mxu0 0
    %2011 = vmatpush1.bf16.msra.mxu0 0
    %2012 = vmatprep.subr.bf16.mxu0 0
    %2013 = vmatpush1.bf16.msra.mxu0 0
    %2014 = vmatprep.subr.bf16.mxu0 0
    %2015 = vmatpush1.bf16.msra.mxu0 0
    %2016 = vmatprep.subr.bf16.mxu0 0
    %2017 = vmatpush1.bf16.msra.mxu0 0
    %2018 = vmatprep.mubr.bf16.mxu0 0
    %2019 = vmatmul.mubr.bf16.gmra.mrb[0].mxu0 %v1984
    %v2020 = vpop.f32.mrb[0].mxu0
    %v2021 = vadd.f32 %v1957, %v2020
    %v2022 = vpop.f32.mrb[0].mxu0
    %v2023 = vpop.f32.mrb[0].mxu0
    %v2024 = vadd.f32 %v1957, %v2023
    %v2025 = vpop.f32.mrb[0].mxu0
    %2026 = vdwg.mxu0
    %v2027 = vadd.f32 %v1851, %v2021
    %v2028 = vadd.f32 %v1852, %v2024
    %s2029 = scalar_lea.vmem %s14, 1
    %v2030 = vld [vmem:[%s2029] sm:$0x1]
    %s2031 = scalar_lea.vmem %s15, 1
    %v2032 = vld [vmem:[%s2031] sm:$0x1]
    %v2033 = vsel %vm191, %v2027, 0.0
    %2034 = vadd.xlane.f32.xlu0 %v2033
    %v2035 = vpop.xlane.xlu0 %2034
    %v2036 = vsel %vm191, %v2028, 0.0
    %2037 = vadd.xlane.f32.xlu0 %v2036
    %v2038 = vpop.xlane.xlu0 %2037
    %v2039 = vmul.f32 %v2035, %v198
    %v2040 = vmul.f32 %v2038, %v198
    %v2041 = vsub.f32 %v2027, %v2039
    %v2042 = vsub.f32 %v2028, %v2040
    %v2043 = vmul.f32 %v2041, %v2041
    %v2044 = vmul.f32 %v2042, %v2042
    %v2045 = vsel %vm191, %v2043, 0.0
    %2046 = vadd.xlane.f32.xlu0 %v2045
    %v2047 = vpop.xlane.xlu0 %2046
    %v2048 = vsel %vm191, %v2044, 0.0
    %2049 = vadd.xlane.f32.xlu0 %v2048
    %v2050 = vpop.xlane.xlu0 %2049
    %v2051 = vmul.f32 %v2047, %v198
    %v2052 = vmul.f32 %v2050, %v198
    %v2053 = vadd.f32 %v2051, 1e-12
    %v2054 = vadd.f32 %v2052, 1e-12
    %v2055 = vrsqrt.pop %v2053
    %v2056 = vrsqrt.pop %v2054
    %v2057 = vmul.f32 %v2041, %v2055
    %v2058 = vmul.f32 %v2042, %v2056
    %v2060 = vlaneseq
    %v2061 = vshrl.u32 %v2060, 7
    %v2062 = vsub.s32 0, %v2061
    %v2063 = vrot.slane %v2030, %v2062
    %v2065 = vmul.f32 %v2057, %v2063
    %v2066 = vmul.f32 %v2058, %v2063
    %v2068 = vlaneseq
    %v2069 = vshrl.u32 %v2068, 7
    %v2070 = vsub.s32 0, %v2069
    %v2071 = vrot.slane %v2032, %v2070
    %v2073 = vadd.f32 %v2065, %v2071
    %v2074 = vadd.f32 %v2066, %v2071
    %v2075 = vld [vmem:[%s16] sm:$0xf]
    %v2076 = vld [vmem:[%s16 + $0x4] sm:$0xf]
    %v2077 = vld [vmem:[%s16 + $0x8] sm:$0xf]
    %v2078 = vld [vmem:[%s16 + $0xc] sm:$0xf]
    %v2079 = vpack.c.bf16 %v2074, %v2073
    %v2080 = vld [vmem:[%s17] sm:$0x1]
    %v2082 = vlaneseq
    %v2083 = vshrl.u32 %v2082, 7
    %v2084 = vsub.s32 0, %v2083
    %v2085 = vrot.slane %v2080, %v2084
    %v2091 = vunpack.c.l.b16 %v2075
    %v2092 = vunpack.c.l.b16 %v2076
    %v2093 = vunpack.c.l.b16 %v2077
    %v2094 = vunpack.c.l.b16 %v2078
    %v2095 = vpack.c.b16 %v2092, %v2091
    %v2096 = vpack.c.b16 %v2094, %v2093
    %v2100 = vsel %vm191, %v2079, 0
    %2102 = vmatprep.subr.bf16.mxu0 0
    %2103 = vmatpush1.bf16.msra.mxu0 %v2095
    %2104 = vmatprep.subr.bf16.mxu0 0
    %2105 = vmatpush1.bf16.msra.mxu0 %v2096
    %2106 = vmatprep.subr.bf16.mxu0 0
    %2107 = vmatpush1.bf16.msra.mxu0 0
    %2108 = vmatprep.subr.bf16.mxu0 0
    %2109 = vmatpush1.bf16.msra.mxu0 0
    %2110 = vmatprep.subr.bf16.mxu0 0
    %2111 = vmatpush1.bf16.msra.mxu0 0
    %2112 = vmatprep.subr.bf16.mxu0 0
    %2113 = vmatpush1.bf16.msra.mxu0 0
    %2114 = vmatprep.subr.bf16.mxu0 0
    %2115 = vmatpush1.bf16.msra.mxu0 0
    %2116 = vmatprep.subr.bf16.mxu0 0
    %2117 = vmatpush1.bf16.msra.mxu0 0
    %2118 = vmatprep.subr.bf16.mxu0 0
    %2119 = vmatpush1.bf16.msra.mxu0 0
    %2120 = vmatprep.subr.bf16.mxu0 0
    %2121 = vmatpush1.bf16.msra.mxu0 0
    %2122 = vmatprep.subr.bf16.mxu0 0
    %2123 = vmatpush1.bf16.msra.mxu0 0
    %2124 = vmatprep.subr.bf16.mxu0 0
    %2125 = vmatpush1.bf16.msra.mxu0 0
    %2126 = vmatprep.subr.bf16.mxu0 0
    %2127 = vmatpush1.bf16.msra.mxu0 0
    %2128 = vmatprep.subr.bf16.mxu0 0
    %2129 = vmatpush1.bf16.msra.mxu0 0
    %2130 = vmatprep.subr.bf16.mxu0 0
    %2131 = vmatpush1.bf16.msra.mxu0 0
    %2132 = vmatprep.subr.bf16.mxu0 0
    %2133 = vmatpush1.bf16.msra.mxu0 0
    %2134 = vmatprep.mubr.bf16.mxu0 0
    %2135 = vmatmul.mubr.bf16.gmra.mrb[0].mxu0 %v2100
    %v2136 = vpop.f32.mrb[0].mxu0
    %v2137 = vadd.f32 %v2085, %v2136
    %v2138 = vpop.f32.mrb[0].mxu0
    %v2139 = vpop.f32.mrb[0].mxu0
    %v2140 = vadd.f32 %v2085, %v2139
    %v2141 = vpop.f32.mrb[0].mxu0
    %2142 = vdwg.mxu0
    %2143 = vmax.xlane.f32.xlu0 %v2137
    %v2144 = vpop.xlane.xlu0 %2143
    %2145 = vmax.xlane.f32.xlu0 %v2140
    %v2146 = vpop.xlane.xlu0 %2145
    %v2147 = vsub.f32 %v2137, %v2144
    %v2148 = vsub.f32 %v2140, %v2146
    %v2149 = vmul.f32 %v2147, 1.442695
    %v2150 = vpow.pop %v2149
    %v2151 = vmul.f32 %v2148, 1.442695
    %v2152 = vpow.pop %v2151
    %2153 = vadd.xlane.f32.xlu0 %v2150
    %v2154 = vpop.xlane.xlu0 %2153
    %2155 = vadd.xlane.f32.xlu0 %v2152
    %v2156 = vpop.xlane.xlu0 %2155
    %v2157 = vlog2.pop %v2154
    %v2158 = vmul.f32 %v2157, 0.6931472
    %v2159 = vlog2.pop %v2156
    %v2160 = vmul.f32 %v2159, 0.6931472
    %v2161 = vsub.f32 %v2147, %v2158
    %v2162 = vsub.f32 %v2148, %v2160
    %2163 = vst [vmem:[#allocation17] sm:$0xff] %v2161
    %2164 = vst [vmem:[#allocation17 + $0x8] sm:$0xff] %v2162
    // Predicated region
    $region110: #{tpu_custom_call.1} parent=1 // pred_check
      _
    $region111: #{tpu_custom_call.1} parent=1 // pred_check_branch
      %2166 = sbr.rel (0) target = $region113
    $region112: #{tpu_custom_call.1} parent=1 // pred_region
      %s2168 = ssub.s32 256, 256
      %2169 = vsyncadd [#allocation4], %s2168
      %s2170 = sshll.u32 [#allocation17], 4
      %s2171 = int_to_ptr.vmem [resolvable:$true] %s2170
      %2176 = dma.vmem_to_hbm [thread:$0]  %s2171, 256, %s18, [#allocation4], 128, 128, 8
    $region113: #{tpu_custom_call.1} parent=1 // pred_fallthru
      _
    // Predicated region
    $region114: #{tpu_custom_call.1} parent=1 // pred_check
      _
    $region115: #{tpu_custom_call.1} parent=1 // pred_check_branch
      %2178 = sbr.rel (0) target = $region117
    $region116: #{tpu_custom_call.1} parent=1 // pred_region
      %2179 = dma.done [#allocation4], 256
    $region117: #{tpu_custom_call.1} parent=1 // pred_fallthru
      _
    %2180 = vsyncpa [#allocation3], 1
    %2181 = vsyncpa [#allocation6], 1
    %2182 = vsyncpa [#allocation9], 1
    %2183 = vsyncpa [#allocation12], 1
    %2184 = vsyncpa [#allocation15], 1
    %2185 = vsyncpa [#allocation4], 1

</llo_original>
